<compile_context>
chip_gen: v7x
topology: tpu7x:2x2x1
jax: 0.10.0
libtpu: 0.0.40
codegen_flags: <defaults>
</compile_context>

<pallas_src>
import math

import jax
import jax.numpy as jnp
from jax.experimental import pallas as pl
from jax.experimental.pallas import tpu as pltpu

# ---------------------------------------------------------------------------
# Model configuration (small, representative dims)
# ---------------------------------------------------------------------------
PATCH = 4
IN_CH = 3
IMG = 16
EMBED = 32
HEADS = 2
HEAD_DIM = EMBED // HEADS                # 16
DEPTH = 2
MLP_HIDDEN = 64
BLOCK = 4                                # `block` argument of two_view_net
CLASS_NUM = 10                           # `class_num`

CPP = IN_CH * PATCH * PATCH              # 48 pixel features per patch
NUM_PATCHES = (IMG // PATCH) ** 2        # 16
SEQ = NUM_PATCHES + 1                    # 17 = cls token + patches
SEQ_PAD = 24                             # padded to a multiple of 8 sublanes
PATCH_START = SEQ_PAD - NUM_PATCHES      # 8; slots [1, 8) are zero padding
TOK_DIM = CPP + SEQ_PAD                  # 72 = pixels + slot one-hot
GROUP = NUM_PATCHES // BLOCK             # 4 patch tokens per part

# ---- bf16 weight-slab row offsets (all multiples of 16 for packed sublanes) ----
W_EMBED_OFF = 0                                   # (TOK_DIM, EMBED)
QKV_OFF = 80                                      # DEPTH x (EMBED, 3*EMBED)
PROJ_OFF = QKV_OFF + DEPTH * EMBED                # 144, DEPTH x (EMBED, EMBED)
FC1_OFF = PROJ_OFF + DEPTH * EMBED                # 208, DEPTH x (EMBED, MLP_HIDDEN)
FC2_OFF = FC1_OFF + DEPTH * EMBED                 # 272, DEPTH x (MLP_HIDDEN, EMBED)
HEAD_OFF = FC2_OFF + DEPTH * MLP_HIDDEN           # 400, (BLOCK*EMBED, BLOCK*CLASS_NUM)
W_ROWS = HEAD_OFF + BLOCK * EMBED                 # 528

# ---- f32 bias-slab row offsets ----
B_QKV = 0
B_PROJ = B_QKV + DEPTH                            # 2
B_FC1 = B_PROJ + DEPTH                            # 4
B_FC2 = B_FC1 + DEPTH                             # 6
B_HEAD = B_FC2 + DEPTH                            # 8
B_ROWS = 16


# ---------------------------------------------------------------------------
# Fused forward kernel: token embed -> DEPTH transformer layers -> final LN ->
# block-wise mean pooling -> fused part classifiers.  Single grid step, both
# views folded into the batch axis (M = V*B*SEQ_PAD rows).
# ---------------------------------------------------------------------------
def _fused_vit_kernel(tok_ref, w_ref, b_ref, out_ref):
    f32, bf16 = jnp.float32, jnp.bfloat16
    M = tok_ref.shape[0]
    VB = M // SEQ_PAD
    S = SEQ_PAD
    scale = 1.0 / math.sqrt(HEAD_DIM)

    def ln(x):  # gamma/beta already folded into the next matmul's weights
        mu = jnp.mean(x, axis=-1, keepdims=True)
        var = jnp.mean(jnp.square(x - mu), axis=-1, keepdims=True)
        return (x - mu) * jax.lax.rsqrt(var + 1e-5)

    def mm(x, roff, rows, cols, brow=None):  # bf16 MXU operands, f32 accumulation
        y = jnp.dot(x.astype(bf16), w_ref[roff:roff + rows, 0:cols],
                    preferred_element_type=f32)
        if brow is not None:
            y = y + b_ref[brow:brow + 1, 0:cols]
        return y

    # Token embedding: one (M,72)x(72,32) matmul.  The host appends a slot
    # one-hot to each token, so the same matmul also injects the cls token,
    # the positional embeddings and the patch bias; zero-padded slots (rows
    # 1..7 of every sequence) come out exactly zero.
    h = mm(tok_ref[...], W_EMBED_OFF, TOK_DIM, EMBED)            # (M, 32) f32

    kidx = jax.lax.broadcasted_iota(jnp.int32, (1, 1, S), 2)
    key_valid = (kidx == 0) | (kidx >= PATCH_START)              # mask pad keys

    for l in range(DEPTH):
        # -------- multi-head self attention (heads folded into the batch axis)
        qkv = mm(ln(h), QKV_OFF + l * EMBED, EMBED, 3 * EMBED, B_QKV + l)  # (M, 96)
        qkv3 = qkv.reshape(VB, S, 3 * EMBED)

        def split_heads(col0):
            return jnp.concatenate(
                [qkv3[:, :, col0 + hd * HEAD_DIM: col0 + (hd + 1) * HEAD_DIM]
                 for hd in range(HEADS)], axis=0).astype(bf16)   # (VB*H, S, HD)

        q = split_heads(0)
        k = split_heads(EMBED)
        v = split_heads(2 * EMBED)
        s = jnp.einsum('bqd,bkd->bqk', q, k, preferred_element_type=f32) * scale
        s = jnp.where(key_valid, s, -1e30)
        p = jnp.exp(s - jnp.max(s, axis=-1, keepdims=True))
        p = p * pl.reciprocal(jnp.sum(p, axis=-1, keepdims=True), approx=True)
        o = jnp.einsum('bqk,bkd->bqd', p.astype(bf16), v,
                       preferred_element_type=f32)               # (VB*H, S, HD)
        o = jnp.concatenate([o[hd * VB:(hd + 1) * VB] for hd in range(HEADS)],
                            axis=-1).reshape(M, EMBED)           # merge heads on lanes
        h = h + mm(o, PROJ_OFF + l * EMBED, EMBED, EMBED, B_PROJ + l)

        # -------- MLP
        m = mm(ln(h), FC1_OFF + l * EMBED, EMBED, MLP_HIDDEN, B_FC1 + l)
        # TODO(synk): PyTorch nn.GELU default is the exact erf form; tanh
        # approximation used here (guaranteed Mosaic lowering, tiny drift).
        m = jax.nn.gelu(m)
        h = h + mm(m, FC2_OFF + l * MLP_HIDDEN, MLP_HIDDEN, EMBED, B_FC2 + l)

    # Final LN -> block-wise mean pooling over the patch tokens -> ONE fused
    # lane-dense (VB,128)x(128,40) matmul against the block-diagonal head weight.
    # (cls token intentionally does not feed the part classifiers.)
    hf = ln(h).reshape(VB, S, EMBED)
    pooled = jnp.concatenate(
        [jnp.mean(hf[:, PATCH_START + kb * GROUP: PATCH_START + (kb + 1) * GROUP, :],
                  axis=1)
         for kb in range(BLOCK)], axis=-1)                       # (VB, BLOCK*EMBED)
    out_ref[...] = (jnp.dot(pooled.astype(jnp.bfloat16),
                            w_ref[HEAD_OFF:HEAD_OFF + BLOCK * EMBED,
                                  0:BLOCK * CLASS_NUM],
                            preferred_element_type=f32)
                    + b_ref[B_HEAD:B_HEAD + 1, 0:BLOCK * CLASS_NUM])


# ---------------------------------------------------------------------------
# Host-side glue
# ---------------------------------------------------------------------------
def patchify_nchw(x):
    """NCHW (B,C,H,W) -> (B, num_patches, C*P*P), matching Conv2d(kernel=stride=P)."""
    B, C, H, W = x.shape
    gh, gw = H // PATCH, W // PATCH
    x = x.reshape(B, C, gh, PATCH, gw, PATCH)
    x = jnp.transpose(x, (0, 2, 4, 1, 3, 5))
    return x.reshape(B, gh * gw, C * PATCH * PATCH)


@jax.jit
def _fused_forward(packed, x):
    """x: (V, B, C, H, W) -> logits (V, B, BLOCK*CLASS_NUM). One pallas_call total."""
    V, B, C, H, W = x.shape
    VB = V * B
    patches = patchify_nchw(x.reshape(VB, C, H, W).astype(jnp.float32))  # (VB,NP,CPP)
    pix = jnp.zeros((VB, SEQ_PAD, CPP), jnp.float32)
    pix = pix.at[:, PATCH_START:, :].set(patches)
    onehot = jnp.broadcast_to(jnp.eye(SEQ_PAD, dtype=jnp.float32)[None],
                              (VB, SEQ_PAD, SEQ_PAD))
    tokens = jnp.concatenate([pix, onehot], axis=-1).reshape(VB * SEQ_PAD, TOK_DIM)

    out = pl.pallas_call(
        _fused_vit_kernel,
        out_shape=jax.ShapeDtypeStruct((VB, BLOCK * CLASS_NUM), jnp.float32),
        grid=(1,),
        in_specs=[pl.BlockSpec((VB * SEQ_PAD, TOK_DIM), lambda i: (0, 0)),
                  pl.BlockSpec((W_ROWS, 128), lambda i: (0, 0)),
                  pl.BlockSpec((B_ROWS, 128), lambda i: (0, 0))],
        out_specs=pl.BlockSpec((VB, BLOCK * CLASS_NUM), lambda i: (0, 0)),
        compiler_params=pltpu.CompilerParams(dimension_semantics=("arbitrary",)),
    )(tokens, packed["wslab"], packed["bslab"])
    return out.reshape(V, B, BLOCK * CLASS_NUM)


def two_view_net_forward(packed, x1, x2):
    """Matches two_view_net.forward: shared model_1 on both views, None passthrough."""
    views = [v for v in (x1, x2) if v is not None]
    if not views:
        return (None, None)
    x = jnp.stack(views, axis=0)                     # (V, B, C, H, W), shared weights
    logits = _fused_forward(packed, x)               # (V, B, BLOCK*CLASS_NUM)
    per_view = [
        [logits[vi, :, k * CLASS_NUM:(k + 1) * CLASS_NUM] for k in range(BLOCK)]
        for vi in range(len(views))
    ]
    it = iter(per_view)
    y1 = next(it) if x1 is not None else None
    y2 = next(it) if x2 is not None else None
    return (y1, y2)


# ---------------------------------------------------------------------------
# Deterministic parameter init (logical, f32) + packing into 2 VMEM slabs
# ---------------------------------------------------------------------------
def init_params(key):
    def nrm(k, shape, std=0.02):
        return jax.random.normal(k, shape, jnp.float32) * std

    ks = iter(jax.random.split(key, 16))
    p = {}
    p["patch_w"] = nrm(next(ks), (CPP, EMBED))
    p["patch_b"] = jnp.zeros((EMBED,), jnp.float32)
    p["cls"] = nrm(next(ks), (EMBED,))
    p["pos"] = nrm(next(ks), (SEQ, EMBED))
    p["ln1_g"] = jnp.ones((DEPTH, EMBED), jnp.float32)
    p["ln1_b"] = jnp.zeros((DEPTH, EMBED), jnp.float32)
    p["qkv_w"] = nrm(next(ks), (DEPTH, EMBED, 3 * EMBED))
    p["qkv_b"] = jnp.zeros((DEPTH, 3 * EMBED), jnp.float32)
    p["proj_w"] = nrm(next(ks), (DEPTH, EMBED, EMBED))
    p["proj_b"] = jnp.zeros((DEPTH, EMBED), jnp.float32)
    p["ln2_g"] = jnp.ones((DEPTH, EMBED), jnp.float32)
    p["ln2_b"] = jnp.zeros((DEPTH, EMBED), jnp.float32)
    p["fc1_w"] = nrm(next(ks), (DEPTH, EMBED, MLP_HIDDEN))
    p["fc1_b"] = jnp.zeros((DEPTH, MLP_HIDDEN), jnp.float32)
    p["fc2_w"] = nrm(next(ks), (DEPTH, MLP_HIDDEN, EMBED))
    p["fc2_b"] = jnp.zeros((DEPTH, EMBED), jnp.float32)
    p["lnf_g"] = jnp.ones((EMBED,), jnp.float32)
    p["lnf_b"] = jnp.zeros((EMBED,), jnp.float32)
    p["head_w"] = nrm(next(ks), (BLOCK, EMBED, CLASS_NUM))
    p["head_b"] = jnp.zeros((BLOCK, CLASS_NUM), jnp.float32)
    return p


def pack_params(p):
    """Fold LN affines / cls / pos / patch bias into matmul weights and pack the
    whole model into one bf16 weight slab + one f32 bias slab (3 input DMAs)."""
    f32 = jnp.float32

    # Token-embedding weight with patch bias, cls token and positional
    # embeddings folded in (host appends a slot one-hot to each token).
    w_embed = jnp.zeros((TOK_DIM, EMBED), f32)
    w_embed = w_embed.at[:CPP, :].set(p["patch_w"])
    w_embed = w_embed.at[CPP + 0, :].set(p["cls"] + p["pos"][0])
    w_embed = w_embed.at[CPP + PATCH_START:CPP + SEQ_PAD, :].set(
        p["patch_b"][None, :] + p["pos"][1:SEQ, :])

    # LayerNorm affine folded into the downstream matmuls.
    qkv_w = jnp.einsum('le,lef->lef', p["ln1_g"], p["qkv_w"])
    qkv_b = jnp.einsum('le,lef->lf', p["ln1_b"], p["qkv_w"]) + p["qkv_b"]
    fc1_w = jnp.einsum('le,lef->lef', p["ln2_g"], p["fc1_w"])
    fc1_b = jnp.einsum('le,lef->lf', p["ln2_b"], p["fc1_w"]) + p["fc1_b"]
    head_w = p["lnf_g"][None, :, None] * p["head_w"]                 # (BLOCK, E, C)
    head_b = p["head_b"] + jnp.einsum('e,kec->kc', p["lnf_b"], p["head_w"])

    w = jnp.zeros((W_ROWS, 128), f32)
    w = w.at[W_EMBED_OFF:W_EMBED_OFF + TOK_DIM, :EMBED].set(w_embed)
    for l in range(DEPTH):
        w = w.at[QKV_OFF + l * EMBED:QKV_OFF + (l + 1) * EMBED, :3 * EMBED].set(qkv_w[l])
        w = w.at[PROJ_OFF + l * EMBED:PROJ_OFF + (l + 1) * EMBED, :EMBED].set(p["proj_w"][l])
        w = w.at[FC1_OFF + l * EMBED:FC1_OFF + (l + 1) * EMBED, :MLP_HIDDEN].set(fc1_w[l])
        w = w.at[FC2_OFF + l * MLP_HIDDEN:FC2_OFF + (l + 1) * MLP_HIDDEN, :EMBED].set(p["fc2_w"][l])
    for kb in range(BLOCK):   # BLOCK part classifiers -> one block-diagonal weight
        w = w.at[HEAD_OFF + kb * EMBED:HEAD_OFF + (kb + 1) * EMBED,
                 kb * CLASS_NUM:(kb + 1) * CLASS_NUM].set(head_w[kb])

    b = jnp.zeros((B_ROWS, 128), f32)
    b = b.at[B_QKV:B_QKV + DEPTH, :3 * EMBED].set(qkv_b)
    b = b.at[B_PROJ:B_PROJ + DEPTH, :EMBED].set(p["proj_b"])
    b = b.at[B_FC1:B_FC1 + DEPTH, :MLP_HIDDEN].set(fc1_b)
    b = b.at[B_FC2:B_FC2 + DEPTH, :EMBED].set(p["fc2_b"])
    b = b.at[B_HEAD, :BLOCK * CLASS_NUM].set(head_b.reshape(-1))

    return {"wslab": w.astype(jnp.bfloat16), "bslab": b}


# ---------------------------------------------------------------------------
# Main
# ---------------------------------------------------------------------------
if __name__ == "__main__":
    key = jax.random.PRNGKey(0)
    k_param, k_x1, k_x2 = jax.random.split(key, 3)

    packed = pack_params(init_params(k_param))
    x1 = jax.random.normal(k_x1, (2, IN_CH, IMG, IMG), jnp.float32)   # NCHW like PyTorch
    x2 = jax.random.normal(k_x2, (2, IN_CH, IMG, IMG), jnp.float32)

    y1, y2 = two_view_net_forward(packed, x1, x2)

    for y in (y1, y2):
        assert y is not None and len(y) == BLOCK
        for logits in y:
            jax.block_until_ready(logits)
            assert logits.shape == (2, CLASS_NUM)
            assert bool(jnp.all(jnp.isfinite(logits)))

    print("KERNEL_OK")
</pallas_src>

<mosaic_0001>
module attributes {stable_mosaic.version = 11 : i64} {
  func.func @_fused_vit_kernel(%arg0: i32, %arg1: memref<96x72xf32, #tpu.memory_space<vmem>>, %arg2: memref<528x128xbf16, #tpu.memory_space<vmem>>, %arg3: memref<16x128xf32, #tpu.memory_space<vmem>>, %arg4: memref<4x40xf32, #tpu.memory_space<vmem>>) attributes {dimension_semantics = [#tpu.dimension_semantics<arbitrary>], iteration_bounds = array<i64: 1>, scalar_prefetch = 0 : i64, scratch_operands = 0 : i64, tpu.core_type = #tpu.core_type<tc>, window_params = [{pipeline_mode = #tpu.pipeline_mode<synchronous>, transform_indices = @transform_0, window_bounds = array<i64: 96, 72>}, {pipeline_mode = #tpu.pipeline_mode<synchronous>, transform_indices = @transform_1, window_bounds = array<i64: 528, 128>}, {pipeline_mode = #tpu.pipeline_mode<synchronous>, transform_indices = @transform_2, window_bounds = array<i64: 16, 128>}, {pipeline_mode = #tpu.pipeline_mode<synchronous>, transform_indices = @transform_3, window_bounds = array<i64: 4, 40>}]} {
    %c0 = arith.constant 0 : index
    %c0_0 = arith.constant 0 : index
    %0 = vector.load %arg1[%c0, %c0_0] : memref<96x72xf32, #tpu.memory_space<vmem>>, vector<96x72xf32>
    %1 = arith.truncf %0 : vector<96x72xf32> to vector<96x72xbf16>
    %c0_1 = arith.constant 0 : index
    %c0_2 = arith.constant 0 : index
    %2 = vector.load %arg2[%c0_1, %c0_2] : memref<528x128xbf16, #tpu.memory_space<vmem>>, vector<72x32xbf16>
    %cst = arith.constant dense<0.000000e+00> : vector<96x32xf32>
    %3 = tpu.matmul %1, %2, %cst {dimension_numbers = #tpu.dot_dimension_numbers<[1], [0], [0], [1], [0, 0, 1, 1], [], []>} : vector<96x72xbf16>, vector<72x32xbf16>, vector<96x32xf32> -> vector<96x32xf32>
    %4 = tpu.iota {dimensions = array<i32: 2>} : vector<1x1x24xi32>
    %c0_i32 = arith.constant 0 : i32
    %5 = vector.broadcast %c0_i32 : i32 to vector<1x1x24xi32>
    %6 = arith.cmpi eq, %4, %5 : vector<1x1x24xi32>
    %c8_i32 = arith.constant 8 : i32
    %7 = vector.broadcast %c8_i32 : i32 to vector<1x1x24xi32>
    %8 = arith.cmpi sge, %4, %7 : vector<1x1x24xi32>
    %9 = arith.ori %6, %8 : vector<1x1x24xi1>
    %cst_3 = arith.constant dense<0.000000e+00> : vector<96xf32>
    %10 = vector.multi_reduction <add>, %3, %cst_3 [1] : vector<96x32xf32> to vector<96xf32>
    %11 = vector.shape_cast %10 : vector<96xf32> to vector<96x1xf32>
    %cst_4 = arith.constant 3.200000e+01 : f32
    %12 = vector.broadcast %cst_4 : f32 to vector<96x1xf32>
    %13 = arith.divf %11, %12 : vector<96x1xf32>
    %14 = vector.broadcast %13 : vector<96x1xf32> to vector<96x32xf32>
    %15 = arith.subf %3, %14 : vector<96x32xf32>
    %16 = arith.mulf %15, %15 : vector<96x32xf32>
    %cst_5 = arith.constant dense<0.000000e+00> : vector<96xf32>
    %17 = vector.multi_reduction <add>, %16, %cst_5 [1] : vector<96x32xf32> to vector<96xf32>
    %18 = vector.shape_cast %17 : vector<96xf32> to vector<96x1xf32>
    %cst_6 = arith.constant 3.200000e+01 : f32
    %19 = vector.broadcast %cst_6 : f32 to vector<96x1xf32>
    %20 = arith.divf %18, %19 : vector<96x1xf32>
    %21 = vector.broadcast %13 : vector<96x1xf32> to vector<96x32xf32>
    %22 = arith.subf %3, %21 : vector<96x32xf32>
    %cst_7 = arith.constant 9.99999974E-6 : f32
    %23 = vector.broadcast %cst_7 : f32 to vector<96x1xf32>
    %24 = arith.addf %20, %23 : vector<96x1xf32>
    %25 = math.rsqrt %24 : vector<96x1xf32>
    %26 = vector.broadcast %25 : vector<96x1xf32> to vector<96x32xf32>
    %27 = arith.mulf %22, %26 : vector<96x32xf32>
    %28 = arith.truncf %27 : vector<96x32xf32> to vector<96x32xbf16>
    %c80 = arith.constant 80 : index
    %c0_8 = arith.constant 0 : index
    %29 = vector.load %arg2[%c80, %c0_8] : memref<528x128xbf16, #tpu.memory_space<vmem>>, vector<32x96xbf16>
    %cst_9 = arith.constant dense<0.000000e+00> : vector<96x96xf32>
    %30 = tpu.matmul %28, %29, %cst_9 {dimension_numbers = #tpu.dot_dimension_numbers<[1], [0], [0], [1], [0, 0, 1, 1], [], []>} : vector<96x32xbf16>, vector<32x96xbf16>, vector<96x96xf32> -> vector<96x96xf32>
    %c0_10 = arith.constant 0 : index
    %c0_11 = arith.constant 0 : index
    %31 = vector.load %arg3[%c0_10, %c0_11] : memref<16x128xf32, #tpu.memory_space<vmem>>, vector<1x96xf32>
    %32 = vector.broadcast %31 : vector<1x96xf32> to vector<96x96xf32>
    %33 = arith.addf %30, %32 : vector<96x96xf32>
    %34 = vector.shape_cast %33 : vector<96x96xf32> to vector<4x24x96xf32>
    %35 = vector.extract_strided_slice %34 {offsets = [0, 0, 0], sizes = [4, 24, 16], strides = [1, 1, 1]} : vector<4x24x96xf32> to vector<4x24x16xf32>
    %36 = vector.extract_strided_slice %34 {offsets = [0, 0, 16], sizes = [4, 24, 16], strides = [1, 1, 1]} : vector<4x24x96xf32> to vector<4x24x16xf32>
    %37 = tpu.concatenate %35, %36 in 0 : vector<4x24x16xf32>, vector<4x24x16xf32> -> vector<8x24x16xf32>
    %38 = arith.truncf %37 : vector<8x24x16xf32> to vector<8x24x16xbf16>
    %39 = vector.extract_strided_slice %34 {offsets = [0, 0, 32], sizes = [4, 24, 16], strides = [1, 1, 1]} : vector<4x24x96xf32> to vector<4x24x16xf32>
    %40 = vector.extract_strided_slice %34 {offsets = [0, 0, 48], sizes = [4, 24, 16], strides = [1, 1, 1]} : vector<4x24x96xf32> to vector<4x24x16xf32>
    %41 = tpu.concatenate %39, %40 in 0 : vector<4x24x16xf32>, vector<4x24x16xf32> -> vector<8x24x16xf32>
    %42 = arith.truncf %41 : vector<8x24x16xf32> to vector<8x24x16xbf16>
    %43 = vector.extract_strided_slice %34 {offsets = [0, 0, 64], sizes = [4, 24, 16], strides = [1, 1, 1]} : vector<4x24x96xf32> to vector<4x24x16xf32>
    %44 = vector.extract_strided_slice %34 {offsets = [0, 0, 80], sizes = [4, 24, 16], strides = [1, 1, 1]} : vector<4x24x96xf32> to vector<4x24x16xf32>
    %45 = tpu.concatenate %43, %44 in 0 : vector<4x24x16xf32>, vector<4x24x16xf32> -> vector<8x24x16xf32>
    %46 = arith.truncf %45 : vector<8x24x16xf32> to vector<8x24x16xbf16>
    "tpu.trace_start"() <{level = 10 : i32, message = "bqd,bkd->bqk"}> : () -> ()
    %cst_12 = arith.constant dense<0.000000e+00> : vector<8x24x24xf32>
    %47 = tpu.matmul %38, %42, %cst_12 {dimension_numbers = #tpu.dot_dimension_numbers<[2], [2], [1], [1], [0, 0, 0, 1, 1, 1], [0], [0]>} : vector<8x24x16xbf16>, vector<8x24x16xbf16>, vector<8x24x24xf32> -> vector<8x24x24xf32>
    "tpu.trace_stop"() : () -> ()
    %cst_13 = arith.constant 2.500000e-01 : f32
    %48 = vector.broadcast %cst_13 : f32 to vector<8x24x24xf32>
    %49 = arith.mulf %47, %48 : vector<8x24x24xf32>
    %cst_14 = arith.constant -1.000000e+30 : f32
    %50 = vector.shape_cast %9 : vector<1x1x24xi1> to vector<1x1x24xi1>
    %51 = vector.broadcast %50 : vector<1x1x24xi1> to vector<8x24x24xi1>
    %52 = vector.broadcast %cst_14 : f32 to vector<8x24x24xf32>
    %53 = arith.select %51, %49, %52 : vector<8x24x24xi1>, vector<8x24x24xf32>
    %cst_15 = arith.constant dense<0xFF800000> : vector<8x24xf32>
    %54 = vector.multi_reduction <maximumf>, %53, %cst_15 [2] : vector<8x24x24xf32> to vector<8x24xf32>
    %55 = vector.shape_cast %54 : vector<8x24xf32> to vector<8x24x1xf32>
    %56 = vector.broadcast %55 : vector<8x24x1xf32> to vector<8x24x24xf32>
    %57 = arith.subf %53, %56 : vector<8x24x24xf32>
    %58 = math.exp %57 : vector<8x24x24xf32>
    %cst_16 = arith.constant dense<0.000000e+00> : vector<8x24xf32>
    %59 = vector.multi_reduction <add>, %58, %cst_16 [2] : vector<8x24x24xf32> to vector<8x24xf32>
    %60 = vector.shape_cast %59 : vector<8x24xf32> to vector<8x24x1xf32>
    %61 = tpu.reciprocal %60 {approx = true} : vector<8x24x1xf32> -> vector<8x24x1xf32>
    %62 = vector.broadcast %61 : vector<8x24x1xf32> to vector<8x24x24xf32>
    %63 = arith.mulf %58, %62 : vector<8x24x24xf32>
    %64 = arith.truncf %63 : vector<8x24x24xf32> to vector<8x24x24xbf16>
    "tpu.trace_start"() <{level = 10 : i32, message = "bqk,bkd->bqd"}> : () -> ()
    %cst_17 = arith.constant dense<0.000000e+00> : vector<8x24x16xf32>
    %65 = tpu.matmul %64, %46, %cst_17 {dimension_numbers = #tpu.dot_dimension_numbers<[2], [1], [1], [2], [0, 0, 0, 1, 1, 2], [0], [0]>} : vector<8x24x24xbf16>, vector<8x24x16xbf16>, vector<8x24x16xf32> -> vector<8x24x16xf32>
    "tpu.trace_stop"() : () -> ()
    %66 = vector.extract_strided_slice %65 {offsets = [0, 0, 0], sizes = [4, 24, 16], strides = [1, 1, 1]} : vector<8x24x16xf32> to vector<4x24x16xf32>
    %67 = vector.extract_strided_slice %65 {offsets = [4, 0, 0], sizes = [4, 24, 16], strides = [1, 1, 1]} : vector<8x24x16xf32> to vector<4x24x16xf32>
    %68 = tpu.concatenate %66, %67 in 2 : vector<4x24x16xf32>, vector<4x24x16xf32> -> vector<4x24x32xf32>
    %69 = vector.shape_cast %68 : vector<4x24x32xf32> to vector<96x32xf32>
    %70 = arith.truncf %69 : vector<96x32xf32> to vector<96x32xbf16>
    %c144 = arith.constant 144 : index
    %c0_18 = arith.constant 0 : index
    %71 = vector.load %arg2[%c144, %c0_18] : memref<528x128xbf16, #tpu.memory_space<vmem>>, vector<32x32xbf16>
    %cst_19 = arith.constant dense<0.000000e+00> : vector<96x32xf32>
    %72 = tpu.matmul %70, %71, %cst_19 {dimension_numbers = #tpu.dot_dimension_numbers<[1], [0], [0], [1], [0, 0, 1, 1], [], []>} : vector<96x32xbf16>, vector<32x32xbf16>, vector<96x32xf32> -> vector<96x32xf32>
    %c2 = arith.constant 2 : index
    %c0_20 = arith.constant 0 : index
    %73 = vector.load %arg3[%c2, %c0_20] : memref<16x128xf32, #tpu.memory_space<vmem>>, vector<1x32xf32>
    %74 = vector.broadcast %73 : vector<1x32xf32> to vector<96x32xf32>
    %75 = arith.addf %72, %74 : vector<96x32xf32>
    %76 = arith.addf %3, %75 : vector<96x32xf32>
    %cst_21 = arith.constant dense<0.000000e+00> : vector<96xf32>
    %77 = vector.multi_reduction <add>, %76, %cst_21 [1] : vector<96x32xf32> to vector<96xf32>
    %78 = vector.shape_cast %77 : vector<96xf32> to vector<96x1xf32>
    %cst_22 = arith.constant 3.200000e+01 : f32
    %79 = vector.broadcast %cst_22 : f32 to vector<96x1xf32>
    %80 = arith.divf %78, %79 : vector<96x1xf32>
    %81 = vector.broadcast %80 : vector<96x1xf32> to vector<96x32xf32>
    %82 = arith.subf %76, %81 : vector<96x32xf32>
    %83 = arith.mulf %82, %82 : vector<96x32xf32>
    %cst_23 = arith.constant dense<0.000000e+00> : vector<96xf32>
    %84 = vector.multi_reduction <add>, %83, %cst_23 [1] : vector<96x32xf32> to vector<96xf32>
    %85 = vector.shape_cast %84 : vector<96xf32> to vector<96x1xf32>
    %cst_24 = arith.constant 3.200000e+01 : f32
    %86 = vector.broadcast %cst_24 : f32 to vector<96x1xf32>
    %87 = arith.divf %85, %86 : vector<96x1xf32>
    %88 = vector.broadcast %80 : vector<96x1xf32> to vector<96x32xf32>
    %89 = arith.subf %76, %88 : vector<96x32xf32>
    %cst_25 = arith.constant 9.99999974E-6 : f32
    %90 = vector.broadcast %cst_25 : f32 to vector<96x1xf32>
    %91 = arith.addf %87, %90 : vector<96x1xf32>
    %92 = math.rsqrt %91 : vector<96x1xf32>
    %93 = vector.broadcast %92 : vector<96x1xf32> to vector<96x32xf32>
    %94 = arith.mulf %89, %93 : vector<96x32xf32>
    %95 = arith.truncf %94 : vector<96x32xf32> to vector<96x32xbf16>
    %c208 = arith.constant 208 : index
    %c0_26 = arith.constant 0 : index
    %96 = vector.load %arg2[%c208, %c0_26] : memref<528x128xbf16, #tpu.memory_space<vmem>>, vector<32x64xbf16>
    %cst_27 = arith.constant dense<0.000000e+00> : vector<96x64xf32>
    %97 = tpu.matmul %95, %96, %cst_27 {dimension_numbers = #tpu.dot_dimension_numbers<[1], [0], [0], [1], [0, 0, 1, 1], [], []>} : vector<96x32xbf16>, vector<32x64xbf16>, vector<96x64xf32> -> vector<96x64xf32>
    %c4 = arith.constant 4 : index
    %c0_28 = arith.constant 0 : index
    %98 = vector.load %arg3[%c4, %c0_28] : memref<16x128xf32, #tpu.memory_space<vmem>>, vector<1x64xf32>
    %99 = vector.broadcast %98 : vector<1x64xf32> to vector<96x64xf32>
    %100 = arith.addf %97, %99 : vector<96x64xf32>
    %101 = arith.mulf %100, %100 : vector<96x64xf32>
    %102 = arith.mulf %100, %101 : vector<96x64xf32>
    %cst_29 = arith.constant 4.471500e-02 : f32
    %103 = vector.broadcast %cst_29 : f32 to vector<96x64xf32>
    %104 = arith.mulf %103, %102 : vector<96x64xf32>
    %105 = arith.addf %100, %104 : vector<96x64xf32>
    %cst_30 = arith.constant 0.797884583 : f32
    %106 = vector.broadcast %cst_30 : f32 to vector<96x64xf32>
    %107 = arith.mulf %106, %105 : vector<96x64xf32>
    %108 = math.tanh %107 : vector<96x64xf32>
    %cst_31 = arith.constant 1.000000e+00 : f32
    %109 = vector.broadcast %cst_31 : f32 to vector<96x64xf32>
    %110 = arith.addf %109, %108 : vector<96x64xf32>
    %cst_32 = arith.constant 5.000000e-01 : f32
    %111 = vector.broadcast %cst_32 : f32 to vector<96x64xf32>
    %112 = arith.mulf %111, %110 : vector<96x64xf32>
    %113 = arith.mulf %100, %112 : vector<96x64xf32>
    %114 = arith.truncf %113 : vector<96x64xf32> to vector<96x64xbf16>
    %c272 = arith.constant 272 : index
    %c0_33 = arith.constant 0 : index
    %115 = vector.load %arg2[%c272, %c0_33] : memref<528x128xbf16, #tpu.memory_space<vmem>>, vector<64x32xbf16>
    %cst_34 = arith.constant dense<0.000000e+00> : vector<96x32xf32>
    %116 = tpu.matmul %114, %115, %cst_34 {dimension_numbers = #tpu.dot_dimension_numbers<[1], [0], [0], [1], [0, 0, 1, 1], [], []>} : vector<96x64xbf16>, vector<64x32xbf16>, vector<96x32xf32> -> vector<96x32xf32>
    %c6 = arith.constant 6 : index
    %c0_35 = arith.constant 0 : index
    %117 = vector.load %arg3[%c6, %c0_35] : memref<16x128xf32, #tpu.memory_space<vmem>>, vector<1x32xf32>
    %118 = vector.broadcast %117 : vector<1x32xf32> to vector<96x32xf32>
    %119 = arith.addf %116, %118 : vector<96x32xf32>
    %120 = arith.addf %76, %119 : vector<96x32xf32>
    %cst_36 = arith.constant dense<0.000000e+00> : vector<96xf32>
    %121 = vector.multi_reduction <add>, %120, %cst_36 [1] : vector<96x32xf32> to vector<96xf32>
    %122 = vector.shape_cast %121 : vector<96xf32> to vector<96x1xf32>
    %cst_37 = arith.constant 3.200000e+01 : f32
    %123 = vector.broadcast %cst_37 : f32 to vector<96x1xf32>
    %124 = arith.divf %122, %123 : vector<96x1xf32>
    %125 = vector.broadcast %124 : vector<96x1xf32> to vector<96x32xf32>
    %126 = arith.subf %120, %125 : vector<96x32xf32>
    %127 = arith.mulf %126, %126 : vector<96x32xf32>
    %cst_38 = arith.constant dense<0.000000e+00> : vector<96xf32>
    %128 = vector.multi_reduction <add>, %127, %cst_38 [1] : vector<96x32xf32> to vector<96xf32>
    %129 = vector.shape_cast %128 : vector<96xf32> to vector<96x1xf32>
    %cst_39 = arith.constant 3.200000e+01 : f32
    %130 = vector.broadcast %cst_39 : f32 to vector<96x1xf32>
    %131 = arith.divf %129, %130 : vector<96x1xf32>
    %132 = vector.broadcast %124 : vector<96x1xf32> to vector<96x32xf32>
    %133 = arith.subf %120, %132 : vector<96x32xf32>
    %cst_40 = arith.constant 9.99999974E-6 : f32
    %134 = vector.broadcast %cst_40 : f32 to vector<96x1xf32>
    %135 = arith.addf %131, %134 : vector<96x1xf32>
    %136 = math.rsqrt %135 : vector<96x1xf32>
    %137 = vector.broadcast %136 : vector<96x1xf32> to vector<96x32xf32>
    %138 = arith.mulf %133, %137 : vector<96x32xf32>
    %139 = arith.truncf %138 : vector<96x32xf32> to vector<96x32xbf16>
    %c112 = arith.constant 112 : index
    %c0_41 = arith.constant 0 : index
    %140 = vector.load %arg2[%c112, %c0_41] : memref<528x128xbf16, #tpu.memory_space<vmem>>, vector<32x96xbf16>
    %cst_42 = arith.constant dense<0.000000e+00> : vector<96x96xf32>
    %141 = tpu.matmul %139, %140, %cst_42 {dimension_numbers = #tpu.dot_dimension_numbers<[1], [0], [0], [1], [0, 0, 1, 1], [], []>} : vector<96x32xbf16>, vector<32x96xbf16>, vector<96x96xf32> -> vector<96x96xf32>
    %c1 = arith.constant 1 : index
    %c0_43 = arith.constant 0 : index
    %142 = vector.load %arg3[%c1, %c0_43] : memref<16x128xf32, #tpu.memory_space<vmem>>, vector<1x96xf32>
    %143 = vector.broadcast %142 : vector<1x96xf32> to vector<96x96xf32>
    %144 = arith.addf %141, %143 : vector<96x96xf32>
    %145 = vector.shape_cast %144 : vector<96x96xf32> to vector<4x24x96xf32>
    %146 = vector.extract_strided_slice %145 {offsets = [0, 0, 0], sizes = [4, 24, 16], strides = [1, 1, 1]} : vector<4x24x96xf32> to vector<4x24x16xf32>
    %147 = vector.extract_strided_slice %145 {offsets = [0, 0, 16], sizes = [4, 24, 16], strides = [1, 1, 1]} : vector<4x24x96xf32> to vector<4x24x16xf32>
    %148 = tpu.concatenate %146, %147 in 0 : vector<4x24x16xf32>, vector<4x24x16xf32> -> vector<8x24x16xf32>
    %149 = arith.truncf %148 : vector<8x24x16xf32> to vector<8x24x16xbf16>
    %150 = vector.extract_strided_slice %145 {offsets = [0, 0, 32], sizes = [4, 24, 16], strides = [1, 1, 1]} : vector<4x24x96xf32> to vector<4x24x16xf32>
    %151 = vector.extract_strided_slice %145 {offsets = [0, 0, 48], sizes = [4, 24, 16], strides = [1, 1, 1]} : vector<4x24x96xf32> to vector<4x24x16xf32>
    %152 = tpu.concatenate %150, %151 in 0 : vector<4x24x16xf32>, vector<4x24x16xf32> -> vector<8x24x16xf32>
    %153 = arith.truncf %152 : vector<8x24x16xf32> to vector<8x24x16xbf16>
    %154 = vector.extract_strided_slice %145 {offsets = [0, 0, 64], sizes = [4, 24, 16], strides = [1, 1, 1]} : vector<4x24x96xf32> to vector<4x24x16xf32>
    %155 = vector.extract_strided_slice %145 {offsets = [0, 0, 80], sizes = [4, 24, 16], strides = [1, 1, 1]} : vector<4x24x96xf32> to vector<4x24x16xf32>
    %156 = tpu.concatenate %154, %155 in 0 : vector<4x24x16xf32>, vector<4x24x16xf32> -> vector<8x24x16xf32>
    %157 = arith.truncf %156 : vector<8x24x16xf32> to vector<8x24x16xbf16>
    "tpu.trace_start"() <{level = 10 : i32, message = "bqd,bkd->bqk"}> : () -> ()
    %cst_44 = arith.constant dense<0.000000e+00> : vector<8x24x24xf32>
    %158 = tpu.matmul %149, %153, %cst_44 {dimension_numbers = #tpu.dot_dimension_numbers<[2], [2], [1], [1], [0, 0, 0, 1, 1, 1], [0], [0]>} : vector<8x24x16xbf16>, vector<8x24x16xbf16>, vector<8x24x24xf32> -> vector<8x24x24xf32>
    "tpu.trace_stop"() : () -> ()
    %cst_45 = arith.constant 2.500000e-01 : f32
    %159 = vector.broadcast %cst_45 : f32 to vector<8x24x24xf32>
    %160 = arith.mulf %158, %159 : vector<8x24x24xf32>
    %cst_46 = arith.constant -1.000000e+30 : f32
    %161 = vector.shape_cast %9 : vector<1x1x24xi1> to vector<1x1x24xi1>
    %162 = vector.broadcast %161 : vector<1x1x24xi1> to vector<8x24x24xi1>
    %163 = vector.broadcast %cst_46 : f32 to vector<8x24x24xf32>
    %164 = arith.select %162, %160, %163 : vector<8x24x24xi1>, vector<8x24x24xf32>
    %cst_47 = arith.constant dense<0xFF800000> : vector<8x24xf32>
    %165 = vector.multi_reduction <maximumf>, %164, %cst_47 [2] : vector<8x24x24xf32> to vector<8x24xf32>
    %166 = vector.shape_cast %165 : vector<8x24xf32> to vector<8x24x1xf32>
    %167 = vector.broadcast %166 : vector<8x24x1xf32> to vector<8x24x24xf32>
    %168 = arith.subf %164, %167 : vector<8x24x24xf32>
    %169 = math.exp %168 : vector<8x24x24xf32>
    %cst_48 = arith.constant dense<0.000000e+00> : vector<8x24xf32>
    %170 = vector.multi_reduction <add>, %169, %cst_48 [2] : vector<8x24x24xf32> to vector<8x24xf32>
    %171 = vector.shape_cast %170 : vector<8x24xf32> to vector<8x24x1xf32>
    %172 = tpu.reciprocal %171 {approx = true} : vector<8x24x1xf32> -> vector<8x24x1xf32>
    %173 = vector.broadcast %172 : vector<8x24x1xf32> to vector<8x24x24xf32>
    %174 = arith.mulf %169, %173 : vector<8x24x24xf32>
    %175 = arith.truncf %174 : vector<8x24x24xf32> to vector<8x24x24xbf16>
    "tpu.trace_start"() <{level = 10 : i32, message = "bqk,bkd->bqd"}> : () -> ()
    %cst_49 = arith.constant dense<0.000000e+00> : vector<8x24x16xf32>
    %176 = tpu.matmul %175, %157, %cst_49 {dimension_numbers = #tpu.dot_dimension_numbers<[2], [1], [1], [2], [0, 0, 0, 1, 1, 2], [0], [0]>} : vector<8x24x24xbf16>, vector<8x24x16xbf16>, vector<8x24x16xf32> -> vector<8x24x16xf32>
    "tpu.trace_stop"() : () -> ()
    %177 = vector.extract_strided_slice %176 {offsets = [0, 0, 0], sizes = [4, 24, 16], strides = [1, 1, 1]} : vector<8x24x16xf32> to vector<4x24x16xf32>
    %178 = vector.extract_strided_slice %176 {offsets = [4, 0, 0], sizes = [4, 24, 16], strides = [1, 1, 1]} : vector<8x24x16xf32> to vector<4x24x16xf32>
    %179 = tpu.concatenate %177, %178 in 2 : vector<4x24x16xf32>, vector<4x24x16xf32> -> vector<4x24x32xf32>
    %180 = vector.shape_cast %179 : vector<4x24x32xf32> to vector<96x32xf32>
    %181 = arith.truncf %180 : vector<96x32xf32> to vector<96x32xbf16>
    %c176 = arith.constant 176 : index
    %c0_50 = arith.constant 0 : index
    %182 = vector.load %arg2[%c176, %c0_50] : memref<528x128xbf16, #tpu.memory_space<vmem>>, vector<32x32xbf16>
    %cst_51 = arith.constant dense<0.000000e+00> : vector<96x32xf32>
    %183 = tpu.matmul %181, %182, %cst_51 {dimension_numbers = #tpu.dot_dimension_numbers<[1], [0], [0], [1], [0, 0, 1, 1], [], []>} : vector<96x32xbf16>, vector<32x32xbf16>, vector<96x32xf32> -> vector<96x32xf32>
    %c3 = arith.constant 3 : index
    %c0_52 = arith.constant 0 : index
    %184 = vector.load %arg3[%c3, %c0_52] : memref<16x128xf32, #tpu.memory_space<vmem>>, vector<1x32xf32>
    %185 = vector.broadcast %184 : vector<1x32xf32> to vector<96x32xf32>
    %186 = arith.addf %183, %185 : vector<96x32xf32>
    %187 = arith.addf %120, %186 : vector<96x32xf32>
    %cst_53 = arith.constant dense<0.000000e+00> : vector<96xf32>
    %188 = vector.multi_reduction <add>, %187, %cst_53 [1] : vector<96x32xf32> to vector<96xf32>
    %189 = vector.shape_cast %188 : vector<96xf32> to vector<96x1xf32>
    %cst_54 = arith.constant 3.200000e+01 : f32
    %190 = vector.broadcast %cst_54 : f32 to vector<96x1xf32>
    %191 = arith.divf %189, %190 : vector<96x1xf32>
    %192 = vector.broadcast %191 : vector<96x1xf32> to vector<96x32xf32>
    %193 = arith.subf %187, %192 : vector<96x32xf32>
    %194 = arith.mulf %193, %193 : vector<96x32xf32>
    %cst_55 = arith.constant dense<0.000000e+00> : vector<96xf32>
    %195 = vector.multi_reduction <add>, %194, %cst_55 [1] : vector<96x32xf32> to vector<96xf32>
    %196 = vector.shape_cast %195 : vector<96xf32> to vector<96x1xf32>
    %cst_56 = arith.constant 3.200000e+01 : f32
    %197 = vector.broadcast %cst_56 : f32 to vector<96x1xf32>
    %198 = arith.divf %196, %197 : vector<96x1xf32>
    %199 = vector.broadcast %191 : vector<96x1xf32> to vector<96x32xf32>
    %200 = arith.subf %187, %199 : vector<96x32xf32>
    %cst_57 = arith.constant 9.99999974E-6 : f32
    %201 = vector.broadcast %cst_57 : f32 to vector<96x1xf32>
    %202 = arith.addf %198, %201 : vector<96x1xf32>
    %203 = math.rsqrt %202 : vector<96x1xf32>
    %204 = vector.broadcast %203 : vector<96x1xf32> to vector<96x32xf32>
    %205 = arith.mulf %200, %204 : vector<96x32xf32>
    %206 = arith.truncf %205 : vector<96x32xf32> to vector<96x32xbf16>
    %c240 = arith.constant 240 : index
    %c0_58 = arith.constant 0 : index
    %207 = vector.load %arg2[%c240, %c0_58] : memref<528x128xbf16, #tpu.memory_space<vmem>>, vector<32x64xbf16>
    %cst_59 = arith.constant dense<0.000000e+00> : vector<96x64xf32>
    %208 = tpu.matmul %206, %207, %cst_59 {dimension_numbers = #tpu.dot_dimension_numbers<[1], [0], [0], [1], [0, 0, 1, 1], [], []>} : vector<96x32xbf16>, vector<32x64xbf16>, vector<96x64xf32> -> vector<96x64xf32>
    %c5 = arith.constant 5 : index
    %c0_60 = arith.constant 0 : index
    %209 = vector.load %arg3[%c5, %c0_60] : memref<16x128xf32, #tpu.memory_space<vmem>>, vector<1x64xf32>
    %210 = vector.broadcast %209 : vector<1x64xf32> to vector<96x64xf32>
    %211 = arith.addf %208, %210 : vector<96x64xf32>
    %212 = arith.mulf %211, %211 : vector<96x64xf32>
    %213 = arith.mulf %211, %212 : vector<96x64xf32>
    %cst_61 = arith.constant 4.471500e-02 : f32
    %214 = vector.broadcast %cst_61 : f32 to vector<96x64xf32>
    %215 = arith.mulf %214, %213 : vector<96x64xf32>
    %216 = arith.addf %211, %215 : vector<96x64xf32>
    %cst_62 = arith.constant 0.797884583 : f32
    %217 = vector.broadcast %cst_62 : f32 to vector<96x64xf32>
    %218 = arith.mulf %217, %216 : vector<96x64xf32>
    %219 = math.tanh %218 : vector<96x64xf32>
    %cst_63 = arith.constant 1.000000e+00 : f32
    %220 = vector.broadcast %cst_63 : f32 to vector<96x64xf32>
    %221 = arith.addf %220, %219 : vector<96x64xf32>
    %cst_64 = arith.constant 5.000000e-01 : f32
    %222 = vector.broadcast %cst_64 : f32 to vector<96x64xf32>
    %223 = arith.mulf %222, %221 : vector<96x64xf32>
    %224 = arith.mulf %211, %223 : vector<96x64xf32>
    %225 = arith.truncf %224 : vector<96x64xf32> to vector<96x64xbf16>
    %c336 = arith.constant 336 : index
    %c0_65 = arith.constant 0 : index
    %226 = vector.load %arg2[%c336, %c0_65] : memref<528x128xbf16, #tpu.memory_space<vmem>>, vector<64x32xbf16>
    %cst_66 = arith.constant dense<0.000000e+00> : vector<96x32xf32>
    %227 = tpu.matmul %225, %226, %cst_66 {dimension_numbers = #tpu.dot_dimension_numbers<[1], [0], [0], [1], [0, 0, 1, 1], [], []>} : vector<96x64xbf16>, vector<64x32xbf16>, vector<96x32xf32> -> vector<96x32xf32>
    %c7 = arith.constant 7 : index
    %c0_67 = arith.constant 0 : index
    %228 = vector.load %arg3[%c7, %c0_67] : memref<16x128xf32, #tpu.memory_space<vmem>>, vector<1x32xf32>
    %229 = vector.broadcast %228 : vector<1x32xf32> to vector<96x32xf32>
    %230 = arith.addf %227, %229 : vector<96x32xf32>
    %231 = arith.addf %187, %230 : vector<96x32xf32>
    %cst_68 = arith.constant dense<0.000000e+00> : vector<96xf32>
    %232 = vector.multi_reduction <add>, %231, %cst_68 [1] : vector<96x32xf32> to vector<96xf32>
    %233 = vector.shape_cast %232 : vector<96xf32> to vector<96x1xf32>
    %cst_69 = arith.constant 3.200000e+01 : f32
    %234 = vector.broadcast %cst_69 : f32 to vector<96x1xf32>
    %235 = arith.divf %233, %234 : vector<96x1xf32>
    %236 = vector.broadcast %235 : vector<96x1xf32> to vector<96x32xf32>
    %237 = arith.subf %231, %236 : vector<96x32xf32>
    %238 = arith.mulf %237, %237 : vector<96x32xf32>
    %cst_70 = arith.constant dense<0.000000e+00> : vector<96xf32>
    %239 = vector.multi_reduction <add>, %238, %cst_70 [1] : vector<96x32xf32> to vector<96xf32>
    %240 = vector.shape_cast %239 : vector<96xf32> to vector<96x1xf32>
    %cst_71 = arith.constant 3.200000e+01 : f32
    %241 = vector.broadcast %cst_71 : f32 to vector<96x1xf32>
    %242 = arith.divf %240, %241 : vector<96x1xf32>
    %243 = vector.broadcast %235 : vector<96x1xf32> to vector<96x32xf32>
    %244 = arith.subf %231, %243 : vector<96x32xf32>
    %cst_72 = arith.constant 9.99999974E-6 : f32
    %245 = vector.broadcast %cst_72 : f32 to vector<96x1xf32>
    %246 = arith.addf %242, %245 : vector<96x1xf32>
    %247 = math.rsqrt %246 : vector<96x1xf32>
    %248 = vector.broadcast %247 : vector<96x1xf32> to vector<96x32xf32>
    %249 = arith.mulf %244, %248 : vector<96x32xf32>
    %250 = vector.shape_cast %249 : vector<96x32xf32> to vector<4x24x32xf32>
    %251 = vector.extract_strided_slice %250 {offsets = [0, 8, 0], sizes = [4, 4, 32], strides = [1, 1, 1]} : vector<4x24x32xf32> to vector<4x4x32xf32>
    %cst_73 = arith.constant dense<0.000000e+00> : vector<4x32xf32>
    %252 = vector.multi_reduction <add>, %251, %cst_73 [1] : vector<4x4x32xf32> to vector<4x32xf32>
    %cst_74 = arith.constant 4.000000e+00 : f32
    %253 = vector.broadcast %cst_74 : f32 to vector<4x32xf32>
    %254 = arith.divf %252, %253 : vector<4x32xf32>
    %255 = vector.extract_strided_slice %250 {offsets = [0, 12, 0], sizes = [4, 4, 32], strides = [1, 1, 1]} : vector<4x24x32xf32> to vector<4x4x32xf32>
    %cst_75 = arith.constant dense<0.000000e+00> : vector<4x32xf32>
    %256 = vector.multi_reduction <add>, %255, %cst_75 [1] : vector<4x4x32xf32> to vector<4x32xf32>
    %cst_76 = arith.constant 4.000000e+00 : f32
    %257 = vector.broadcast %cst_76 : f32 to vector<4x32xf32>
    %258 = arith.divf %256, %257 : vector<4x32xf32>
    %259 = vector.extract_strided_slice %250 {offsets = [0, 16, 0], sizes = [4, 4, 32], strides = [1, 1, 1]} : vector<4x24x32xf32> to vector<4x4x32xf32>
    %cst_77 = arith.constant dense<0.000000e+00> : vector<4x32xf32>
    %260 = vector.multi_reduction <add>, %259, %cst_77 [1] : vector<4x4x32xf32> to vector<4x32xf32>
    %cst_78 = arith.constant 4.000000e+00 : f32
    %261 = vector.broadcast %cst_78 : f32 to vector<4x32xf32>
    %262 = arith.divf %260, %261 : vector<4x32xf32>
    %263 = vector.extract_strided_slice %250 {offsets = [0, 20, 0], sizes = [4, 4, 32], strides = [1, 1, 1]} : vector<4x24x32xf32> to vector<4x4x32xf32>
    %cst_79 = arith.constant dense<0.000000e+00> : vector<4x32xf32>
    %264 = vector.multi_reduction <add>, %263, %cst_79 [1] : vector<4x4x32xf32> to vector<4x32xf32>
    %cst_80 = arith.constant 4.000000e+00 : f32
    %265 = vector.broadcast %cst_80 : f32 to vector<4x32xf32>
    %266 = arith.divf %264, %265 : vector<4x32xf32>
    %267 = tpu.concatenate %254, %258, %262, %266 in 1 : vector<4x32xf32>, vector<4x32xf32>, vector<4x32xf32>, vector<4x32xf32> -> vector<4x128xf32>
    %268 = arith.truncf %267 : vector<4x128xf32> to vector<4x128xbf16>
    %c400 = arith.constant 400 : index
    %c0_81 = arith.constant 0 : index
    %269 = vector.load %arg2[%c400, %c0_81] : memref<528x128xbf16, #tpu.memory_space<vmem>>, vector<128x40xbf16>
    %cst_82 = arith.constant dense<0.000000e+00> : vector<4x40xf32>
    %270 = tpu.matmul %268, %269, %cst_82 {dimension_numbers = #tpu.dot_dimension_numbers<[1], [0], [0], [1], [0, 0, 1, 1], [], []>} : vector<4x128xbf16>, vector<128x40xbf16>, vector<4x40xf32> -> vector<4x40xf32>
    %c8 = arith.constant 8 : index
    %c0_83 = arith.constant 0 : index
    %271 = vector.load %arg3[%c8, %c0_83] : memref<16x128xf32, #tpu.memory_space<vmem>>, vector<1x40xf32>
    %272 = vector.broadcast %271 : vector<1x40xf32> to vector<4x40xf32>
    %273 = arith.addf %270, %272 : vector<4x40xf32>
    %c0_84 = arith.constant 0 : index
    %c0_85 = arith.constant 0 : index
    %274 = vector.load %arg4[%c0_84, %c0_85] : memref<4x40xf32, #tpu.memory_space<vmem>>, vector<4x40xf32>
    tpu.vector_store %arg4[%c0_84, %c0_85], %273 {strides = array<i32>} : memref<4x40xf32, #tpu.memory_space<vmem>>, vector<4x40xf32>,
    return
  }
  func.func @transform_0(%arg0: i32) -> (i32, i32) {
    %c0_i32 = arith.constant 0 : i32
    %c0_i32_0 = arith.constant 0 : i32
    %c0_i32_1 = arith.constant 0 : i32
    return %c0_i32, %c0_i32_0 : i32, i32
  }
  func.func @transform_1(%arg0: i32) -> (i32, i32) {
    %c0_i32 = arith.constant 0 : i32
    %c0_i32_0 = arith.constant 0 : i32
    %c0_i32_1 = arith.constant 0 : i32
    return %c0_i32, %c0_i32_0 : i32, i32
  }
  func.func @transform_2(%arg0: i32) -> (i32, i32) {
    %c0_i32 = arith.constant 0 : i32
    %c0_i32_0 = arith.constant 0 : i32
    %c0_i32_1 = arith.constant 0 : i32
    return %c0_i32, %c0_i32_0 : i32, i32
  }
  func.func @transform_3(%arg0: i32) -> (i32, i32) {
    %c0_i32 = arith.constant 0 : i32
    %c0_i32_0 = arith.constant 0 : i32
    %c0_i32_1 = arith.constant 0 : i32
    return %c0_i32, %c0_i32_0 : i32, i32
  }
}

</mosaic_0001>

<llo_original>
// kernel: _fused_forward.1
$region0: #{_fused_forward.1}
  #allocation0 [shape = 'u32[]', space=smem, size = 0x4, offset = 0x4, fixed_abs, tag = 'smem constant byte address 0x4 - core index']
  #allocation1 [shape = 'u32[144,128]{1,0:T(1,128)}', space=vmem, size = 0x12000, scoped, tag = 'internal scratch']
  %s0 = inlined_call_operand.vmem [shape: f32[96,72], index: 0, kind: input, shape index: {}]
  %s1 = inlined_call_operand.vmem [shape: bf16[528,128], index: 1, kind: input, shape index: {}]
  %s2 = inlined_call_operand.vmem [shape: f32[16,128], index: 2, kind: input, shape index: {}]
  %s3 = inlined_call_operand.hbm [shape: f32[4,40], index: 3, kind: output, shape index: {}]
  %s4 = sld [smem:[#allocation0]]
  $region22: #{_fused_forward.1} parent=0
    _
  %s6 = ssub.s32 1, %s4
  %s7 = scalar_select 0, %s6, %s4
  $region1: #{_fused_forward.1} parent=0
    #allocation2 [shape = 'u8[2048]{0}', space=vmem, size = 0x800, scoped, tag = 'output window, operand 0, single buffered']
    #allocation3 [shape = 's32[1]{0}', space=sflag, size = 0x4, scoped, tag = 'scoped memory for _fused_forward.1']
    %8 = vsyncpa [#allocation3], 0
    // Predicated region
    $region2: #{_fused_forward.1} parent=1 // pred_check
      _
    $region3: #{_fused_forward.1} parent=1 // pred_check_branch
      %10 = sbr.rel (0) target = $region5
    $region4: #{_fused_forward.1} parent=1 // pred_region
      _
    $region5: #{_fused_forward.1} parent=1 // pred_fallthru
      _
    // Predicated region
    $region6: #{_fused_forward.1} parent=1 // pred_check
      _
    $region7: #{_fused_forward.1} parent=1 // pred_check_branch
      %12 = sbr.rel (0) target = $region9
    $region8: #{_fused_forward.1} parent=1 // pred_region
      _
    $region9: #{_fused_forward.1} parent=1 // pred_fallthru
      _
    // Predicated region
    $region10: #{_fused_forward.1} parent=1 // pred_check
      _
    $region11: #{_fused_forward.1} parent=1 // pred_check_branch
      %14 = sbr.rel (0) target = $region13
    $region12: #{_fused_forward.1} parent=1 // pred_region
      _
    $region13: #{_fused_forward.1} parent=1 // pred_fallthru
      _
    %v16 = vld [vmem:[%s0] sm:$0xff]
    %v17 = vld [vmem:[%s0 + $0x8] sm:$0xff]
    %v18 = vld [vmem:[%s0 + $0x10] sm:$0xff]
    %v19 = vld [vmem:[%s0 + $0x18] sm:$0xff]
    %v20 = vld [vmem:[%s0 + $0x20] sm:$0xff]
    %v21 = vld [vmem:[%s0 + $0x28] sm:$0xff]
    %v22 = vld [vmem:[%s0 + $0x30] sm:$0xff]
    %v23 = vld [vmem:[%s0 + $0x38] sm:$0xff]
    %v24 = vld [vmem:[%s0 + $0x40] sm:$0xff]
    %v25 = vld [vmem:[%s0 + $0x48] sm:$0xff]
    %v26 = vld [vmem:[%s0 + $0x50] sm:$0xff]
    %v27 = vld [vmem:[%s0 + $0x58] sm:$0xff]
    %v28 = vpack.c.bf16 %v17, %v16
    %v29 = vpack.c.bf16 %v19, %v18
    %v30 = vpack.c.bf16 %v21, %v20
    %v31 = vpack.c.bf16 %v23, %v22
    %v32 = vpack.c.bf16 %v25, %v24
    %v33 = vpack.c.bf16 %v27, %v26
    %v34 = vld [vmem:[%s1] sm:$0xf]
    %v35 = vld [vmem:[%s1 + $0x4] sm:$0xf]
    %v36 = vld [vmem:[%s1 + $0x8] sm:$0xf]
    %v37 = vld [vmem:[%s1 + $0xc] sm:$0xf]
    %v38 = vld [vmem:[%s1 + $0x10] sm:$0xf]
    %v39 = vld [vmem:[%s1 + $0x14] sm:$0xf]
    %v40 = vld [vmem:[%s1 + $0x18] sm:$0xf]
    %v41 = vld [vmem:[%s1 + $0x1c] sm:$0xf]
    %v42 = vld [vmem:[%s1 + $0x20] sm:$0xf]
    %v52 = vunpack.c.l.b16 %v34
    %v53 = vunpack.c.l.b16 %v35
    %v54 = vunpack.c.l.b16 %v36
    %v55 = vunpack.c.l.b16 %v37
    %v56 = vunpack.c.l.b16 %v38
    %v57 = vunpack.c.l.b16 %v39
    %v58 = vunpack.c.l.b16 %v40
    %v59 = vunpack.c.l.b16 %v41
    %v60 = vunpack.c.l.b16 %v42
    %v61 = vpack.c.b16 %v53, %v52
    %v62 = vpack.c.b16 %v55, %v54
    %v63 = vpack.c.b16 %v57, %v56
    %v64 = vpack.c.b16 %v59, %v58
    %v65 = vpack.c.b16 %v60, %v60
    %vm70 = vcmask 588800
    %v72 = vsel %vm70, %v28, 0
    %v75 = vsel %vm70, %v29, 0
    %v78 = vsel %vm70, %v30, 0
    %v81 = vsel %vm70, %v31, 0
    %v84 = vsel %vm70, %v32, 0
    %v87 = vsel %vm70, %v33, 0
    %vm89 = vcmask 1043456
    %v91 = vsel %vm89, %v65, 0
    %93 = vmatprep.subr.bf16.mxu0 0
    %94 = vmatpush1.bf16.msra.mxu0 %v61
    %95 = vmatprep.subr.bf16.mxu0 0
    %96 = vmatpush1.bf16.msra.mxu0 %v62
    %97 = vmatprep.subr.bf16.mxu0 0
    %98 = vmatpush1.bf16.msra.mxu0 %v63
    %99 = vmatprep.subr.bf16.mxu0 0
    %100 = vmatpush1.bf16.msra.mxu0 %v64
    %101 = vmatprep.subr.bf16.mxu0 0
    %102 = vmatpush1.bf16.msra.mxu0 %v91
    %103 = vmatprep.subr.bf16.mxu0 0
    %104 = vmatpush1.bf16.msra.mxu0 0
    %105 = vmatprep.subr.bf16.mxu0 0
    %106 = vmatpush1.bf16.msra.mxu0 0
    %107 = vmatprep.subr.bf16.mxu0 0
    %108 = vmatpush1.bf16.msra.mxu0 0
    %109 = vmatprep.subr.bf16.mxu0 0
    %110 = vmatpush1.bf16.msra.mxu0 0
    %111 = vmatprep.subr.bf16.mxu0 0
    %112 = vmatpush1.bf16.msra.mxu0 0
    %113 = vmatprep.subr.bf16.mxu0 0
    %114 = vmatpush1.bf16.msra.mxu0 0
    %115 = vmatprep.subr.bf16.mxu0 0
    %116 = vmatpush1.bf16.msra.mxu0 0
    %117 = vmatprep.subr.bf16.mxu0 0
    %118 = vmatpush1.bf16.msra.mxu0 0
    %119 = vmatprep.subr.bf16.mxu0 0
    %120 = vmatpush1.bf16.msra.mxu0 0
    %121 = vmatprep.subr.bf16.mxu0 0
    %122 = vmatpush1.bf16.msra.mxu0 0
    %123 = vmatprep.subr.bf16.mxu0 0
    %124 = vmatpush1.bf16.msra.mxu0 0
    %125 = vmatprep.mubr.bf16.mxu0 0
    %126 = vmatmul.mubr.bf16.gmra.mrb[0].mxu0 %v72
    %v127 = vpop.f32.mrb[0].mxu0
    %v128 = vadd.f32 0.0, %v127
    %v129 = vpop.f32.mrb[0].mxu0
    %v130 = vpop.f32.mrb[0].mxu0
    %v131 = vadd.f32 0.0, %v130
    %v132 = vpop.f32.mrb[0].mxu0
    %133 = vmatprep.mubr.bf16.mxu0 0
    %134 = vmatmul.mubr.bf16.gmra.mrb[0].mxu0 %v75
    %v135 = vpop.f32.mrb[0].mxu0
    %v136 = vadd.f32 0.0, %v135
    %v137 = vpop.f32.mrb[0].mxu0
    %v138 = vpop.f32.mrb[0].mxu0
    %v139 = vadd.f32 0.0, %v138
    %v140 = vpop.f32.mrb[0].mxu0
    %141 = vmatprep.mubr.bf16.mxu0 0
    %142 = vmatmul.mubr.bf16.gmra.mrb[0].mxu0 %v78
    %v143 = vpop.f32.mrb[0].mxu0
    %v144 = vadd.f32 0.0, %v143
    %v145 = vpop.f32.mrb[0].mxu0
    %v146 = vpop.f32.mrb[0].mxu0
    %v147 = vadd.f32 0.0, %v146
    %v148 = vpop.f32.mrb[0].mxu0
    %149 = vmatprep.mubr.bf16.mxu0 0
    %150 = vmatmul.mubr.bf16.gmra.mrb[0].mxu0 %v81
    %v151 = vpop.f32.mrb[0].mxu0
    %v152 = vadd.f32 0.0, %v151
    %v153 = vpop.f32.mrb[0].mxu0
    %v154 = vpop.f32.mrb[0].mxu0
    %v155 = vadd.f32 0.0, %v154
    %v156 = vpop.f32.mrb[0].mxu0
    %157 = vmatprep.mubr.bf16.mxu0 0
    %158 = vmatmul.mubr.bf16.gmra.mrb[0].mxu0 %v84
    %v159 = vpop.f32.mrb[0].mxu0
    %v160 = vadd.f32 0.0, %v159
    %v161 = vpop.f32.mrb[0].mxu0
    %v162 = vpop.f32.mrb[0].mxu0
    %v163 = vadd.f32 0.0, %v162
    %v164 = vpop.f32.mrb[0].mxu0
    %165 = vmatprep.mubr.bf16.mxu0 0
    %166 = vmatmul.mubr.bf16.gmra.mrb[0].mxu0 %v87
    %v167 = vpop.f32.mrb[0].mxu0
    %v168 = vadd.f32 0.0, %v167
    %v169 = vpop.f32.mrb[0].mxu0
    %v170 = vpop.f32.mrb[0].mxu0
    %v171 = vadd.f32 0.0, %v170
    %v172 = vpop.f32.mrb[0].mxu0
    %173 = vdwg.mxu0
    %v174 = vlaneseq
    %v175 = vand.u32 %v174, 127
    %vm176 = vcmp.eq.s32.totalorder %v175, 0
    %vm177 = vcmp.ge.s32.totalorder %v175, 8
    %vm178 = vmor %vm176, %vm177
    %vm179 = vcmask 261120
    %v180 = vsel %vm179, %v128, 0.0
    %181 = vadd.xlane.f32.xlu0 %v180
    %v182 = vpop.xlane.xlu0 %181
    %v183 = vsel %vm179, %v131, 0.0
    %184 = vadd.xlane.f32.xlu0 %v183
    %v185 = vpop.xlane.xlu0 %184
    %v186 = vsel %vm179, %v136, 0.0
    %187 = vadd.xlane.f32.xlu0 %v186
    %v188 = vpop.xlane.xlu0 %187
    %v189 = vsel %vm179, %v139, 0.0
    %190 = vadd.xlane.f32.xlu0 %v189
    %v191 = vpop.xlane.xlu0 %190
    %v192 = vsel %vm179, %v144, 0.0
    %193 = vadd.xlane.f32.xlu0 %v192
    %v194 = vpop.xlane.xlu0 %193
    %v195 = vsel %vm179, %v147, 0.0
    %196 = vadd.xlane.f32.xlu0 %v195
    %v197 = vpop.xlane.xlu0 %196
    %v198 = vsel %vm179, %v152, 0.0
    %199 = vadd.xlane.f32.xlu0 %v198
    %v200 = vpop.xlane.xlu0 %199
    %v201 = vsel %vm179, %v155, 0.0
    %202 = vadd.xlane.f32.xlu0 %v201
    %v203 = vpop.xlane.xlu0 %202
    %v204 = vsel %vm179, %v160, 0.0
    %205 = vadd.xlane.f32.xlu0 %v204
    %v206 = vpop.xlane.xlu0 %205
    %v207 = vsel %vm179, %v163, 0.0
    %208 = vadd.xlane.f32.xlu0 %v207
    %v209 = vpop.xlane.xlu0 %208
    %v210 = vsel %vm179, %v168, 0.0
    %211 = vadd.xlane.f32.xlu0 %v210
    %v212 = vpop.xlane.xlu0 %211
    %v213 = vsel %vm179, %v171, 0.0
    %214 = vadd.xlane.f32.xlu0 %v213
    %v215 = vpop.xlane.xlu0 %214
    %v216 = vrcp.pop 32.0
    %v217 = vmul.f32 %v182, %v216
    %v218 = vmul.f32 %v185, %v216
    %v219 = vmul.f32 %v188, %v216
    %v220 = vmul.f32 %v191, %v216
    %v221 = vmul.f32 %v194, %v216
    %v222 = vmul.f32 %v197, %v216
    %v223 = vmul.f32 %v200, %v216
    %v224 = vmul.f32 %v203, %v216
    %v225 = vmul.f32 %v206, %v216
    %v226 = vmul.f32 %v209, %v216
    %v227 = vmul.f32 %v212, %v216
    %v228 = vmul.f32 %v215, %v216
    %v229 = vsub.f32 %v128, %v217
    %v230 = vsub.f32 %v131, %v218
    %v231 = vsub.f32 %v136, %v219
    %v232 = vsub.f32 %v139, %v220
    %v233 = vsub.f32 %v144, %v221
    %v234 = vsub.f32 %v147, %v222
    %v235 = vsub.f32 %v152, %v223
    %v236 = vsub.f32 %v155, %v224
    %v237 = vsub.f32 %v160, %v225
    %v238 = vsub.f32 %v163, %v226
    %v239 = vsub.f32 %v168, %v227
    %v240 = vsub.f32 %v171, %v228
    %v241 = vmul.f32 %v229, %v229
    %v242 = vmul.f32 %v230, %v230
    %v243 = vmul.f32 %v231, %v231
    %v244 = vmul.f32 %v232, %v232
    %v245 = vmul.f32 %v233, %v233
    %v246 = vmul.f32 %v234, %v234
    %v247 = vmul.f32 %v235, %v235
    %v248 = vmul.f32 %v236, %v236
    %v249 = vmul.f32 %v237, %v237
    %v250 = vmul.f32 %v238, %v238
    %v251 = vmul.f32 %v239, %v239
    %v252 = vmul.f32 %v240, %v240
    %v253 = vsel %vm179, %v241, 0.0
    %254 = vadd.xlane.f32.xlu0 %v253
    %v255 = vpop.xlane.xlu0 %254
    %v256 = vsel %vm179, %v242, 0.0
    %257 = vadd.xlane.f32.xlu0 %v256
    %v258 = vpop.xlane.xlu0 %257
    %v259 = vsel %vm179, %v243, 0.0
    %260 = vadd.xlane.f32.xlu0 %v259
    %v261 = vpop.xlane.xlu0 %260
    %v262 = vsel %vm179, %v244, 0.0
    %263 = vadd.xlane.f32.xlu0 %v262
    %v264 = vpop.xlane.xlu0 %263
    %v265 = vsel %vm179, %v245, 0.0
    %266 = vadd.xlane.f32.xlu0 %v265
    %v267 = vpop.xlane.xlu0 %266
    %v268 = vsel %vm179, %v246, 0.0
    %269 = vadd.xlane.f32.xlu0 %v268
    %v270 = vpop.xlane.xlu0 %269
    %v271 = vsel %vm179, %v247, 0.0
    %272 = vadd.xlane.f32.xlu0 %v271
    %v273 = vpop.xlane.xlu0 %272
    %v274 = vsel %vm179, %v248, 0.0
    %275 = vadd.xlane.f32.xlu0 %v274
    %v276 = vpop.xlane.xlu0 %275
    %v277 = vsel %vm179, %v249, 0.0
    %278 = vadd.xlane.f32.xlu0 %v277
    %v279 = vpop.xlane.xlu0 %278
    %v280 = vsel %vm179, %v250, 0.0
    %281 = vadd.xlane.f32.xlu0 %v280
    %v282 = vpop.xlane.xlu0 %281
    %v283 = vsel %vm179, %v251, 0.0
    %284 = vadd.xlane.f32.xlu0 %v283
    %v285 = vpop.xlane.xlu0 %284
    %v286 = vsel %vm179, %v252, 0.0
    %287 = vadd.xlane.f32.xlu0 %v286
    %v288 = vpop.xlane.xlu0 %287
    %v289 = vmul.f32 %v255, %v216
    %v290 = vmul.f32 %v258, %v216
    %v291 = vmul.f32 %v261, %v216
    %v292 = vmul.f32 %v264, %v216
    %v293 = vmul.f32 %v267, %v216
    %v294 = vmul.f32 %v270, %v216
    %v295 = vmul.f32 %v273, %v216
    %v296 = vmul.f32 %v276, %v216
    %v297 = vmul.f32 %v279, %v216
    %v298 = vmul.f32 %v282, %v216
    %v299 = vmul.f32 %v285, %v216
    %v300 = vmul.f32 %v288, %v216
    %v301 = vadd.f32 %v289, 1e-05
    %v302 = vadd.f32 %v290, 1e-05
    %v303 = vadd.f32 %v291, 1e-05
    %v304 = vadd.f32 %v292, 1e-05
    %v305 = vadd.f32 %v293, 1e-05
    %v306 = vadd.f32 %v294, 1e-05
    %v307 = vadd.f32 %v295, 1e-05
    %v308 = vadd.f32 %v296, 1e-05
    %v309 = vadd.f32 %v297, 1e-05
    %v310 = vadd.f32 %v298, 1e-05
    %v311 = vadd.f32 %v299, 1e-05
    %v312 = vadd.f32 %v300, 1e-05
    %v313 = vrsqrt.pop %v301
    %v314 = vrsqrt.pop %v302
    %v315 = vrsqrt.pop %v303
    %v316 = vrsqrt.pop %v304
    %v317 = vrsqrt.pop %v305
    %v318 = vrsqrt.pop %v306
    %v319 = vrsqrt.pop %v307
    %v320 = vrsqrt.pop %v308
    %v321 = vrsqrt.pop %v309
    %v322 = vrsqrt.pop %v310
    %v323 = vrsqrt.pop %v311
    %v324 = vrsqrt.pop %v312
    %v325 = vmul.f32 %v229, %v313
    %v326 = vmul.f32 %v230, %v314
    %v327 = vmul.f32 %v231, %v315
    %v328 = vmul.f32 %v232, %v316
    %v329 = vmul.f32 %v233, %v317
    %v330 = vmul.f32 %v234, %v318
    %v331 = vmul.f32 %v235, %v319
    %v332 = vmul.f32 %v236, %v320
    %v333 = vmul.f32 %v237, %v321
    %v334 = vmul.f32 %v238, %v322
    %v335 = vmul.f32 %v239, %v323
    %v336 = vmul.f32 %v240, %v324
    %v337 = vpack.c.bf16 %v326, %v325
    %v338 = vpack.c.bf16 %v328, %v327
    %v339 = vpack.c.bf16 %v330, %v329
    %v340 = vpack.c.bf16 %v332, %v331
    %v341 = vpack.c.bf16 %v334, %v333
    %v342 = vpack.c.bf16 %v336, %v335
    %v343 = vld [vmem:[%s1 + $0x28] sm:$0xf]
    %v344 = vld [vmem:[%s1 + $0x2c] sm:$0xf]
    %v345 = vld [vmem:[%s1 + $0x30] sm:$0xf]
    %v346 = vld [vmem:[%s1 + $0x34] sm:$0xf]
    %v347 = vld [vmem:[%s2] sm:$0x1]
    %v348 = vlaneseq
    %v349 = vshrl.u32 %v348, 7
    %v350 = vsub.s32 0, %v349
    %v351 = vrot.slane %v347, %v350
    %v356 = vunpack.c.l.b16 %v343
    %v357 = vunpack.c.l.b16 %v344
    %v358 = vunpack.c.l.b16 %v345
    %v359 = vunpack.c.l.b16 %v346
    %v360 = vpack.c.b16 %v357, %v356
    %v361 = vpack.c.b16 %v359, %v358
    %v365 = vsel %vm179, %v337, 0
    %v368 = vsel %vm179, %v338, 0
    %v371 = vsel %vm179, %v339, 0
    %v374 = vsel %vm179, %v340, 0
    %v377 = vsel %vm179, %v341, 0
    %v380 = vsel %vm179, %v342, 0
    %382 = vmatprep.subr.bf16.mxu0 0
    %383 = vmatpush1.bf16.msra.mxu0 %v360
    %384 = vmatprep.subr.bf16.mxu0 0
    %385 = vmatpush1.bf16.msra.mxu0 %v361
    %386 = vmatprep.subr.bf16.mxu0 0
    %387 = vmatpush1.bf16.msra.mxu0 0
    %388 = vmatprep.subr.bf16.mxu0 0
    %389 = vmatpush1.bf16.msra.mxu0 0
    %390 = vmatprep.subr.bf16.mxu0 0
    %391 = vmatpush1.bf16.msra.mxu0 0
    %392 = vmatprep.subr.bf16.mxu0 0
    %393 = vmatpush1.bf16.msra.mxu0 0
    %394 = vmatprep.subr.bf16.mxu0 0
    %395 = vmatpush1.bf16.msra.mxu0 0
    %396 = vmatprep.subr.bf16.mxu0 0
    %397 = vmatpush1.bf16.msra.mxu0 0
    %398 = vmatprep.subr.bf16.mxu0 0
    %399 = vmatpush1.bf16.msra.mxu0 0
    %400 = vmatprep.subr.bf16.mxu0 0
    %401 = vmatpush1.bf16.msra.mxu0 0
    %402 = vmatprep.subr.bf16.mxu0 0
    %403 = vmatpush1.bf16.msra.mxu0 0
    %404 = vmatprep.subr.bf16.mxu0 0
    %405 = vmatpush1.bf16.msra.mxu0 0
    %406 = vmatprep.subr.bf16.mxu0 0
    %407 = vmatpush1.bf16.msra.mxu0 0
    %408 = vmatprep.subr.bf16.mxu0 0
    %409 = vmatpush1.bf16.msra.mxu0 0
    %410 = vmatprep.subr.bf16.mxu0 0
    %411 = vmatpush1.bf16.msra.mxu0 0
    %412 = vmatprep.subr.bf16.mxu0 0
    %413 = vmatpush1.bf16.msra.mxu0 0
    %414 = vmatprep.mubr.bf16.mxu0 0
    %415 = vmatmul.mubr.bf16.gmra.mrb[0].mxu0 %v365
    %v416 = vpop.f32.mrb[0].mxu0
    %v417 = vadd.f32 %v351, %v416
    %v418 = vpop.f32.mrb[0].mxu0
    %v419 = vpop.f32.mrb[0].mxu0
    %v420 = vadd.f32 %v351, %v419
    %v421 = vpop.f32.mrb[0].mxu0
    %422 = vmatprep.mubr.bf16.mxu0 0
    %423 = vmatmul.mubr.bf16.gmra.mrb[0].mxu0 %v368
    %v424 = vpop.f32.mrb[0].mxu0
    %v425 = vadd.f32 %v351, %v424
    %v426 = vpop.f32.mrb[0].mxu0
    %v427 = vpop.f32.mrb[0].mxu0
    %v428 = vadd.f32 %v351, %v427
    %v429 = vpop.f32.mrb[0].mxu0
    %430 = vmatprep.mubr.bf16.mxu0 0
    %431 = vmatmul.mubr.bf16.gmra.mrb[0].mxu0 %v371
    %v432 = vpop.f32.mrb[0].mxu0
    %v433 = vadd.f32 %v351, %v432
    %v434 = vpop.f32.mrb[0].mxu0
    %v435 = vpop.f32.mrb[0].mxu0
    %v436 = vadd.f32 %v351, %v435
    %v437 = vpop.f32.mrb[0].mxu0
    %438 = vmatprep.mubr.bf16.mxu0 0
    %439 = vmatmul.mubr.bf16.gmra.mrb[0].mxu0 %v374
    %v440 = vpop.f32.mrb[0].mxu0
    %v441 = vadd.f32 %v351, %v440
    %v442 = vpop.f32.mrb[0].mxu0
    %v443 = vpop.f32.mrb[0].mxu0
    %v444 = vadd.f32 %v351, %v443
    %v445 = vpop.f32.mrb[0].mxu0
    %446 = vmatprep.mubr.bf16.mxu0 0
    %447 = vmatmul.mubr.bf16.gmra.mrb[0].mxu0 %v377
    %v448 = vpop.f32.mrb[0].mxu0
    %v449 = vadd.f32 %v351, %v448
    %v450 = vpop.f32.mrb[0].mxu0
    %v451 = vpop.f32.mrb[0].mxu0
    %v452 = vadd.f32 %v351, %v451
    %v453 = vpop.f32.mrb[0].mxu0
    %454 = vmatprep.mubr.bf16.mxu0 0
    %455 = vmatmul.mubr.bf16.gmra.mrb[0].mxu0 %v380
    %v456 = vpop.f32.mrb[0].mxu0
    %v457 = vadd.f32 %v351, %v456
    %v458 = vpop.f32.mrb[0].mxu0
    %v459 = vpop.f32.mrb[0].mxu0
    %v460 = vadd.f32 %v351, %v459
    %v461 = vpop.f32.mrb[0].mxu0
    %462 = vdwg.mxu0
    %475 = vrot.lane.b32.xlu0 %v417, 112
    %v476 = vpop.permute.xlu0 %475
    %477 = vrot.lane.b32.xlu0 %v420, 112
    %v478 = vpop.permute.xlu0 %477
    %479 = vrot.lane.b32.xlu0 %v425, 112
    %v480 = vpop.permute.xlu0 %479
    %481 = vrot.lane.b32.xlu0 %v428, 112
    %v482 = vpop.permute.xlu0 %481
    %483 = vrot.lane.b32.xlu0 %v433, 112
    %v484 = vpop.permute.xlu0 %483
    %485 = vrot.lane.b32.xlu0 %v436, 112
    %v486 = vpop.permute.xlu0 %485
    %487 = vrot.lane.b32.xlu0 %v441, 112
    %v488 = vpop.permute.xlu0 %487
    %489 = vrot.lane.b32.xlu0 %v444, 112
    %v490 = vpop.permute.xlu0 %489
    %491 = vrot.lane.b32.xlu0 %v449, 112
    %v492 = vpop.permute.xlu0 %491
    %493 = vrot.lane.b32.xlu0 %v452, 112
    %v494 = vpop.permute.xlu0 %493
    %495 = vrot.lane.b32.xlu0 %v457, 112
    %v496 = vpop.permute.xlu0 %495
    %497 = vrot.lane.b32.xlu0 %v460, 112
    %v498 = vpop.permute.xlu0 %497
    %v511 = vpack.c.bf16 %v420, %v417
    %v512 = vpack.c.bf16 %v425, %v425
    %v513 = vpack.c.bf16 %v433, %v428
    %v514 = vpack.c.bf16 %v436, %v436
    %v515 = vpack.c.bf16 %v444, %v441
    %v516 = vpack.c.bf16 %v449, %v449
    %v517 = vpack.c.bf16 %v457, %v452
    %v518 = vpack.c.bf16 %v460, %v460
    %v519 = vpack.c.bf16 %v478, %v476
    %v520 = vpack.c.bf16 %v480, %v480
    %v521 = vpack.c.bf16 %v484, %v482
    %v522 = vpack.c.bf16 %v486, %v486
    %v523 = vpack.c.bf16 %v490, %v488
    %v524 = vpack.c.bf16 %v492, %v492
    %v525 = vpack.c.bf16 %v496, %v494
    %v526 = vpack.c.bf16 %v498, %v498
    %529 = vrot.lane.b32.xlu0 %v511, 96
    %v530 = vpop.permute.xlu0 %529
    %531 = vrot.lane.b32.xlu0 %v512, 96
    %v532 = vpop.permute.xlu0 %531
    %vm533 = vcmask 130048
    %v535 = vsel %vm533, %v511, 0
    %v538 = vsel %vm533, %v512, 0
    %v541 = vsel %vm533, %v530, 0
    %v544 = vsel %vm533, %v532, 0
    %546 = vmatprep.subr.bf16.mxu0 0
    %547 = vmatpush1.bf16.xpose.msra.mxu0 %v541
    %548 = vmatprep.subr.bf16.mxu0 0
    %549 = vmatpush1.bf16.xpose.msra.mxu0 %v544
    %550 = vmatprep.subr.bf16.mxu0 0
    %551 = vmatpush1.bf16.xpose.msra.mxu0 0
    %552 = vmatprep.subr.bf16.mxu0 0
    %553 = vmatpush1.bf16.xpose.msra.mxu0 0
    %554 = vmatprep.subr.bf16.mxu0 0
    %555 = vmatpush1.bf16.xpose.msra.mxu0 0
    %556 = vmatprep.subr.bf16.mxu0 0
    %557 = vmatpush1.bf16.xpose.msra.mxu0 0
    %558 = vmatprep.subr.bf16.mxu0 0
    %559 = vmatpush1.bf16.xpose.msra.mxu0 0
    %560 = vmatprep.subr.bf16.mxu0 0
    %561 = vmatpush1.bf16.xpose.msra.mxu0 0
    %562 = vmatprep.subr.bf16.mxu0 0
    %563 = vmatpush1.bf16.xpose.msra.mxu0 0
    %564 = vmatprep.subr.bf16.mxu0 0
    %565 = vmatpush1.bf16.xpose.msra.mxu0 0
    %566 = vmatprep.subr.bf16.mxu0 0
    %567 = vmatpush1.bf16.xpose.msra.mxu0 0
    %568 = vmatprep.subr.bf16.mxu0 0
    %569 = vmatpush1.bf16.xpose.msra.mxu0 0
    %570 = vmatprep.subr.bf16.mxu0 0
    %571 = vmatpush1.bf16.xpose.msra.mxu0 0
    %572 = vmatprep.subr.bf16.mxu0 0
    %573 = vmatpush1.bf16.xpose.msra.mxu0 0
    %574 = vmatprep.subr.bf16.mxu0 0
    %575 = vmatpush1.bf16.xpose.msra.mxu0 0
    %576 = vmatprep.subr.bf16.mxu0 0
    %577 = vmatpush1.bf16.xpose.msra.mxu0 0
    %578 = vmatprep.mubr.bf16.mxu0 0
    %579 = vmatmul.mubr.bf16.gmra.mrb[0].mxu0 %v535
    %v580 = vpop.f32.mrb[0].mxu0
    %v581 = vadd.f32 0.0, %v580
    %v582 = vpop.f32.mrb[0].mxu0
    %v583 = vpop.f32.mrb[0].mxu0
    %v584 = vadd.f32 0.0, %v583
    %v585 = vpop.f32.mrb[0].mxu0
    %586 = vmatprep.mubr.bf16.mxu0 0
    %587 = vmatmul.mubr.bf16.gmra.mrb[0].mxu0 %v538
    %v588 = vpop.f32.mrb[0].mxu0
    %v589 = vadd.f32 0.0, %v588
    %v590 = vpop.f32.mrb[0].mxu0
    %v591 = vpop.f32.mrb[0].mxu0
    %v592 = vpop.f32.mrb[0].mxu0
    %593 = vdwg.mxu0
    %596 = vrot.lane.b32.xlu0 %v513, 96
    %v597 = vpop.permute.xlu0 %596
    %598 = vrot.lane.b32.xlu0 %v514, 96
    %v599 = vpop.permute.xlu0 %598
    %v601 = vsel %vm533, %v513, 0
    %v604 = vsel %vm533, %v514, 0
    %v607 = vsel %vm533, %v597, 0
    %v610 = vsel %vm533, %v599, 0
    %612 = vmatprep.subr.bf16.mxu0 0
    %613 = vmatpush1.bf16.xpose.msra.mxu0 %v607
    %614 = vmatprep.subr.bf16.mxu0 0
    %615 = vmatpush1.bf16.xpose.msra.mxu0 %v610
    %616 = vmatprep.subr.bf16.mxu0 0
    %617 = vmatpush1.bf16.xpose.msra.mxu0 0
    %618 = vmatprep.subr.bf16.mxu0 0
    %619 = vmatpush1.bf16.xpose.msra.mxu0 0
    %620 = vmatprep.subr.bf16.mxu0 0
    %621 = vmatpush1.bf16.xpose.msra.mxu0 0
    %622 = vmatprep.subr.bf16.mxu0 0
    %623 = vmatpush1.bf16.xpose.msra.mxu0 0
    %624 = vmatprep.subr.bf16.mxu0 0
    %625 = vmatpush1.bf16.xpose.msra.mxu0 0
    %626 = vmatprep.subr.bf16.mxu0 0
    %627 = vmatpush1.bf16.xpose.msra.mxu0 0
    %628 = vmatprep.subr.bf16.mxu0 0
    %629 = vmatpush1.bf16.xpose.msra.mxu0 0
    %630 = vmatprep.subr.bf16.mxu0 0
    %631 = vmatpush1.bf16.xpose.msra.mxu0 0
    %632 = vmatprep.subr.bf16.mxu0 0
    %633 = vmatpush1.bf16.xpose.msra.mxu0 0
    %634 = vmatprep.subr.bf16.mxu0 0
    %635 = vmatpush1.bf16.xpose.msra.mxu0 0
    %636 = vmatprep.subr.bf16.mxu0 0
    %637 = vmatpush1.bf16.xpose.msra.mxu0 0
    %638 = vmatprep.subr.bf16.mxu0 0
    %639 = vmatpush1.bf16.xpose.msra.mxu0 0
    %640 = vmatprep.subr.bf16.mxu0 0
    %641 = vmatpush1.bf16.xpose.msra.mxu0 0
    %642 = vmatprep.subr.bf16.mxu0 0
    %643 = vmatpush1.bf16.xpose.msra.mxu0 0
    %644 = vmatprep.mubr.bf16.mxu0 0
    %645 = vmatmul.mubr.bf16.gmra.mrb[0].mxu0 %v601
    %v646 = vpop.f32.mrb[0].mxu0
    %v647 = vadd.f32 0.0, %v646
    %v648 = vpop.f32.mrb[0].mxu0
    %v649 = vpop.f32.mrb[0].mxu0
    %v650 = vadd.f32 0.0, %v649
    %v651 = vpop.f32.mrb[0].mxu0
    %652 = vmatprep.mubr.bf16.mxu0 0
    %653 = vmatmul.mubr.bf16.gmra.mrb[0].mxu0 %v604
    %v654 = vpop.f32.mrb[0].mxu0
    %v655 = vadd.f32 0.0, %v654
    %v656 = vpop.f32.mrb[0].mxu0
    %v657 = vpop.f32.mrb[0].mxu0
    %v658 = vpop.f32.mrb[0].mxu0
    %659 = vdwg.mxu0
    %662 = vrot.lane.b32.xlu0 %v515, 96
    %v663 = vpop.permute.xlu0 %662
    %664 = vrot.lane.b32.xlu0 %v516, 96
    %v665 = vpop.permute.xlu0 %664
    %v667 = vsel %vm533, %v515, 0
    %v670 = vsel %vm533, %v516, 0
    %v673 = vsel %vm533, %v663, 0
    %v676 = vsel %vm533, %v665, 0
    %678 = vmatprep.subr.bf16.mxu0 0
    %679 = vmatpush1.bf16.xpose.msra.mxu0 %v673
    %680 = vmatprep.subr.bf16.mxu0 0
    %681 = vmatpush1.bf16.xpose.msra.mxu0 %v676
    %682 = vmatprep.subr.bf16.mxu0 0
    %683 = vmatpush1.bf16.xpose.msra.mxu0 0
    %684 = vmatprep.subr.bf16.mxu0 0
    %685 = vmatpush1.bf16.xpose.msra.mxu0 0
    %686 = vmatprep.subr.bf16.mxu0 0
    %687 = vmatpush1.bf16.xpose.msra.mxu0 0
    %688 = vmatprep.subr.bf16.mxu0 0
    %689 = vmatpush1.bf16.xpose.msra.mxu0 0
    %690 = vmatprep.subr.bf16.mxu0 0
    %691 = vmatpush1.bf16.xpose.msra.mxu0 0
    %692 = vmatprep.subr.bf16.mxu0 0
    %693 = vmatpush1.bf16.xpose.msra.mxu0 0
    %694 = vmatprep.subr.bf16.mxu0 0
    %695 = vmatpush1.bf16.xpose.msra.mxu0 0
    %696 = vmatprep.subr.bf16.mxu0 0
    %697 = vmatpush1.bf16.xpose.msra.mxu0 0
    %698 = vmatprep.subr.bf16.mxu0 0
    %699 = vmatpush1.bf16.xpose.msra.mxu0 0
    %700 = vmatprep.subr.bf16.mxu0 0
    %701 = vmatpush1.bf16.xpose.msra.mxu0 0
    %702 = vmatprep.subr.bf16.mxu0 0
    %703 = vmatpush1.bf16.xpose.msra.mxu0 0
    %704 = vmatprep.subr.bf16.mxu0 0
    %705 = vmatpush1.bf16.xpose.msra.mxu0 0
    %706 = vmatprep.subr.bf16.mxu0 0
    %707 = vmatpush1.bf16.xpose.msra.mxu0 0
    %708 = vmatprep.subr.bf16.mxu0 0
    %709 = vmatpush1.bf16.xpose.msra.mxu0 0
    %710 = vmatprep.mubr.bf16.mxu0 0
    %711 = vmatmul.mubr.bf16.gmra.mrb[0].mxu0 %v667
    %v712 = vpop.f32.mrb[0].mxu0
    %v713 = vadd.f32 0.0, %v712
    %v714 = vpop.f32.mrb[0].mxu0
    %v715 = vpop.f32.mrb[0].mxu0
    %v716 = vadd.f32 0.0, %v715
    %v717 = vpop.f32.mrb[0].mxu0
    %718 = vmatprep.mubr.bf16.mxu0 0
    %719 = vmatmul.mubr.bf16.gmra.mrb[0].mxu0 %v670
    %v720 = vpop.f32.mrb[0].mxu0
    %v721 = vadd.f32 0.0, %v720
    %v722 = vpop.f32.mrb[0].mxu0
    %v723 = vpop.f32.mrb[0].mxu0
    %v724 = vpop.f32.mrb[0].mxu0
    %725 = vdwg.mxu0
    %728 = vrot.lane.b32.xlu0 %v517, 96
    %v729 = vpop.permute.xlu0 %728
    %730 = vrot.lane.b32.xlu0 %v518, 96
    %v731 = vpop.permute.xlu0 %730
    %v733 = vsel %vm533, %v517, 0
    %v736 = vsel %vm533, %v518, 0
    %v739 = vsel %vm533, %v729, 0
    %v742 = vsel %vm533, %v731, 0
    %744 = vmatprep.subr.bf16.mxu0 0
    %745 = vmatpush1.bf16.xpose.msra.mxu0 %v739
    %746 = vmatprep.subr.bf16.mxu0 0
    %747 = vmatpush1.bf16.xpose.msra.mxu0 %v742
    %748 = vmatprep.subr.bf16.mxu0 0
    %749 = vmatpush1.bf16.xpose.msra.mxu0 0
    %750 = vmatprep.subr.bf16.mxu0 0
    %751 = vmatpush1.bf16.xpose.msra.mxu0 0
    %752 = vmatprep.subr.bf16.mxu0 0
    %753 = vmatpush1.bf16.xpose.msra.mxu0 0
    %754 = vmatprep.subr.bf16.mxu0 0
    %755 = vmatpush1.bf16.xpose.msra.mxu0 0
    %756 = vmatprep.subr.bf16.mxu0 0
    %757 = vmatpush1.bf16.xpose.msra.mxu0 0
    %758 = vmatprep.subr.bf16.mxu0 0
    %759 = vmatpush1.bf16.xpose.msra.mxu0 0
    %760 = vmatprep.subr.bf16.mxu0 0
    %761 = vmatpush1.bf16.xpose.msra.mxu0 0
    %762 = vmatprep.subr.bf16.mxu0 0
    %763 = vmatpush1.bf16.xpose.msra.mxu0 0
    %764 = vmatprep.subr.bf16.mxu0 0
    %765 = vmatpush1.bf16.xpose.msra.mxu0 0
    %766 = vmatprep.subr.bf16.mxu0 0
    %767 = vmatpush1.bf16.xpose.msra.mxu0 0
    %768 = vmatprep.subr.bf16.mxu0 0
    %769 = vmatpush1.bf16.xpose.msra.mxu0 0
    %770 = vmatprep.subr.bf16.mxu0 0
    %771 = vmatpush1.bf16.xpose.msra.mxu0 0
    %772 = vmatprep.subr.bf16.mxu0 0
    %773 = vmatpush1.bf16.xpose.msra.mxu0 0
    %774 = vmatprep.subr.bf16.mxu0 0
    %775 = vmatpush1.bf16.xpose.msra.mxu0 0
    %776 = vmatprep.mubr.bf16.mxu0 0
    %777 = vmatmul.mubr.bf16.gmra.mrb[0].mxu0 %v733
    %v778 = vpop.f32.mrb[0].mxu0
    %v779 = vadd.f32 0.0, %v778
    %v780 = vpop.f32.mrb[0].mxu0
    %v781 = vpop.f32.mrb[0].mxu0
    %v782 = vadd.f32 0.0, %v781
    %v783 = vpop.f32.mrb[0].mxu0
    %784 = vmatprep.mubr.bf16.mxu0 0
    %785 = vmatmul.mubr.bf16.gmra.mrb[0].mxu0 %v736
    %v786 = vpop.f32.mrb[0].mxu0
    %v787 = vadd.f32 0.0, %v786
    %v788 = vpop.f32.mrb[0].mxu0
    %v789 = vpop.f32.mrb[0].mxu0
    %v790 = vpop.f32.mrb[0].mxu0
    %791 = vdwg.mxu0
    %794 = vrot.lane.b32.xlu0 %v519, 96
    %v795 = vpop.permute.xlu0 %794
    %796 = vrot.lane.b32.xlu0 %v520, 96
    %v797 = vpop.permute.xlu0 %796
    %v799 = vsel %vm533, %v519, 0
    %v802 = vsel %vm533, %v520, 0
    %v805 = vsel %vm533, %v795, 0
    %v808 = vsel %vm533, %v797, 0
    %810 = vmatprep.subr.bf16.mxu0 0
    %811 = vmatpush1.bf16.xpose.msra.mxu0 %v805
    %812 = vmatprep.subr.bf16.mxu0 0
    %813 = vmatpush1.bf16.xpose.msra.mxu0 %v808
    %814 = vmatprep.subr.bf16.mxu0 0
    %815 = vmatpush1.bf16.xpose.msra.mxu0 0
    %816 = vmatprep.subr.bf16.mxu0 0
    %817 = vmatpush1.bf16.xpose.msra.mxu0 0
    %818 = vmatprep.subr.bf16.mxu0 0
    %819 = vmatpush1.bf16.xpose.msra.mxu0 0
    %820 = vmatprep.subr.bf16.mxu0 0
    %821 = vmatpush1.bf16.xpose.msra.mxu0 0
    %822 = vmatprep.subr.bf16.mxu0 0
    %823 = vmatpush1.bf16.xpose.msra.mxu0 0
    %824 = vmatprep.subr.bf16.mxu0 0
    %825 = vmatpush1.bf16.xpose.msra.mxu0 0
    %826 = vmatprep.subr.bf16.mxu0 0
    %827 = vmatpush1.bf16.xpose.msra.mxu0 0
    %828 = vmatprep.subr.bf16.mxu0 0
    %829 = vmatpush1.bf16.xpose.msra.mxu0 0
    %830 = vmatprep.subr.bf16.mxu0 0
    %831 = vmatpush1.bf16.xpose.msra.mxu0 0
    %832 = vmatprep.subr.bf16.mxu0 0
    %833 = vmatpush1.bf16.xpose.msra.mxu0 0
    %834 = vmatprep.subr.bf16.mxu0 0
    %835 = vmatpush1.bf16.xpose.msra.mxu0 0
    %836 = vmatprep.subr.bf16.mxu0 0
    %837 = vmatpush1.bf16.xpose.msra.mxu0 0
    %838 = vmatprep.subr.bf16.mxu0 0
    %839 = vmatpush1.bf16.xpose.msra.mxu0 0
    %840 = vmatprep.subr.bf16.mxu0 0
    %841 = vmatpush1.bf16.xpose.msra.mxu0 0
    %842 = vmatprep.mubr.bf16.mxu0 0
    %843 = vmatmul.mubr.bf16.gmra.mrb[0].mxu0 %v799
    %v844 = vpop.f32.mrb[0].mxu0
    %v845 = vadd.f32 0.0, %v844
    %v846 = vpop.f32.mrb[0].mxu0
    %v847 = vpop.f32.mrb[0].mxu0
    %v848 = vadd.f32 0.0, %v847
    %v849 = vpop.f32.mrb[0].mxu0
    %850 = vmatprep.mubr.bf16.mxu0 0
    %851 = vmatmul.mubr.bf16.gmra.mrb[0].mxu0 %v802
    %v852 = vpop.f32.mrb[0].mxu0
    %v853 = vadd.f32 0.0, %v852
    %v854 = vpop.f32.mrb[0].mxu0
    %v855 = vpop.f32.mrb[0].mxu0
    %v856 = vpop.f32.mrb[0].mxu0
    %857 = vdwg.mxu0
    %860 = vrot.lane.b32.xlu0 %v521, 96
    %v861 = vpop.permute.xlu0 %860
    %862 = vrot.lane.b32.xlu0 %v522, 96
    %v863 = vpop.permute.xlu0 %862
    %v865 = vsel %vm533, %v521, 0
    %v868 = vsel %vm533, %v522, 0
    %v871 = vsel %vm533, %v861, 0
    %v874 = vsel %vm533, %v863, 0
    %876 = vmatprep.subr.bf16.mxu0 0
    %877 = vmatpush1.bf16.xpose.msra.mxu0 %v871
    %878 = vmatprep.subr.bf16.mxu0 0
    %879 = vmatpush1.bf16.xpose.msra.mxu0 %v874
    %880 = vmatprep.subr.bf16.mxu0 0
    %881 = vmatpush1.bf16.xpose.msra.mxu0 0
    %882 = vmatprep.subr.bf16.mxu0 0
    %883 = vmatpush1.bf16.xpose.msra.mxu0 0
    %884 = vmatprep.subr.bf16.mxu0 0
    %885 = vmatpush1.bf16.xpose.msra.mxu0 0
    %886 = vmatprep.subr.bf16.mxu0 0
    %887 = vmatpush1.bf16.xpose.msra.mxu0 0
    %888 = vmatprep.subr.bf16.mxu0 0
    %889 = vmatpush1.bf16.xpose.msra.mxu0 0
    %890 = vmatprep.subr.bf16.mxu0 0
    %891 = vmatpush1.bf16.xpose.msra.mxu0 0
    %892 = vmatprep.subr.bf16.mxu0 0
    %893 = vmatpush1.bf16.xpose.msra.mxu0 0
    %894 = vmatprep.subr.bf16.mxu0 0
    %895 = vmatpush1.bf16.xpose.msra.mxu0 0
    %896 = vmatprep.subr.bf16.mxu0 0
    %897 = vmatpush1.bf16.xpose.msra.mxu0 0
    %898 = vmatprep.subr.bf16.mxu0 0
    %899 = vmatpush1.bf16.xpose.msra.mxu0 0
    %900 = vmatprep.subr.bf16.mxu0 0
    %901 = vmatpush1.bf16.xpose.msra.mxu0 0
    %902 = vmatprep.subr.bf16.mxu0 0
    %903 = vmatpush1.bf16.xpose.msra.mxu0 0
    %904 = vmatprep.subr.bf16.mxu0 0
    %905 = vmatpush1.bf16.xpose.msra.mxu0 0
    %906 = vmatprep.subr.bf16.mxu0 0
    %907 = vmatpush1.bf16.xpose.msra.mxu0 0
    %908 = vmatprep.mubr.bf16.mxu0 0
    %909 = vmatmul.mubr.bf16.gmra.mrb[0].mxu0 %v865
    %v910 = vpop.f32.mrb[0].mxu0
    %v911 = vadd.f32 0.0, %v910
    %v912 = vpop.f32.mrb[0].mxu0
    %v913 = vpop.f32.mrb[0].mxu0
    %v914 = vadd.f32 0.0, %v913
    %v915 = vpop.f32.mrb[0].mxu0
    %916 = vmatprep.mubr.bf16.mxu0 0
    %917 = vmatmul.mubr.bf16.gmra.mrb[0].mxu0 %v868
    %v918 = vpop.f32.mrb[0].mxu0
    %v919 = vadd.f32 0.0, %v918
    %v920 = vpop.f32.mrb[0].mxu0
    %v921 = vpop.f32.mrb[0].mxu0
    %v922 = vpop.f32.mrb[0].mxu0
    %923 = vdwg.mxu0
    %926 = vrot.lane.b32.xlu0 %v523, 96
    %v927 = vpop.permute.xlu0 %926
    %928 = vrot.lane.b32.xlu0 %v524, 96
    %v929 = vpop.permute.xlu0 %928
    %v931 = vsel %vm533, %v523, 0
    %v934 = vsel %vm533, %v524, 0
    %v937 = vsel %vm533, %v927, 0
    %v940 = vsel %vm533, %v929, 0
    %942 = vmatprep.subr.bf16.mxu0 0
    %943 = vmatpush1.bf16.xpose.msra.mxu0 %v937
    %944 = vmatprep.subr.bf16.mxu0 0
    %945 = vmatpush1.bf16.xpose.msra.mxu0 %v940
    %946 = vmatprep.subr.bf16.mxu0 0
    %947 = vmatpush1.bf16.xpose.msra.mxu0 0
    %948 = vmatprep.subr.bf16.mxu0 0
    %949 = vmatpush1.bf16.xpose.msra.mxu0 0
    %950 = vmatprep.subr.bf16.mxu0 0
    %951 = vmatpush1.bf16.xpose.msra.mxu0 0
    %952 = vmatprep.subr.bf16.mxu0 0
    %953 = vmatpush1.bf16.xpose.msra.mxu0 0
    %954 = vmatprep.subr.bf16.mxu0 0
    %955 = vmatpush1.bf16.xpose.msra.mxu0 0
    %956 = vmatprep.subr.bf16.mxu0 0
    %957 = vmatpush1.bf16.xpose.msra.mxu0 0
    %958 = vmatprep.subr.bf16.mxu0 0
    %959 = vmatpush1.bf16.xpose.msra.mxu0 0
    %960 = vmatprep.subr.bf16.mxu0 0
    %961 = vmatpush1.bf16.xpose.msra.mxu0 0
    %962 = vmatprep.subr.bf16.mxu0 0
    %963 = vmatpush1.bf16.xpose.msra.mxu0 0
    %964 = vmatprep.subr.bf16.mxu0 0
    %965 = vmatpush1.bf16.xpose.msra.mxu0 0
    %966 = vmatprep.subr.bf16.mxu0 0
    %967 = vmatpush1.bf16.xpose.msra.mxu0 0
    %968 = vmatprep.subr.bf16.mxu0 0
    %969 = vmatpush1.bf16.xpose.msra.mxu0 0
    %970 = vmatprep.subr.bf16.mxu0 0
    %971 = vmatpush1.bf16.xpose.msra.mxu0 0
    %972 = vmatprep.subr.bf16.mxu0 0
    %973 = vmatpush1.bf16.xpose.msra.mxu0 0
    %974 = vmatprep.mubr.bf16.mxu0 0
    %975 = vmatmul.mubr.bf16.gmra.mrb[0].mxu0 %v931
    %v976 = vpop.f32.mrb[0].mxu0
    %v977 = vadd.f32 0.0, %v976
    %v978 = vpop.f32.mrb[0].mxu0
    %v979 = vpop.f32.mrb[0].mxu0
    %v980 = vadd.f32 0.0, %v979
    %v981 = vpop.f32.mrb[0].mxu0
    %982 = vmatprep.mubr.bf16.mxu0 0
    %983 = vmatmul.mubr.bf16.gmra.mrb[0].mxu0 %v934
    %v984 = vpop.f32.mrb[0].mxu0
    %v985 = vadd.f32 0.0, %v984
    %v986 = vpop.f32.mrb[0].mxu0
    %v987 = vpop.f32.mrb[0].mxu0
    %v988 = vpop.f32.mrb[0].mxu0
    %989 = vdwg.mxu0
    %992 = vrot.lane.b32.xlu0 %v525, 96
    %v993 = vpop.permute.xlu0 %992
    %994 = vrot.lane.b32.xlu0 %v526, 96
    %v995 = vpop.permute.xlu0 %994
    %v997 = vsel %vm533, %v525, 0
    %v1000 = vsel %vm533, %v526, 0
    %v1003 = vsel %vm533, %v993, 0
    %v1006 = vsel %vm533, %v995, 0
    %1008 = vmatprep.subr.bf16.mxu0 0
    %1009 = vmatpush1.bf16.xpose.msra.mxu0 %v1003
    %1010 = vmatprep.subr.bf16.mxu0 0
    %1011 = vmatpush1.bf16.xpose.msra.mxu0 %v1006
    %1012 = vmatprep.subr.bf16.mxu0 0
    %1013 = vmatpush1.bf16.xpose.msra.mxu0 0
    %1014 = vmatprep.subr.bf16.mxu0 0
    %1015 = vmatpush1.bf16.xpose.msra.mxu0 0
    %1016 = vmatprep.subr.bf16.mxu0 0
    %1017 = vmatpush1.bf16.xpose.msra.mxu0 0
    %1018 = vmatprep.subr.bf16.mxu0 0
    %1019 = vmatpush1.bf16.xpose.msra.mxu0 0
    %1020 = vmatprep.subr.bf16.mxu0 0
    %1021 = vmatpush1.bf16.xpose.msra.mxu0 0
    %1022 = vmatprep.subr.bf16.mxu0 0
    %1023 = vmatpush1.bf16.xpose.msra.mxu0 0
    %1024 = vmatprep.subr.bf16.mxu0 0
    %1025 = vmatpush1.bf16.xpose.msra.mxu0 0
    %1026 = vmatprep.subr.bf16.mxu0 0
    %1027 = vmatpush1.bf16.xpose.msra.mxu0 0
    %1028 = vmatprep.subr.bf16.mxu0 0
    %1029 = vmatpush1.bf16.xpose.msra.mxu0 0
    %1030 = vmatprep.subr.bf16.mxu0 0
    %1031 = vmatpush1.bf16.xpose.msra.mxu0 0
    %1032 = vmatprep.subr.bf16.mxu0 0
    %1033 = vmatpush1.bf16.xpose.msra.mxu0 0
    %1034 = vmatprep.subr.bf16.mxu0 0
    %1035 = vmatpush1.bf16.xpose.msra.mxu0 0
    %1036 = vmatprep.subr.bf16.mxu0 0
    %1037 = vmatpush1.bf16.xpose.msra.mxu0 0
    %1038 = vmatprep.subr.bf16.mxu0 0
    %1039 = vmatpush1.bf16.xpose.msra.mxu0 0
    %1040 = vmatprep.mubr.bf16.mxu0 0
    %1041 = vmatmul.mubr.bf16.gmra.mrb[0].mxu0 %v997
    %v1042 = vpop.f32.mrb[0].mxu0
    %v1043 = vadd.f32 0.0, %v1042
    %v1044 = vpop.f32.mrb[0].mxu0
    %v1045 = vpop.f32.mrb[0].mxu0
    %v1046 = vadd.f32 0.0, %v1045
    %v1047 = vpop.f32.mrb[0].mxu0
    %1048 = vmatprep.mubr.bf16.mxu0 0
    %1049 = vmatmul.mubr.bf16.gmra.mrb[0].mxu0 %v1000
    %v1050 = vpop.f32.mrb[0].mxu0
    %v1051 = vadd.f32 0.0, %v1050
    %v1052 = vpop.f32.mrb[0].mxu0
    %v1053 = vpop.f32.mrb[0].mxu0
    %v1054 = vpop.f32.mrb[0].mxu0
    %1055 = vdwg.mxu0
    %v1056 = vmul.f32 %v581, 0.25
    %v1057 = vmul.f32 %v584, 0.25
    %v1058 = vmul.f32 %v589, 0.25
    %v1059 = vmul.f32 %v647, 0.25
    %v1060 = vmul.f32 %v650, 0.25
    %v1061 = vmul.f32 %v655, 0.25
    %v1062 = vmul.f32 %v713, 0.25
    %v1063 = vmul.f32 %v716, 0.25
    %v1064 = vmul.f32 %v721, 0.25
    %v1065 = vmul.f32 %v779, 0.25
    %v1066 = vmul.f32 %v782, 0.25
    %v1067 = vmul.f32 %v787, 0.25
    %v1068 = vmul.f32 %v845, 0.25
    %v1069 = vmul.f32 %v848, 0.25
    %v1070 = vmul.f32 %v853, 0.25
    %v1071 = vmul.f32 %v911, 0.25
    %v1072 = vmul.f32 %v914, 0.25
    %v1073 = vmul.f32 %v919, 0.25
    %v1074 = vmul.f32 %v977, 0.25
    %v1075 = vmul.f32 %v980, 0.25
    %v1076 = vmul.f32 %v985, 0.25
    %v1077 = vmul.f32 %v1043, 0.25
    %v1078 = vmul.f32 %v1046, 0.25
    %v1079 = vmul.f32 %v1051, 0.25
    %v1080 = vsel %vm178, 1, 0
    %vm1081 = vcmp.eq.s32.totalorder %v1080, 1
    %v1082 = vsel %vm1081, %v1056, -1e+30
    %v1083 = vsel %vm1081, %v1057, -1e+30
    %v1084 = vsel %vm1081, %v1058, -1e+30
    %v1085 = vsel %vm1081, %v1059, -1e+30
    %v1086 = vsel %vm1081, %v1060, -1e+30
    %v1087 = vsel %vm1081, %v1061, -1e+30
    %v1088 = vsel %vm1081, %v1062, -1e+30
    %v1089 = vsel %vm1081, %v1063, -1e+30
    %v1090 = vsel %vm1081, %v1064, -1e+30
    %v1091 = vsel %vm1081, %v1065, -1e+30
    %v1092 = vsel %vm1081, %v1066, -1e+30
    %v1093 = vsel %vm1081, %v1067, -1e+30
    %v1094 = vsel %vm1081, %v1068, -1e+30
    %v1095 = vsel %vm1081, %v1069, -1e+30
    %v1096 = vsel %vm1081, %v1070, -1e+30
    %v1097 = vsel %vm1081, %v1071, -1e+30
    %v1098 = vsel %vm1081, %v1072, -1e+30
    %v1099 = vsel %vm1081, %v1073, -1e+30
    %v1100 = vsel %vm1081, %v1074, -1e+30
    %v1101 = vsel %vm1081, %v1075, -1e+30
    %v1102 = vsel %vm1081, %v1076, -1e+30
    %v1103 = vsel %vm1081, %v1077, -1e+30
    %v1104 = vsel %vm1081, %v1078, -1e+30
    %v1105 = vsel %vm1081, %v1079, -1e+30
    %vm1106 = vcmask 195584
    %v1107 = vsel %vm1106, %v1082, -inf
    %1108 = vmax.xlane.f32.xlu0 %v1107
    %v1109 = vpop.xlane.xlu0 %1108
    %v1110 = vsel %vm1106, %v1083, -inf
    %1111 = vmax.xlane.f32.xlu0 %v1110
    %v1112 = vpop.xlane.xlu0 %1111
    %v1113 = vsel %vm1106, %v1084, -inf
    %1114 = vmax.xlane.f32.xlu0 %v1113
    %v1115 = vpop.xlane.xlu0 %1114
    %v1116 = vsel %vm1106, %v1085, -inf
    %1117 = vmax.xlane.f32.xlu0 %v1116
    %v1118 = vpop.xlane.xlu0 %1117
    %v1119 = vsel %vm1106, %v1086, -inf
    %1120 = vmax.xlane.f32.xlu0 %v1119
    %v1121 = vpop.xlane.xlu0 %1120
    %v1122 = vsel %vm1106, %v1087, -inf
    %1123 = vmax.xlane.f32.xlu0 %v1122
    %v1124 = vpop.xlane.xlu0 %1123
    %v1125 = vsel %vm1106, %v1088, -inf
    %1126 = vmax.xlane.f32.xlu0 %v1125
    %v1127 = vpop.xlane.xlu0 %1126
    %v1128 = vsel %vm1106, %v1089, -inf
    %1129 = vmax.xlane.f32.xlu0 %v1128
    %v1130 = vpop.xlane.xlu0 %1129
    %v1131 = vsel %vm1106, %v1090, -inf
    %1132 = vmax.xlane.f32.xlu0 %v1131
    %v1133 = vpop.xlane.xlu0 %1132
    %v1134 = vsel %vm1106, %v1091, -inf
    %1135 = vmax.xlane.f32.xlu0 %v1134
    %v1136 = vpop.xlane.xlu0 %1135
    %v1137 = vsel %vm1106, %v1092, -inf
    %1138 = vmax.xlane.f32.xlu0 %v1137
    %v1139 = vpop.xlane.xlu0 %1138
    %v1140 = vsel %vm1106, %v1093, -inf
    %1141 = vmax.xlane.f32.xlu0 %v1140
    %v1142 = vpop.xlane.xlu0 %1141
    %v1143 = vsel %vm1106, %v1094, -inf
    %1144 = vmax.xlane.f32.xlu0 %v1143
    %v1145 = vpop.xlane.xlu0 %1144
    %v1146 = vsel %vm1106, %v1095, -inf
    %1147 = vmax.xlane.f32.xlu0 %v1146
    %v1148 = vpop.xlane.xlu0 %1147
    %v1149 = vsel %vm1106, %v1096, -inf
    %1150 = vmax.xlane.f32.xlu0 %v1149
    %v1151 = vpop.xlane.xlu0 %1150
    %v1152 = vsel %vm1106, %v1097, -inf
    %1153 = vmax.xlane.f32.xlu0 %v1152
    %v1154 = vpop.xlane.xlu0 %1153
    %v1155 = vsel %vm1106, %v1098, -inf
    %1156 = vmax.xlane.f32.xlu0 %v1155
    %v1157 = vpop.xlane.xlu0 %1156
    %v1158 = vsel %vm1106, %v1099, -inf
    %1159 = vmax.xlane.f32.xlu0 %v1158
    %v1160 = vpop.xlane.xlu0 %1159
    %v1161 = vsel %vm1106, %v1100, -inf
    %1162 = vmax.xlane.f32.xlu0 %v1161
    %v1163 = vpop.xlane.xlu0 %1162
    %v1164 = vsel %vm1106, %v1101, -inf
    %1165 = vmax.xlane.f32.xlu0 %v1164
    %v1166 = vpop.xlane.xlu0 %1165
    %v1167 = vsel %vm1106, %v1102, -inf
    %1168 = vmax.xlane.f32.xlu0 %v1167
    %v1169 = vpop.xlane.xlu0 %1168
    %v1170 = vsel %vm1106, %v1103, -inf
    %1171 = vmax.xlane.f32.xlu0 %v1170
    %v1172 = vpop.xlane.xlu0 %1171
    %v1173 = vsel %vm1106, %v1104, -inf
    %1174 = vmax.xlane.f32.xlu0 %v1173
    %v1175 = vpop.xlane.xlu0 %1174
    %v1176 = vsel %vm1106, %v1105, -inf
    %1177 = vmax.xlane.f32.xlu0 %v1176
    %v1178 = vpop.xlane.xlu0 %1177
    %v1179 = vsub.f32 %v1082, %v1109
    %v1180 = vsub.f32 %v1083, %v1112
    %v1181 = vsub.f32 %v1084, %v1115
    %v1182 = vsub.f32 %v1085, %v1118
    %v1183 = vsub.f32 %v1086, %v1121
    %v1184 = vsub.f32 %v1087, %v1124
    %v1185 = vsub.f32 %v1088, %v1127
    %v1186 = vsub.f32 %v1089, %v1130
    %v1187 = vsub.f32 %v1090, %v1133
    %v1188 = vsub.f32 %v1091, %v1136
    %v1189 = vsub.f32 %v1092, %v1139
    %v1190 = vsub.f32 %v1093, %v1142
    %v1191 = vsub.f32 %v1094, %v1145
    %v1192 = vsub.f32 %v1095, %v1148
    %v1193 = vsub.f32 %v1096, %v1151
    %v1194 = vsub.f32 %v1097, %v1154
    %v1195 = vsub.f32 %v1098, %v1157
    %v1196 = vsub.f32 %v1099, %v1160
    %v1197 = vsub.f32 %v1100, %v1163
    %v1198 = vsub.f32 %v1101, %v1166
    %v1199 = vsub.f32 %v1102, %v1169
    %v1200 = vsub.f32 %v1103, %v1172
    %v1201 = vsub.f32 %v1104, %v1175
    %v1202 = vsub.f32 %v1105, %v1178
    %v1203 = vmul.f32 %v1179, 1.442695
    %v1204 = vpow.pop %v1203
    %v1205 = vmul.f32 %v1180, 1.442695
    %v1206 = vpow.pop %v1205
    %v1207 = vmul.f32 %v1181, 1.442695
    %v1208 = vpow.pop %v1207
    %v1209 = vmul.f32 %v1182, 1.442695
    %v1210 = vpow.pop %v1209
    %v1211 = vmul.f32 %v1183, 1.442695
    %v1212 = vpow.pop %v1211
    %v1213 = vmul.f32 %v1184, 1.442695
    %v1214 = vpow.pop %v1213
    %v1215 = vmul.f32 %v1185, 1.442695
    %v1216 = vpow.pop %v1215
    %v1217 = vmul.f32 %v1186, 1.442695
    %v1218 = vpow.pop %v1217
    %v1219 = vmul.f32 %v1187, 1.442695
    %v1220 = vpow.pop %v1219
    %v1221 = vmul.f32 %v1188, 1.442695
    %v1222 = vpow.pop %v1221
    %v1223 = vmul.f32 %v1189, 1.442695
    %v1224 = vpow.pop %v1223
    %v1225 = vmul.f32 %v1190, 1.442695
    %v1226 = vpow.pop %v1225
    %v1227 = vmul.f32 %v1191, 1.442695
    %v1228 = vpow.pop %v1227
    %v1229 = vmul.f32 %v1192, 1.442695
    %v1230 = vpow.pop %v1229
    %v1231 = vmul.f32 %v1193, 1.442695
    %v1232 = vpow.pop %v1231
    %v1233 = vmul.f32 %v1194, 1.442695
    %v1234 = vpow.pop %v1233
    %v1235 = vmul.f32 %v1195, 1.442695
    %v1236 = vpow.pop %v1235
    %v1237 = vmul.f32 %v1196, 1.442695
    %v1238 = vpow.pop %v1237
    %v1239 = vmul.f32 %v1197, 1.442695
    %v1240 = vpow.pop %v1239
    %v1241 = vmul.f32 %v1198, 1.442695
    %v1242 = vpow.pop %v1241
    %v1243 = vmul.f32 %v1199, 1.442695
    %v1244 = vpow.pop %v1243
    %v1245 = vmul.f32 %v1200, 1.442695
    %v1246 = vpow.pop %v1245
    %v1247 = vmul.f32 %v1201, 1.442695
    %v1248 = vpow.pop %v1247
    %v1249 = vmul.f32 %v1202, 1.442695
    %v1250 = vpow.pop %v1249
    %v1251 = vsel %vm1106, %v1204, 0.0
    %1252 = vadd.xlane.f32.xlu0 %v1251
    %v1253 = vpop.xlane.xlu0 %1252
    %v1254 = vsel %vm1106, %v1206, 0.0
    %1255 = vadd.xlane.f32.xlu0 %v1254
    %v1256 = vpop.xlane.xlu0 %1255
    %v1257 = vsel %vm1106, %v1208, 0.0
    %1258 = vadd.xlane.f32.xlu0 %v1257
    %v1259 = vpop.xlane.xlu0 %1258
    %v1260 = vsel %vm1106, %v1210, 0.0
    %1261 = vadd.xlane.f32.xlu0 %v1260
    %v1262 = vpop.xlane.xlu0 %1261
    %v1263 = vsel %vm1106, %v1212, 0.0
    %1264 = vadd.xlane.f32.xlu0 %v1263
    %v1265 = vpop.xlane.xlu0 %1264
    %v1266 = vsel %vm1106, %v1214, 0.0
    %1267 = vadd.xlane.f32.xlu0 %v1266
    %v1268 = vpop.xlane.xlu0 %1267
    %v1269 = vsel %vm1106, %v1216, 0.0
    %1270 = vadd.xlane.f32.xlu0 %v1269
    %v1271 = vpop.xlane.xlu0 %1270
    %v1272 = vsel %vm1106, %v1218, 0.0
    %1273 = vadd.xlane.f32.xlu0 %v1272
    %v1274 = vpop.xlane.xlu0 %1273
    %v1275 = vsel %vm1106, %v1220, 0.0
    %1276 = vadd.xlane.f32.xlu0 %v1275
    %v1277 = vpop.xlane.xlu0 %1276
    %v1278 = vsel %vm1106, %v1222, 0.0
    %1279 = vadd.xlane.f32.xlu0 %v1278
    %v1280 = vpop.xlane.xlu0 %1279
    %v1281 = vsel %vm1106, %v1224, 0.0
    %1282 = vadd.xlane.f32.xlu0 %v1281
    %v1283 = vpop.xlane.xlu0 %1282
    %v1284 = vsel %vm1106, %v1226, 0.0
    %1285 = vadd.xlane.f32.xlu0 %v1284
    %v1286 = vpop.xlane.xlu0 %1285
    %v1287 = vsel %vm1106, %v1228, 0.0
    %1288 = vadd.xlane.f32.xlu0 %v1287
    %v1289 = vpop.xlane.xlu0 %1288
    %v1290 = vsel %vm1106, %v1230, 0.0
    %1291 = vadd.xlane.f32.xlu0 %v1290
    %v1292 = vpop.xlane.xlu0 %1291
    %v1293 = vsel %vm1106, %v1232, 0.0
    %1294 = vadd.xlane.f32.xlu0 %v1293
    %v1295 = vpop.xlane.xlu0 %1294
    %v1296 = vsel %vm1106, %v1234, 0.0
    %1297 = vadd.xlane.f32.xlu0 %v1296
    %v1298 = vpop.xlane.xlu0 %1297
    %v1299 = vsel %vm1106, %v1236, 0.0
    %1300 = vadd.xlane.f32.xlu0 %v1299
    %v1301 = vpop.xlane.xlu0 %1300
    %v1302 = vsel %vm1106, %v1238, 0.0
    %1303 = vadd.xlane.f32.xlu0 %v1302
    %v1304 = vpop.xlane.xlu0 %1303
    %v1305 = vsel %vm1106, %v1240, 0.0
    %1306 = vadd.xlane.f32.xlu0 %v1305
    %v1307 = vpop.xlane.xlu0 %1306
    %v1308 = vsel %vm1106, %v1242, 0.0
    %1309 = vadd.xlane.f32.xlu0 %v1308
    %v1310 = vpop.xlane.xlu0 %1309
    %v1311 = vsel %vm1106, %v1244, 0.0
    %1312 = vadd.xlane.f32.xlu0 %v1311
    %v1313 = vpop.xlane.xlu0 %1312
    %v1314 = vsel %vm1106, %v1246, 0.0
    %1315 = vadd.xlane.f32.xlu0 %v1314
    %v1316 = vpop.xlane.xlu0 %1315
    %v1317 = vsel %vm1106, %v1248, 0.0
    %1318 = vadd.xlane.f32.xlu0 %v1317
    %v1319 = vpop.xlane.xlu0 %1318
    %v1320 = vsel %vm1106, %v1250, 0.0
    %1321 = vadd.xlane.f32.xlu0 %v1320
    %v1322 = vpop.xlane.xlu0 %1321
    %v1323 = vrcp.pop %v1253
    %v1324 = vrcp.pop %v1256
    %v1325 = vrcp.pop %v1259
    %v1326 = vrcp.pop %v1262
    %v1327 = vrcp.pop %v1265
    %v1328 = vrcp.pop %v1268
    %v1329 = vrcp.pop %v1271
    %v1330 = vrcp.pop %v1274
    %v1331 = vrcp.pop %v1277
    %v1332 = vrcp.pop %v1280
    %v1333 = vrcp.pop %v1283
    %v1334 = vrcp.pop %v1286
    %v1335 = vrcp.pop %v1289
    %v1336 = vrcp.pop %v1292
    %v1337 = vrcp.pop %v1295
    %v1338 = vrcp.pop %v1298
    %v1339 = vrcp.pop %v1301
    %v1340 = vrcp.pop %v1304
    %v1341 = vrcp.pop %v1307
    %v1342 = vrcp.pop %v1310
    %v1343 = vrcp.pop %v1313
    %v1344 = vrcp.pop %v1316
    %v1345 = vrcp.pop %v1319
    %v1346 = vrcp.pop %v1322
    %v1347 = vmul.f32 %v1204, %v1323
    %v1348 = vmul.f32 %v1206, %v1324
    %v1349 = vmul.f32 %v1208, %v1325
    %v1350 = vmul.f32 %v1210, %v1326
    %v1351 = vmul.f32 %v1212, %v1327
    %v1352 = vmul.f32 %v1214, %v1328
    %v1353 = vmul.f32 %v1216, %v1329
    %v1354 = vmul.f32 %v1218, %v1330
    %v1355 = vmul.f32 %v1220, %v1331
    %v1356 = vmul.f32 %v1222, %v1332
    %v1357 = vmul.f32 %v1224, %v1333
    %v1358 = vmul.f32 %v1226, %v1334
    %v1359 = vmul.f32 %v1228, %v1335
    %v1360 = vmul.f32 %v1230, %v1336
    %v1361 = vmul.f32 %v1232, %v1337
    %v1362 = vmul.f32 %v1234, %v1338
    %v1363 = vmul.f32 %v1236, %v1339
    %v1364 = vmul.f32 %v1238, %v1340
    %v1365 = vmul.f32 %v1240, %v1341
    %v1366 = vmul.f32 %v1242, %v1342
    %v1367 = vmul.f32 %v1244, %v1343
    %v1368 = vmul.f32 %v1246, %v1344
    %v1369 = vmul.f32 %v1248, %v1345
    %v1370 = vmul.f32 %v1250, %v1346
    %v1371 = vpack.c.bf16 %v1348, %v1347
    %v1372 = vpack.c.bf16 %v1349, %v1349
    %v1373 = vpack.c.bf16 %v1351, %v1350
    %v1374 = vpack.c.bf16 %v1352, %v1352
    %v1375 = vpack.c.bf16 %v1354, %v1353
    %v1376 = vpack.c.bf16 %v1355, %v1355
    %v1377 = vpack.c.bf16 %v1357, %v1356
    %v1378 = vpack.c.bf16 %v1358, %v1358
    %v1379 = vpack.c.bf16 %v1360, %v1359
    %v1380 = vpack.c.bf16 %v1361, %v1361
    %v1381 = vpack.c.bf16 %v1363, %v1362
    %v1382 = vpack.c.bf16 %v1364, %v1364
    %v1383 = vpack.c.bf16 %v1366, %v1365
    %v1384 = vpack.c.bf16 %v1367, %v1367
    %v1385 = vpack.c.bf16 %v1369, %v1368
    %v1386 = vpack.c.bf16 %v1370, %v1370
    %1387 = vrot.lane.b32.xlu0 %v511, 64
    %v1388 = vpop.permute.xlu0 %1387
    %1389 = vrot.lane.b32.xlu0 %v512, 64
    %v1390 = vpop.permute.xlu0 %1389
    %v1393 = vsel %vm1106, %v1371, 0
    %v1396 = vsel %vm1106, %v1372, 0
    %v1399 = vsel %vm89, %v1390, 0
    %1401 = vmatprep.subr.bf16.mxu0 0
    %1402 = vmatpush1.bf16.msra.mxu0 %v1388
    %1403 = vmatprep.subr.bf16.mxu0 0
    %1404 = vmatpush1.bf16.msra.mxu0 %v1399
    %1405 = vmatprep.subr.bf16.mxu0 0
    %1406 = vmatpush1.bf16.msra.mxu0 0
    %1407 = vmatprep.subr.bf16.mxu0 0
    %1408 = vmatpush1.bf16.msra.mxu0 0
    %1409 = vmatprep.subr.bf16.mxu0 0
    %1410 = vmatpush1.bf16.msra.mxu0 0
    %1411 = vmatprep.subr.bf16.mxu0 0
    %1412 = vmatpush1.bf16.msra.mxu0 0
    %1413 = vmatprep.subr.bf16.mxu0 0
    %1414 = vmatpush1.bf16.msra.mxu0 0
    %1415 = vmatprep.subr.bf16.mxu0 0
    %1416 = vmatpush1.bf16.msra.mxu0 0
    %1417 = vmatprep.subr.bf16.mxu0 0
    %1418 = vmatpush1.bf16.msra.mxu0 0
    %1419 = vmatprep.subr.bf16.mxu0 0
    %1420 = vmatpush1.bf16.msra.mxu0 0
    %1421 = vmatprep.subr.bf16.mxu0 0
    %1422 = vmatpush1.bf16.msra.mxu0 0
    %1423 = vmatprep.subr.bf16.mxu0 0
    %1424 = vmatpush1.bf16.msra.mxu0 0
    %1425 = vmatprep.subr.bf16.mxu0 0
    %1426 = vmatpush1.bf16.msra.mxu0 0
    %1427 = vmatprep.subr.bf16.mxu0 0
    %1428 = vmatpush1.bf16.msra.mxu0 0
    %1429 = vmatprep.subr.bf16.mxu0 0
    %1430 = vmatpush1.bf16.msra.mxu0 0
    %1431 = vmatprep.subr.bf16.mxu0 0
    %1432 = vmatpush1.bf16.msra.mxu0 0
    %1433 = vmatprep.mubr.bf16.mxu0 0
    %1434 = vmatmul.mubr.bf16.gmra.mrb[0].mxu0 %v1393
    %v1435 = vpop.f32.mrb[0].mxu0
    %v1436 = vadd.f32 0.0, %v1435
    %v1437 = vpop.f32.mrb[0].mxu0
    %v1438 = vpop.f32.mrb[0].mxu0
    %v1439 = vadd.f32 0.0, %v1438
    %v1440 = vpop.f32.mrb[0].mxu0
    %1441 = vmatprep.mubr.bf16.mxu0 0
    %1442 = vmatmul.mubr.bf16.gmra.mrb[0].mxu0 %v1396
    %v1443 = vpop.f32.mrb[0].mxu0
    %v1444 = vadd.f32 0.0, %v1443
    %v1445 = vpop.f32.mrb[0].mxu0
    %v1446 = vpop.f32.mrb[0].mxu0
    %v1447 = vpop.f32.mrb[0].mxu0
    %1448 = vdwg.mxu0
    %1449 = vrot.lane.b32.xlu0 %v513, 64
    %v1450 = vpop.permute.xlu0 %1449
    %1451 = vrot.lane.b32.xlu0 %v514, 64
    %v1452 = vpop.permute.xlu0 %1451
    %v1455 = vsel %vm1106, %v1373, 0
    %v1458 = vsel %vm1106, %v1374, 0
    %v1461 = vsel %vm89, %v1452, 0
    %1463 = vmatprep.subr.bf16.mxu0 0
    %1464 = vmatpush1.bf16.msra.mxu0 %v1450
    %1465 = vmatprep.subr.bf16.mxu0 0
    %1466 = vmatpush1.bf16.msra.mxu0 %v1461
    %1467 = vmatprep.subr.bf16.mxu0 0
    %1468 = vmatpush1.bf16.msra.mxu0 0
    %1469 = vmatprep.subr.bf16.mxu0 0
    %1470 = vmatpush1.bf16.msra.mxu0 0
    %1471 = vmatprep.subr.bf16.mxu0 0
    %1472 = vmatpush1.bf16.msra.mxu0 0
    %1473 = vmatprep.subr.bf16.mxu0 0
    %1474 = vmatpush1.bf16.msra.mxu0 0
    %1475 = vmatprep.subr.bf16.mxu0 0
    %1476 = vmatpush1.bf16.msra.mxu0 0
    %1477 = vmatprep.subr.bf16.mxu0 0
    %1478 = vmatpush1.bf16.msra.mxu0 0
    %1479 = vmatprep.subr.bf16.mxu0 0
    %1480 = vmatpush1.bf16.msra.mxu0 0
    %1481 = vmatprep.subr.bf16.mxu0 0
    %1482 = vmatpush1.bf16.msra.mxu0 0
    %1483 = vmatprep.subr.bf16.mxu0 0
    %1484 = vmatpush1.bf16.msra.mxu0 0
    %1485 = vmatprep.subr.bf16.mxu0 0
    %1486 = vmatpush1.bf16.msra.mxu0 0
    %1487 = vmatprep.subr.bf16.mxu0 0
    %1488 = vmatpush1.bf16.msra.mxu0 0
    %1489 = vmatprep.subr.bf16.mxu0 0
    %1490 = vmatpush1.bf16.msra.mxu0 0
    %1491 = vmatprep.subr.bf16.mxu0 0
    %1492 = vmatpush1.bf16.msra.mxu0 0
    %1493 = vmatprep.subr.bf16.mxu0 0
    %1494 = vmatpush1.bf16.msra.mxu0 0
    %1495 = vmatprep.mubr.bf16.mxu0 0
    %1496 = vmatmul.mubr.bf16.gmra.mrb[0].mxu0 %v1455
    %v1497 = vpop.f32.mrb[0].mxu0
    %v1498 = vadd.f32 0.0, %v1497
    %v1499 = vpop.f32.mrb[0].mxu0
    %v1500 = vpop.f32.mrb[0].mxu0
    %v1501 = vadd.f32 0.0, %v1500
    %v1502 = vpop.f32.mrb[0].mxu0
    %1503 = vmatprep.mubr.bf16.mxu0 0
    %1504 = vmatmul.mubr.bf16.gmra.mrb[0].mxu0 %v1458
    %v1505 = vpop.f32.mrb[0].mxu0
    %v1506 = vadd.f32 0.0, %v1505
    %v1507 = vpop.f32.mrb[0].mxu0
    %v1508 = vpop.f32.mrb[0].mxu0
    %v1509 = vpop.f32.mrb[0].mxu0
    %1510 = vdwg.mxu0
    %1511 = vrot.lane.b32.xlu0 %v515, 64
    %v1512 = vpop.permute.xlu0 %1511
    %1513 = vrot.lane.b32.xlu0 %v516, 64
    %v1514 = vpop.permute.xlu0 %1513
    %v1517 = vsel %vm1106, %v1375, 0
    %v1520 = vsel %vm1106, %v1376, 0
    %v1523 = vsel %vm89, %v1514, 0
    %1525 = vmatprep.subr.bf16.mxu0 0
    %1526 = vmatpush1.bf16.msra.mxu0 %v1512
    %1527 = vmatprep.subr.bf16.mxu0 0
    %1528 = vmatpush1.bf16.msra.mxu0 %v1523
    %1529 = vmatprep.subr.bf16.mxu0 0
    %1530 = vmatpush1.bf16.msra.mxu0 0
    %1531 = vmatprep.subr.bf16.mxu0 0
    %1532 = vmatpush1.bf16.msra.mxu0 0
    %1533 = vmatprep.subr.bf16.mxu0 0
    %1534 = vmatpush1.bf16.msra.mxu0 0
    %1535 = vmatprep.subr.bf16.mxu0 0
    %1536 = vmatpush1.bf16.msra.mxu0 0
    %1537 = vmatprep.subr.bf16.mxu0 0
    %1538 = vmatpush1.bf16.msra.mxu0 0
    %1539 = vmatprep.subr.bf16.mxu0 0
    %1540 = vmatpush1.bf16.msra.mxu0 0
    %1541 = vmatprep.subr.bf16.mxu0 0
    %1542 = vmatpush1.bf16.msra.mxu0 0
    %1543 = vmatprep.subr.bf16.mxu0 0
    %1544 = vmatpush1.bf16.msra.mxu0 0
    %1545 = vmatprep.subr.bf16.mxu0 0
    %1546 = vmatpush1.bf16.msra.mxu0 0
    %1547 = vmatprep.subr.bf16.mxu0 0
    %1548 = vmatpush1.bf16.msra.mxu0 0
    %1549 = vmatprep.subr.bf16.mxu0 0
    %1550 = vmatpush1.bf16.msra.mxu0 0
    %1551 = vmatprep.subr.bf16.mxu0 0
    %1552 = vmatpush1.bf16.msra.mxu0 0
    %1553 = vmatprep.subr.bf16.mxu0 0
    %1554 = vmatpush1.bf16.msra.mxu0 0
    %1555 = vmatprep.subr.bf16.mxu0 0
    %1556 = vmatpush1.bf16.msra.mxu0 0
    %1557 = vmatprep.mubr.bf16.mxu0 0
    %1558 = vmatmul.mubr.bf16.gmra.mrb[0].mxu0 %v1517
    %v1559 = vpop.f32.mrb[0].mxu0
    %v1560 = vadd.f32 0.0, %v1559
    %v1561 = vpop.f32.mrb[0].mxu0
    %v1562 = vpop.f32.mrb[0].mxu0
    %v1563 = vadd.f32 0.0, %v1562
    %v1564 = vpop.f32.mrb[0].mxu0
    %1565 = vmatprep.mubr.bf16.mxu0 0
    %1566 = vmatmul.mubr.bf16.gmra.mrb[0].mxu0 %v1520
    %v1567 = vpop.f32.mrb[0].mxu0
    %v1568 = vadd.f32 0.0, %v1567
    %v1569 = vpop.f32.mrb[0].mxu0
    %v1570 = vpop.f32.mrb[0].mxu0
    %v1571 = vpop.f32.mrb[0].mxu0
    %1572 = vdwg.mxu0
    %1573 = vrot.lane.b32.xlu0 %v517, 64
    %v1574 = vpop.permute.xlu0 %1573
    %1575 = vrot.lane.b32.xlu0 %v518, 64
    %v1576 = vpop.permute.xlu0 %1575
    %v1579 = vsel %vm1106, %v1377, 0
    %v1582 = vsel %vm1106, %v1378, 0
    %v1585 = vsel %vm89, %v1576, 0
    %1587 = vmatprep.subr.bf16.mxu0 0
    %1588 = vmatpush1.bf16.msra.mxu0 %v1574
    %1589 = vmatprep.subr.bf16.mxu0 0
    %1590 = vmatpush1.bf16.msra.mxu0 %v1585
    %1591 = vmatprep.subr.bf16.mxu0 0
    %1592 = vmatpush1.bf16.msra.mxu0 0
    %1593 = vmatprep.subr.bf16.mxu0 0
    %1594 = vmatpush1.bf16.msra.mxu0 0
    %1595 = vmatprep.subr.bf16.mxu0 0
    %1596 = vmatpush1.bf16.msra.mxu0 0
    %1597 = vmatprep.subr.bf16.mxu0 0
    %1598 = vmatpush1.bf16.msra.mxu0 0
    %1599 = vmatprep.subr.bf16.mxu0 0
    %1600 = vmatpush1.bf16.msra.mxu0 0
    %1601 = vmatprep.subr.bf16.mxu0 0
    %1602 = vmatpush1.bf16.msra.mxu0 0
    %1603 = vmatprep.subr.bf16.mxu0 0
    %1604 = vmatpush1.bf16.msra.mxu0 0
    %1605 = vmatprep.subr.bf16.mxu0 0
    %1606 = vmatpush1.bf16.msra.mxu0 0
    %1607 = vmatprep.subr.bf16.mxu0 0
    %1608 = vmatpush1.bf16.msra.mxu0 0
    %1609 = vmatprep.subr.bf16.mxu0 0
    %1610 = vmatpush1.bf16.msra.mxu0 0
    %1611 = vmatprep.subr.bf16.mxu0 0
    %1612 = vmatpush1.bf16.msra.mxu0 0
    %1613 = vmatprep.subr.bf16.mxu0 0
    %1614 = vmatpush1.bf16.msra.mxu0 0
    %1615 = vmatprep.subr.bf16.mxu0 0
    %1616 = vmatpush1.bf16.msra.mxu0 0
    %1617 = vmatprep.subr.bf16.mxu0 0
    %1618 = vmatpush1.bf16.msra.mxu0 0
    %1619 = vmatprep.mubr.bf16.mxu0 0
    %1620 = vmatmul.mubr.bf16.gmra.mrb[0].mxu0 %v1579
    %v1621 = vpop.f32.mrb[0].mxu0
    %v1622 = vadd.f32 0.0, %v1621
    %v1623 = vpop.f32.mrb[0].mxu0
    %v1624 = vpop.f32.mrb[0].mxu0
    %v1625 = vadd.f32 0.0, %v1624
    %v1626 = vpop.f32.mrb[0].mxu0
    %1627 = vmatprep.mubr.bf16.mxu0 0
    %1628 = vmatmul.mubr.bf16.gmra.mrb[0].mxu0 %v1582
    %v1629 = vpop.f32.mrb[0].mxu0
    %v1630 = vadd.f32 0.0, %v1629
    %v1631 = vpop.f32.mrb[0].mxu0
    %v1632 = vpop.f32.mrb[0].mxu0
    %v1633 = vpop.f32.mrb[0].mxu0
    %1634 = vdwg.mxu0
    %1635 = vrot.lane.b32.xlu0 %v519, 64
    %v1636 = vpop.permute.xlu0 %1635
    %1637 = vrot.lane.b32.xlu0 %v520, 64
    %v1638 = vpop.permute.xlu0 %1637
    %v1641 = vsel %vm1106, %v1379, 0
    %v1644 = vsel %vm1106, %v1380, 0
    %v1647 = vsel %vm89, %v1638, 0
    %1649 = vmatprep.subr.bf16.mxu0 0
    %1650 = vmatpush1.bf16.msra.mxu0 %v1636
    %1651 = vmatprep.subr.bf16.mxu0 0
    %1652 = vmatpush1.bf16.msra.mxu0 %v1647
    %1653 = vmatprep.subr.bf16.mxu0 0
    %1654 = vmatpush1.bf16.msra.mxu0 0
    %1655 = vmatprep.subr.bf16.mxu0 0
    %1656 = vmatpush1.bf16.msra.mxu0 0
    %1657 = vmatprep.subr.bf16.mxu0 0
    %1658 = vmatpush1.bf16.msra.mxu0 0
    %1659 = vmatprep.subr.bf16.mxu0 0
    %1660 = vmatpush1.bf16.msra.mxu0 0
    %1661 = vmatprep.subr.bf16.mxu0 0
    %1662 = vmatpush1.bf16.msra.mxu0 0
    %1663 = vmatprep.subr.bf16.mxu0 0
    %1664 = vmatpush1.bf16.msra.mxu0 0
    %1665 = vmatprep.subr.bf16.mxu0 0
    %1666 = vmatpush1.bf16.msra.mxu0 0
    %1667 = vmatprep.subr.bf16.mxu0 0
    %1668 = vmatpush1.bf16.msra.mxu0 0
    %1669 = vmatprep.subr.bf16.mxu0 0
    %1670 = vmatpush1.bf16.msra.mxu0 0
    %1671 = vmatprep.subr.bf16.mxu0 0
    %1672 = vmatpush1.bf16.msra.mxu0 0
    %1673 = vmatprep.subr.bf16.mxu0 0
    %1674 = vmatpush1.bf16.msra.mxu0 0
    %1675 = vmatprep.subr.bf16.mxu0 0
    %1676 = vmatpush1.bf16.msra.mxu0 0
    %1677 = vmatprep.subr.bf16.mxu0 0
    %1678 = vmatpush1.bf16.msra.mxu0 0
    %1679 = vmatprep.subr.bf16.mxu0 0
    %1680 = vmatpush1.bf16.msra.mxu0 0
    %1681 = vmatprep.mubr.bf16.mxu0 0
    %1682 = vmatmul.mubr.bf16.gmra.mrb[0].mxu0 %v1641
    %v1683 = vpop.f32.mrb[0].mxu0
    %v1684 = vadd.f32 0.0, %v1683
    %v1685 = vpop.f32.mrb[0].mxu0
    %v1686 = vpop.f32.mrb[0].mxu0
    %v1687 = vadd.f32 0.0, %v1686
    %v1688 = vpop.f32.mrb[0].mxu0
    %1689 = vmatprep.mubr.bf16.mxu0 0
    %1690 = vmatmul.mubr.bf16.gmra.mrb[0].mxu0 %v1644
    %v1691 = vpop.f32.mrb[0].mxu0
    %v1692 = vadd.f32 0.0, %v1691
    %v1693 = vpop.f32.mrb[0].mxu0
    %v1694 = vpop.f32.mrb[0].mxu0
    %v1695 = vpop.f32.mrb[0].mxu0
    %1696 = vdwg.mxu0
    %1697 = vrot.lane.b32.xlu0 %v521, 64
    %v1698 = vpop.permute.xlu0 %1697
    %1699 = vrot.lane.b32.xlu0 %v522, 64
    %v1700 = vpop.permute.xlu0 %1699
    %v1703 = vsel %vm1106, %v1381, 0
    %v1706 = vsel %vm1106, %v1382, 0
    %v1709 = vsel %vm89, %v1700, 0
    %1711 = vmatprep.subr.bf16.mxu0 0
    %1712 = vmatpush1.bf16.msra.mxu0 %v1698
    %1713 = vmatprep.subr.bf16.mxu0 0
    %1714 = vmatpush1.bf16.msra.mxu0 %v1709
    %1715 = vmatprep.subr.bf16.mxu0 0
    %1716 = vmatpush1.bf16.msra.mxu0 0
    %1717 = vmatprep.subr.bf16.mxu0 0
    %1718 = vmatpush1.bf16.msra.mxu0 0
    %1719 = vmatprep.subr.bf16.mxu0 0
    %1720 = vmatpush1.bf16.msra.mxu0 0
    %1721 = vmatprep.subr.bf16.mxu0 0
    %1722 = vmatpush1.bf16.msra.mxu0 0
    %1723 = vmatprep.subr.bf16.mxu0 0
    %1724 = vmatpush1.bf16.msra.mxu0 0
    %1725 = vmatprep.subr.bf16.mxu0 0
    %1726 = vmatpush1.bf16.msra.mxu0 0
    %1727 = vmatprep.subr.bf16.mxu0 0
    %1728 = vmatpush1.bf16.msra.mxu0 0
    %1729 = vmatprep.subr.bf16.mxu0 0
    %1730 = vmatpush1.bf16.msra.mxu0 0
    %1731 = vmatprep.subr.bf16.mxu0 0
    %1732 = vmatpush1.bf16.msra.mxu0 0
    %1733 = vmatprep.subr.bf16.mxu0 0
    %1734 = vmatpush1.bf16.msra.mxu0 0
    %1735 = vmatprep.subr.bf16.mxu0 0
    %1736 = vmatpush1.bf16.msra.mxu0 0
    %1737 = vmatprep.subr.bf16.mxu0 0
    %1738 = vmatpush1.bf16.msra.mxu0 0
    %1739 = vmatprep.subr.bf16.mxu0 0
    %1740 = vmatpush1.bf16.msra.mxu0 0
    %1741 = vmatprep.subr.bf16.mxu0 0
    %1742 = vmatpush1.bf16.msra.mxu0 0
    %1743 = vmatprep.mubr.bf16.mxu0 0
    %1744 = vmatmul.mubr.bf16.gmra.mrb[0].mxu0 %v1703
    %v1745 = vpop.f32.mrb[0].mxu0
    %v1746 = vadd.f32 0.0, %v1745
    %v1747 = vpop.f32.mrb[0].mxu0
    %v1748 = vpop.f32.mrb[0].mxu0
    %v1749 = vadd.f32 0.0, %v1748
    %v1750 = vpop.f32.mrb[0].mxu0
    %1751 = vmatprep.mubr.bf16.mxu0 0
    %1752 = vmatmul.mubr.bf16.gmra.mrb[0].mxu0 %v1706
    %v1753 = vpop.f32.mrb[0].mxu0
    %v1754 = vadd.f32 0.0, %v1753
    %v1755 = vpop.f32.mrb[0].mxu0
    %v1756 = vpop.f32.mrb[0].mxu0
    %v1757 = vpop.f32.mrb[0].mxu0
    %1758 = vdwg.mxu0
    %1759 = vrot.lane.b32.xlu0 %v523, 64
    %v1760 = vpop.permute.xlu0 %1759
    %1761 = vrot.lane.b32.xlu0 %v524, 64
    %v1762 = vpop.permute.xlu0 %1761
    %v1765 = vsel %vm1106, %v1383, 0
    %v1768 = vsel %vm1106, %v1384, 0
    %v1771 = vsel %vm89, %v1762, 0
    %1773 = vmatprep.subr.bf16.mxu0 0
    %1774 = vmatpush1.bf16.msra.mxu0 %v1760
    %1775 = vmatprep.subr.bf16.mxu0 0
    %1776 = vmatpush1.bf16.msra.mxu0 %v1771
    %1777 = vmatprep.subr.bf16.mxu0 0
    %1778 = vmatpush1.bf16.msra.mxu0 0
    %1779 = vmatprep.subr.bf16.mxu0 0
    %1780 = vmatpush1.bf16.msra.mxu0 0
    %1781 = vmatprep.subr.bf16.mxu0 0
    %1782 = vmatpush1.bf16.msra.mxu0 0
    %1783 = vmatprep.subr.bf16.mxu0 0
    %1784 = vmatpush1.bf16.msra.mxu0 0
    %1785 = vmatprep.subr.bf16.mxu0 0
    %1786 = vmatpush1.bf16.msra.mxu0 0
    %1787 = vmatprep.subr.bf16.mxu0 0
    %1788 = vmatpush1.bf16.msra.mxu0 0
    %1789 = vmatprep.subr.bf16.mxu0 0
    %1790 = vmatpush1.bf16.msra.mxu0 0
    %1791 = vmatprep.subr.bf16.mxu0 0
    %1792 = vmatpush1.bf16.msra.mxu0 0
    %1793 = vmatprep.subr.bf16.mxu0 0
    %1794 = vmatpush1.bf16.msra.mxu0 0
    %1795 = vmatprep.subr.bf16.mxu0 0
    %1796 = vmatpush1.bf16.msra.mxu0 0
    %1797 = vmatprep.subr.bf16.mxu0 0
    %1798 = vmatpush1.bf16.msra.mxu0 0
    %1799 = vmatprep.subr.bf16.mxu0 0
    %1800 = vmatpush1.bf16.msra.mxu0 0
    %1801 = vmatprep.subr.bf16.mxu0 0
    %1802 = vmatpush1.bf16.msra.mxu0 0
    %1803 = vmatprep.subr.bf16.mxu0 0
    %1804 = vmatpush1.bf16.msra.mxu0 0
    %1805 = vmatprep.mubr.bf16.mxu0 0
    %1806 = vmatmul.mubr.bf16.gmra.mrb[0].mxu0 %v1765
    %v1807 = vpop.f32.mrb[0].mxu0
    %v1808 = vadd.f32 0.0, %v1807
    %v1809 = vpop.f32.mrb[0].mxu0
    %v1810 = vpop.f32.mrb[0].mxu0
    %v1811 = vadd.f32 0.0, %v1810
    %v1812 = vpop.f32.mrb[0].mxu0
    %1813 = vmatprep.mubr.bf16.mxu0 0
    %1814 = vmatmul.mubr.bf16.gmra.mrb[0].mxu0 %v1768
    %v1815 = vpop.f32.mrb[0].mxu0
    %v1816 = vadd.f32 0.0, %v1815
    %v1817 = vpop.f32.mrb[0].mxu0
    %v1818 = vpop.f32.mrb[0].mxu0
    %v1819 = vpop.f32.mrb[0].mxu0
    %1820 = vdwg.mxu0
    %1821 = vrot.lane.b32.xlu0 %v525, 64
    %v1822 = vpop.permute.xlu0 %1821
    %1823 = vrot.lane.b32.xlu0 %v526, 64
    %v1824 = vpop.permute.xlu0 %1823
    %v1827 = vsel %vm1106, %v1385, 0
    %v1830 = vsel %vm1106, %v1386, 0
    %v1833 = vsel %vm89, %v1824, 0
    %1835 = vmatprep.subr.bf16.mxu0 0
    %1836 = vmatpush1.bf16.msra.mxu0 %v1822
    %1837 = vmatprep.subr.bf16.mxu0 0
    %1838 = vmatpush1.bf16.msra.mxu0 %v1833
    %1839 = vmatprep.subr.bf16.mxu0 0
    %1840 = vmatpush1.bf16.msra.mxu0 0
    %1841 = vmatprep.subr.bf16.mxu0 0
    %1842 = vmatpush1.bf16.msra.mxu0 0
    %1843 = vmatprep.subr.bf16.mxu0 0
    %1844 = vmatpush1.bf16.msra.mxu0 0
    %1845 = vmatprep.subr.bf16.mxu0 0
    %1846 = vmatpush1.bf16.msra.mxu0 0
    %1847 = vmatprep.subr.bf16.mxu0 0
    %1848 = vmatpush1.bf16.msra.mxu0 0
    %1849 = vmatprep.subr.bf16.mxu0 0
    %1850 = vmatpush1.bf16.msra.mxu0 0
    %1851 = vmatprep.subr.bf16.mxu0 0
    %1852 = vmatpush1.bf16.msra.mxu0 0
    %1853 = vmatprep.subr.bf16.mxu0 0
    %1854 = vmatpush1.bf16.msra.mxu0 0
    %1855 = vmatprep.subr.bf16.mxu0 0
    %1856 = vmatpush1.bf16.msra.mxu0 0
    %1857 = vmatprep.subr.bf16.mxu0 0
    %1858 = vmatpush1.bf16.msra.mxu0 0
    %1859 = vmatprep.subr.bf16.mxu0 0
    %1860 = vmatpush1.bf16.msra.mxu0 0
    %1861 = vmatprep.subr.bf16.mxu0 0
    %1862 = vmatpush1.bf16.msra.mxu0 0
    %1863 = vmatprep.subr.bf16.mxu0 0
    %1864 = vmatpush1.bf16.msra.mxu0 0
    %1865 = vmatprep.subr.bf16.mxu0 0
    %1866 = vmatpush1.bf16.msra.mxu0 0
    %1867 = vmatprep.mubr.bf16.mxu0 0
    %1868 = vmatmul.mubr.bf16.gmra.mrb[0].mxu0 %v1827
    %v1869 = vpop.f32.mrb[0].mxu0
    %v1870 = vadd.f32 0.0, %v1869
    %v1871 = vpop.f32.mrb[0].mxu0
    %v1872 = vpop.f32.mrb[0].mxu0
    %v1873 = vadd.f32 0.0, %v1872
    %v1874 = vpop.f32.mrb[0].mxu0
    %1875 = vmatprep.mubr.bf16.mxu0 0
    %1876 = vmatmul.mubr.bf16.gmra.mrb[0].mxu0 %v1830
    %v1877 = vpop.f32.mrb[0].mxu0
    %v1878 = vadd.f32 0.0, %v1877
    %v1879 = vpop.f32.mrb[0].mxu0
    %v1880 = vpop.f32.mrb[0].mxu0
    %v1881 = vpop.f32.mrb[0].mxu0
    %1882 = vdwg.mxu0
    %1895 = vrot.lane.b32.xlu0 %v1684, 16
    %v1896 = vpop.permute.xlu0 %1895
    %1897 = vrot.lane.b32.xlu0 %v1687, 16
    %v1898 = vpop.permute.xlu0 %1897
    %1899 = vrot.lane.b32.xlu0 %v1692, 16
    %v1900 = vpop.permute.xlu0 %1899
    %1901 = vrot.lane.b32.xlu0 %v1746, 16
    %v1902 = vpop.permute.xlu0 %1901
    %1903 = vrot.lane.b32.xlu0 %v1749, 16
    %v1904 = vpop.permute.xlu0 %1903
    %1905 = vrot.lane.b32.xlu0 %v1754, 16
    %v1906 = vpop.permute.xlu0 %1905
    %1907 = vrot.lane.b32.xlu0 %v1808, 16
    %v1908 = vpop.permute.xlu0 %1907
    %1909 = vrot.lane.b32.xlu0 %v1811, 16
    %v1910 = vpop.permute.xlu0 %1909
    %1911 = vrot.lane.b32.xlu0 %v1816, 16
    %v1912 = vpop.permute.xlu0 %1911
    %1913 = vrot.lane.b32.xlu0 %v1870, 16
    %v1914 = vpop.permute.xlu0 %1913
    %1915 = vrot.lane.b32.xlu0 %v1873, 16
    %v1916 = vpop.permute.xlu0 %1915
    %1917 = vrot.lane.b32.xlu0 %v1878, 16
    %v1918 = vpop.permute.xlu0 %1917
    %v1931 = vsel %vm533, %v1436, %v1896
    %v1932 = vsel %vm533, %v1439, %v1898
    %v1933 = vsel %vm533, %v1444, %v1900
    %v1934 = vsel %vm533, %v1498, %v1902
    %v1935 = vsel %vm533, %v1501, %v1904
    %v1936 = vsel %vm533, %v1506, %v1906
    %v1937 = vsel %vm533, %v1560, %v1908
    %v1938 = vsel %vm533, %v1563, %v1910
    %v1939 = vsel %vm533, %v1568, %v1912
    %v1940 = vsel %vm533, %v1622, %v1914
    %v1941 = vsel %vm533, %v1625, %v1916
    %v1942 = vsel %vm533, %v1630, %v1918
    %v1943 = vpack.c.bf16 %v1932, %v1931
    %v1944 = vpack.c.bf16 %v1934, %v1933
    %v1945 = vpack.c.bf16 %v1936, %v1935
    %v1946 = vpack.c.bf16 %v1938, %v1937
    %v1947 = vpack.c.bf16 %v1940, %v1939
    %v1948 = vpack.c.bf16 %v1942, %v1941
    %v1949 = vld [vmem:[%s1 + $0x48] sm:$0xf]
    %v1950 = vld [vmem:[%s1 + $0x4c] sm:$0xf]
    %v1951 = vld [vmem:[%s1 + $0x50] sm:$0xf]
    %v1952 = vld [vmem:[%s1 + $0x54] sm:$0xf]
    %v1953 = vld [vmem:[%s2 + $0x2] sm:$0x1]
    %v1954 = vlaneseq
    %v1955 = vshrl.u32 %v1954, 7
    %v1956 = vsub.s32 0, %v1955
    %v1957 = vrot.slane %v1953, %v1956
    %v1962 = vunpack.c.l.b16 %v1949
    %v1963 = vunpack.c.l.b16 %v1950
    %v1964 = vunpack.c.l.b16 %v1951
    %v1965 = vunpack.c.l.b16 %v1952
    %v1966 = vpack.c.b16 %v1963, %v1962
    %v1967 = vpack.c.b16 %v1965, %v1964
    %v1971 = vsel %vm179, %v1943, 0
    %v1974 = vsel %vm179, %v1944, 0
    %v1977 = vsel %vm179, %v1945, 0
    %v1980 = vsel %vm179, %v1946, 0
    %v1983 = vsel %vm179, %v1947, 0
    %v1986 = vsel %vm179, %v1948, 0
    %1988 = vmatprep.subr.bf16.mxu0 0
    %1989 = vmatpush1.bf16.msra.mxu0 %v1966
    %1990 = vmatprep.subr.bf16.mxu0 0
    %1991 = vmatpush1.bf16.msra.mxu0 %v1967
    %1992 = vmatprep.subr.bf16.mxu0 0
    %1993 = vmatpush1.bf16.msra.mxu0 0
    %1994 = vmatprep.subr.bf16.mxu0 0
    %1995 = vmatpush1.bf16.msra.mxu0 0
    %1996 = vmatprep.subr.bf16.mxu0 0
    %1997 = vmatpush1.bf16.msra.mxu0 0
    %1998 = vmatprep.subr.bf16.mxu0 0
    %1999 = vmatpush1.bf16.msra.mxu0 0
    %2000 = vmatprep.subr.bf16.mxu0 0
    %2001 = vmatpush1.bf16.msra.mxu0 0
    %2002 = vmatprep.subr.bf16.mxu0 0
    %2003 = vmatpush1.bf16.msra.mxu0 0
    %2004 = vmatprep.subr.bf16.mxu0 0
    %2005 = vmatpush1.bf16.msra.mxu0 0
    %2006 = vmatprep.subr.bf16.mxu0 0
    %2007 = vmatpush1.bf16.msra.mxu0 0
    %2008 = vmatprep.subr.bf16.mxu0 0
    %2009 = vmatpush1.bf16.msra.mxu0 0
    %2010 = vmatprep.subr.bf16.mxu0 0
    %2011 = vmatpush1.bf16.msra.mxu0 0
    %2012 = vmatprep.subr.bf16.mxu0 0
    %2013 = vmatpush1.bf16.msra.mxu0 0
    %2014 = vmatprep.subr.bf16.mxu0 0
    %2015 = vmatpush1.bf16.msra.mxu0 0
    %2016 = vmatprep.subr.bf16.mxu0 0
    %2017 = vmatpush1.bf16.msra.mxu0 0
    %2018 = vmatprep.subr.bf16.mxu0 0
    %2019 = vmatpush1.bf16.msra.mxu0 0
    %2020 = vmatprep.mubr.bf16.mxu0 0
    %2021 = vmatmul.mubr.bf16.gmra.mrb[0].mxu0 %v1971
    %v2022 = vpop.f32.mrb[0].mxu0
    %v2023 = vadd.f32 %v1957, %v2022
    %v2024 = vpop.f32.mrb[0].mxu0
    %v2025 = vpop.f32.mrb[0].mxu0
    %v2026 = vadd.f32 %v1957, %v2025
    %v2027 = vpop.f32.mrb[0].mxu0
    %2028 = vmatprep.mubr.bf16.mxu0 0
    %2029 = vmatmul.mubr.bf16.gmra.mrb[0].mxu0 %v1974
    %v2030 = vpop.f32.mrb[0].mxu0
    %v2031 = vadd.f32 %v1957, %v2030
    %v2032 = vpop.f32.mrb[0].mxu0
    %v2033 = vpop.f32.mrb[0].mxu0
    %v2034 = vadd.f32 %v1957, %v2033
    %v2035 = vpop.f32.mrb[0].mxu0
    %2036 = vmatprep.mubr.bf16.mxu0 0
    %2037 = vmatmul.mubr.bf16.gmra.mrb[0].mxu0 %v1977
    %v2038 = vpop.f32.mrb[0].mxu0
    %v2039 = vadd.f32 %v1957, %v2038
    %v2040 = vpop.f32.mrb[0].mxu0
    %v2041 = vpop.f32.mrb[0].mxu0
    %v2042 = vadd.f32 %v1957, %v2041
    %v2043 = vpop.f32.mrb[0].mxu0
    %2044 = vmatprep.mubr.bf16.mxu0 0
    %2045 = vmatmul.mubr.bf16.gmra.mrb[0].mxu0 %v1980
    %v2046 = vpop.f32.mrb[0].mxu0
    %v2047 = vadd.f32 %v1957, %v2046
    %v2048 = vpop.f32.mrb[0].mxu0
    %v2049 = vpop.f32.mrb[0].mxu0
    %v2050 = vadd.f32 %v1957, %v2049
    %v2051 = vpop.f32.mrb[0].mxu0
    %2052 = vmatprep.mubr.bf16.mxu0 0
    %2053 = vmatmul.mubr.bf16.gmra.mrb[0].mxu0 %v1983
    %v2054 = vpop.f32.mrb[0].mxu0
    %v2055 = vadd.f32 %v1957, %v2054
    %v2056 = vpop.f32.mrb[0].mxu0
    %v2057 = vpop.f32.mrb[0].mxu0
    %v2058 = vadd.f32 %v1957, %v2057
    %v2059 = vpop.f32.mrb[0].mxu0
    %2060 = vmatprep.mubr.bf16.mxu0 0
    %2061 = vmatmul.mubr.bf16.gmra.mrb[0].mxu0 %v1986
    %v2062 = vpop.f32.mrb[0].mxu0
    %v2063 = vadd.f32 %v1957, %v2062
    %v2064 = vpop.f32.mrb[0].mxu0
    %v2065 = vpop.f32.mrb[0].mxu0
    %v2066 = vadd.f32 %v1957, %v2065
    %v2067 = vpop.f32.mrb[0].mxu0
    %2068 = vdwg.mxu0
    %v2069 = vadd.f32 %v128, %v2023
    %v2070 = vadd.f32 %v131, %v2026
    %v2071 = vadd.f32 %v136, %v2031
    %v2072 = vadd.f32 %v139, %v2034
    %v2073 = vadd.f32 %v144, %v2039
    %v2074 = vadd.f32 %v147, %v2042
    %v2075 = vadd.f32 %v152, %v2047
    %v2076 = vadd.f32 %v155, %v2050
    %v2077 = vadd.f32 %v160, %v2055
    %v2078 = vadd.f32 %v163, %v2058
    %v2079 = vadd.f32 %v168, %v2063
    %v2080 = vadd.f32 %v171, %v2066
    %v2081 = vsel %vm179, %v2069, 0.0
    %2082 = vadd.xlane.f32.xlu0 %v2081
    %v2083 = vpop.xlane.xlu0 %2082
    %v2084 = vsel %vm179, %v2070, 0.0
    %2085 = vadd.xlane.f32.xlu0 %v2084
    %v2086 = vpop.xlane.xlu0 %2085
    %v2087 = vsel %vm179, %v2071, 0.0
    %2088 = vadd.xlane.f32.xlu0 %v2087
    %v2089 = vpop.xlane.xlu0 %2088
    %v2090 = vsel %vm179, %v2072, 0.0
    %2091 = vadd.xlane.f32.xlu0 %v2090
    %v2092 = vpop.xlane.xlu0 %2091
    %v2093 = vsel %vm179, %v2073, 0.0
    %2094 = vadd.xlane.f32.xlu0 %v2093
    %v2095 = vpop.xlane.xlu0 %2094
    %v2096 = vsel %vm179, %v2074, 0.0
    %2097 = vadd.xlane.f32.xlu0 %v2096
    %v2098 = vpop.xlane.xlu0 %2097
    %v2099 = vsel %vm179, %v2075, 0.0
    %2100 = vadd.xlane.f32.xlu0 %v2099
    %v2101 = vpop.xlane.xlu0 %2100
    %v2102 = vsel %vm179, %v2076, 0.0
    %2103 = vadd.xlane.f32.xlu0 %v2102
    %v2104 = vpop.xlane.xlu0 %2103
    %v2105 = vsel %vm179, %v2077, 0.0
    %2106 = vadd.xlane.f32.xlu0 %v2105
    %v2107 = vpop.xlane.xlu0 %2106
    %v2108 = vsel %vm179, %v2078, 0.0
    %2109 = vadd.xlane.f32.xlu0 %v2108
    %v2110 = vpop.xlane.xlu0 %2109
    %v2111 = vsel %vm179, %v2079, 0.0
    %2112 = vadd.xlane.f32.xlu0 %v2111
    %v2113 = vpop.xlane.xlu0 %2112
    %v2114 = vsel %vm179, %v2080, 0.0
    %2115 = vadd.xlane.f32.xlu0 %v2114
    %v2116 = vpop.xlane.xlu0 %2115
    %v2117 = vmul.f32 %v2083, %v216
    %v2118 = vmul.f32 %v2086, %v216
    %v2119 = vmul.f32 %v2089, %v216
    %v2120 = vmul.f32 %v2092, %v216
    %v2121 = vmul.f32 %v2095, %v216
    %v2122 = vmul.f32 %v2098, %v216
    %v2123 = vmul.f32 %v2101, %v216
    %v2124 = vmul.f32 %v2104, %v216
    %v2125 = vmul.f32 %v2107, %v216
    %v2126 = vmul.f32 %v2110, %v216
    %v2127 = vmul.f32 %v2113, %v216
    %v2128 = vmul.f32 %v2116, %v216
    %v2129 = vsub.f32 %v2069, %v2117
    %v2130 = vsub.f32 %v2070, %v2118
    %v2131 = vsub.f32 %v2071, %v2119
    %v2132 = vsub.f32 %v2072, %v2120
    %v2133 = vsub.f32 %v2073, %v2121
    %v2134 = vsub.f32 %v2074, %v2122
    %v2135 = vsub.f32 %v2075, %v2123
    %v2136 = vsub.f32 %v2076, %v2124
    %v2137 = vsub.f32 %v2077, %v2125
    %v2138 = vsub.f32 %v2078, %v2126
    %v2139 = vsub.f32 %v2079, %v2127
    %v2140 = vsub.f32 %v2080, %v2128
    %v2141 = vmul.f32 %v2129, %v2129
    %v2142 = vmul.f32 %v2130, %v2130
    %v2143 = vmul.f32 %v2131, %v2131
    %v2144 = vmul.f32 %v2132, %v2132
    %v2145 = vmul.f32 %v2133, %v2133
    %v2146 = vmul.f32 %v2134, %v2134
    %v2147 = vmul.f32 %v2135, %v2135
    %v2148 = vmul.f32 %v2136, %v2136
    %v2149 = vmul.f32 %v2137, %v2137
    %v2150 = vmul.f32 %v2138, %v2138
    %v2151 = vmul.f32 %v2139, %v2139
    %v2152 = vmul.f32 %v2140, %v2140
    %v2153 = vsel %vm179, %v2141, 0.0
    %2154 = vadd.xlane.f32.xlu0 %v2153
    %v2155 = vpop.xlane.xlu0 %2154
    %v2156 = vsel %vm179, %v2142, 0.0
    %2157 = vadd.xlane.f32.xlu0 %v2156
    %v2158 = vpop.xlane.xlu0 %2157
    %v2159 = vsel %vm179, %v2143, 0.0
    %2160 = vadd.xlane.f32.xlu0 %v2159
    %v2161 = vpop.xlane.xlu0 %2160
    %v2162 = vsel %vm179, %v2144, 0.0
    %2163 = vadd.xlane.f32.xlu0 %v2162
    %v2164 = vpop.xlane.xlu0 %2163
    %v2165 = vsel %vm179, %v2145, 0.0
    %2166 = vadd.xlane.f32.xlu0 %v2165
    %v2167 = vpop.xlane.xlu0 %2166
    %v2168 = vsel %vm179, %v2146, 0.0
    %2169 = vadd.xlane.f32.xlu0 %v2168
    %v2170 = vpop.xlane.xlu0 %2169
    %v2171 = vsel %vm179, %v2147, 0.0
    %2172 = vadd.xlane.f32.xlu0 %v2171
    %v2173 = vpop.xlane.xlu0 %2172
    %v2174 = vsel %vm179, %v2148, 0.0
    %2175 = vadd.xlane.f32.xlu0 %v2174
    %v2176 = vpop.xlane.xlu0 %2175
    %v2177 = vsel %vm179, %v2149, 0.0
    %2178 = vadd.xlane.f32.xlu0 %v2177
    %v2179 = vpop.xlane.xlu0 %2178
    %v2180 = vsel %vm179, %v2150, 0.0
    %2181 = vadd.xlane.f32.xlu0 %v2180
    %v2182 = vpop.xlane.xlu0 %2181
    %v2183 = vsel %vm179, %v2151, 0.0
    %2184 = vadd.xlane.f32.xlu0 %v2183
    %v2185 = vpop.xlane.xlu0 %2184
    %v2186 = vsel %vm179, %v2152, 0.0
    %2187 = vadd.xlane.f32.xlu0 %v2186
    %v2188 = vpop.xlane.xlu0 %2187
    %v2189 = vmul.f32 %v2155, %v216
    %v2190 = vmul.f32 %v2158, %v216
    %v2191 = vmul.f32 %v2161, %v216
    %v2192 = vmul.f32 %v2164, %v216
    %v2193 = vmul.f32 %v2167, %v216
    %v2194 = vmul.f32 %v2170, %v216
    %v2195 = vmul.f32 %v2173, %v216
    %v2196 = vmul.f32 %v2176, %v216
    %v2197 = vmul.f32 %v2179, %v216
    %v2198 = vmul.f32 %v2182, %v216
    %v2199 = vmul.f32 %v2185, %v216
    %v2200 = vmul.f32 %v2188, %v216
    %v2201 = vadd.f32 %v2189, 1e-05
    %v2202 = vadd.f32 %v2190, 1e-05
    %v2203 = vadd.f32 %v2191, 1e-05
    %v2204 = vadd.f32 %v2192, 1e-05
    %v2205 = vadd.f32 %v2193, 1e-05
    %v2206 = vadd.f32 %v2194, 1e-05
    %v2207 = vadd.f32 %v2195, 1e-05
    %v2208 = vadd.f32 %v2196, 1e-05
    %v2209 = vadd.f32 %v2197, 1e-05
    %v2210 = vadd.f32 %v2198, 1e-05
    %v2211 = vadd.f32 %v2199, 1e-05
    %v2212 = vadd.f32 %v2200, 1e-05
    %v2213 = vrsqrt.pop %v2201
    %v2214 = vrsqrt.pop %v2202
    %v2215 = vrsqrt.pop %v2203
    %v2216 = vrsqrt.pop %v2204
    %v2217 = vrsqrt.pop %v2205
    %v2218 = vrsqrt.pop %v2206
    %v2219 = vrsqrt.pop %v2207
    %v2220 = vrsqrt.pop %v2208
    %v2221 = vrsqrt.pop %v2209
    %v2222 = vrsqrt.pop %v2210
    %v2223 = vrsqrt.pop %v2211
    %v2224 = vrsqrt.pop %v2212
    %v2225 = vmul.f32 %v2129, %v2213
    %v2226 = vmul.f32 %v2130, %v2214
    %v2227 = vmul.f32 %v2131, %v2215
    %v2228 = vmul.f32 %v2132, %v2216
    %v2229 = vmul.f32 %v2133, %v2217
    %v2230 = vmul.f32 %v2134, %v2218
    %v2231 = vmul.f32 %v2135, %v2219
    %v2232 = vmul.f32 %v2136, %v2220
    %v2233 = vmul.f32 %v2137, %v2221
    %v2234 = vmul.f32 %v2138, %v2222
    %v2235 = vmul.f32 %v2139, %v2223
    %v2236 = vmul.f32 %v2140, %v2224
    %v2237 = vpack.c.bf16 %v2226, %v2225
    %v2238 = vpack.c.bf16 %v2228, %v2227
    %v2239 = vpack.c.bf16 %v2230, %v2229
    %v2240 = vpack.c.bf16 %v2232, %v2231
    %v2241 = vpack.c.bf16 %v2234, %v2233
    %v2242 = vpack.c.bf16 %v2236, %v2235
    %v2243 = vld [vmem:[%s1 + $0x68] sm:$0xf]
    %v2244 = vld [vmem:[%s1 + $0x6c] sm:$0xf]
    %v2245 = vld [vmem:[%s1 + $0x70] sm:$0xf]
    %v2246 = vld [vmem:[%s1 + $0x74] sm:$0xf]
    %v2247 = vld [vmem:[%s2 + $0x4] sm:$0x1]
    %v2248 = vlaneseq
    %v2249 = vshrl.u32 %v2248, 7
    %v2250 = vsub.s32 0, %v2249
    %v2251 = vrot.slane %v2247, %v2250
    %v2256 = vunpack.c.l.b16 %v2243
    %v2257 = vunpack.c.l.b16 %v2244
    %v2258 = vunpack.c.l.b16 %v2245
    %v2259 = vunpack.c.l.b16 %v2246
    %v2260 = vpack.c.b16 %v2257, %v2256
    %v2261 = vpack.c.b16 %v2259, %v2258
    %v2265 = vsel %vm179, %v2237, 0
    %v2268 = vsel %vm179, %v2238, 0
    %v2271 = vsel %vm179, %v2239, 0
    %v2274 = vsel %vm179, %v2240, 0
    %v2277 = vsel %vm179, %v2241, 0
    %v2280 = vsel %vm179, %v2242, 0
    %2282 = vmatprep.subr.bf16.mxu0 0
    %2283 = vmatpush1.bf16.msra.mxu0 %v2260
    %2284 = vmatprep.subr.bf16.mxu0 0
    %2285 = vmatpush1.bf16.msra.mxu0 %v2261
    %2286 = vmatprep.subr.bf16.mxu0 0
    %2287 = vmatpush1.bf16.msra.mxu0 0
    %2288 = vmatprep.subr.bf16.mxu0 0
    %2289 = vmatpush1.bf16.msra.mxu0 0
    %2290 = vmatprep.subr.bf16.mxu0 0
    %2291 = vmatpush1.bf16.msra.mxu0 0
    %2292 = vmatprep.subr.bf16.mxu0 0
    %2293 = vmatpush1.bf16.msra.mxu0 0
    %2294 = vmatprep.subr.bf16.mxu0 0
    %2295 = vmatpush1.bf16.msra.mxu0 0
    %2296 = vmatprep.subr.bf16.mxu0 0
    %2297 = vmatpush1.bf16.msra.mxu0 0
    %2298 = vmatprep.subr.bf16.mxu0 0
    %2299 = vmatpush1.bf16.msra.mxu0 0
    %2300 = vmatprep.subr.bf16.mxu0 0
    %2301 = vmatpush1.bf16.msra.mxu0 0
    %2302 = vmatprep.subr.bf16.mxu0 0
    %2303 = vmatpush1.bf16.msra.mxu0 0
    %2304 = vmatprep.subr.bf16.mxu0 0
    %2305 = vmatpush1.bf16.msra.mxu0 0
    %2306 = vmatprep.subr.bf16.mxu0 0
    %2307 = vmatpush1.bf16.msra.mxu0 0
    %2308 = vmatprep.subr.bf16.mxu0 0
    %2309 = vmatpush1.bf16.msra.mxu0 0
    %2310 = vmatprep.subr.bf16.mxu0 0
    %2311 = vmatpush1.bf16.msra.mxu0 0
    %2312 = vmatprep.subr.bf16.mxu0 0
    %2313 = vmatpush1.bf16.msra.mxu0 0
    %2314 = vmatprep.mubr.bf16.mxu0 0
    %2315 = vmatmul.mubr.bf16.gmra.mrb[0].mxu0 %v2265
    %v2316 = vpop.f32.mrb[0].mxu0
    %v2317 = vadd.f32 %v2251, %v2316
    %v2318 = vpop.f32.mrb[0].mxu0
    %v2319 = vpop.f32.mrb[0].mxu0
    %v2320 = vadd.f32 %v2251, %v2319
    %v2321 = vpop.f32.mrb[0].mxu0
    %2322 = vmatprep.mubr.bf16.mxu0 0
    %2323 = vmatmul.mubr.bf16.gmra.mrb[0].mxu0 %v2268
    %v2324 = vpop.f32.mrb[0].mxu0
    %v2325 = vadd.f32 %v2251, %v2324
    %v2326 = vpop.f32.mrb[0].mxu0
    %v2327 = vpop.f32.mrb[0].mxu0
    %v2328 = vadd.f32 %v2251, %v2327
    %v2329 = vpop.f32.mrb[0].mxu0
    %2330 = vmatprep.mubr.bf16.mxu0 0
    %2331 = vmatmul.mubr.bf16.gmra.mrb[0].mxu0 %v2271
    %v2332 = vpop.f32.mrb[0].mxu0
    %v2333 = vadd.f32 %v2251, %v2332
    %v2334 = vpop.f32.mrb[0].mxu0
    %v2335 = vpop.f32.mrb[0].mxu0
    %v2336 = vadd.f32 %v2251, %v2335
    %v2337 = vpop.f32.mrb[0].mxu0
    %2338 = vmatprep.mubr.bf16.mxu0 0
    %2339 = vmatmul.mubr.bf16.gmra.mrb[0].mxu0 %v2274
    %v2340 = vpop.f32.mrb[0].mxu0
    %v2341 = vadd.f32 %v2251, %v2340
    %v2342 = vpop.f32.mrb[0].mxu0
    %v2343 = vpop.f32.mrb[0].mxu0
    %v2344 = vadd.f32 %v2251, %v2343
    %v2345 = vpop.f32.mrb[0].mxu0
    %2346 = vmatprep.mubr.bf16.mxu0 0
    %2347 = vmatmul.mubr.bf16.gmra.mrb[0].mxu0 %v2277
    %v2348 = vpop.f32.mrb[0].mxu0
    %v2349 = vadd.f32 %v2251, %v2348
    %v2350 = vpop.f32.mrb[0].mxu0
    %v2351 = vpop.f32.mrb[0].mxu0
    %v2352 = vadd.f32 %v2251, %v2351
    %v2353 = vpop.f32.mrb[0].mxu0
    %2354 = vmatprep.mubr.bf16.mxu0 0
    %2355 = vmatmul.mubr.bf16.gmra.mrb[0].mxu0 %v2280
    %v2356 = vpop.f32.mrb[0].mxu0
    %v2357 = vadd.f32 %v2251, %v2356
    %v2358 = vpop.f32.mrb[0].mxu0
    %v2359 = vpop.f32.mrb[0].mxu0
    %v2360 = vadd.f32 %v2251, %v2359
    %v2361 = vpop.f32.mrb[0].mxu0
    %2362 = vdwg.mxu0
    %v2363 = vmul.f32 %v2317, %v2317
    %v2364 = vmul.f32 %v2320, %v2320
    %v2365 = vmul.f32 %v2325, %v2325
    %v2366 = vmul.f32 %v2328, %v2328
    %v2367 = vmul.f32 %v2333, %v2333
    %v2368 = vmul.f32 %v2336, %v2336
    %v2369 = vmul.f32 %v2341, %v2341
    %v2370 = vmul.f32 %v2344, %v2344
    %v2371 = vmul.f32 %v2349, %v2349
    %v2372 = vmul.f32 %v2352, %v2352
    %v2373 = vmul.f32 %v2357, %v2357
    %v2374 = vmul.f32 %v2360, %v2360
    %v2375 = vmul.f32 %v2317, %v2363
    %v2376 = vmul.f32 %v2320, %v2364
    %v2377 = vmul.f32 %v2325, %v2365
    %v2378 = vmul.f32 %v2328, %v2366
    %v2379 = vmul.f32 %v2333, %v2367
    %v2380 = vmul.f32 %v2336, %v2368
    %v2381 = vmul.f32 %v2341, %v2369
    %v2382 = vmul.f32 %v2344, %v2370
    %v2383 = vmul.f32 %v2349, %v2371
    %v2384 = vmul.f32 %v2352, %v2372
    %v2385 = vmul.f32 %v2357, %v2373
    %v2386 = vmul.f32 %v2360, %v2374
    %v2387 = vmul.f32 %v2375, 0.044715
    %v2388 = vmul.f32 %v2376, 0.044715
    %v2389 = vmul.f32 %v2377, 0.044715
    %v2390 = vmul.f32 %v2378, 0.044715
    %v2391 = vmul.f32 %v2379, 0.044715
    %v2392 = vmul.f32 %v2380, 0.044715
    %v2393 = vmul.f32 %v2381, 0.044715
    %v2394 = vmul.f32 %v2382, 0.044715
    %v2395 = vmul.f32 %v2383, 0.044715
    %v2396 = vmul.f32 %v2384, 0.044715
    %v2397 = vmul.f32 %v2385, 0.044715
    %v2398 = vmul.f32 %v2386, 0.044715
    %v2399 = vadd.f32 %v2317, %v2387
    %v2400 = vadd.f32 %v2320, %v2388
    %v2401 = vadd.f32 %v2325, %v2389
    %v2402 = vadd.f32 %v2328, %v2390
    %v2403 = vadd.f32 %v2333, %v2391
    %v2404 = vadd.f32 %v2336, %v2392
    %v2405 = vadd.f32 %v2341, %v2393
    %v2406 = vadd.f32 %v2344, %v2394
    %v2407 = vadd.f32 %v2349, %v2395
    %v2408 = vadd.f32 %v2352, %v2396
    %v2409 = vadd.f32 %v2357, %v2397
    %v2410 = vadd.f32 %v2360, %v2398
    %v2411 = vmul.f32 %v2399, 0.7978846
    %v2412 = vmul.f32 %v2400, 0.7978846
    %v2413 = vmul.f32 %v2401, 0.7978846
    %v2414 = vmul.f32 %v2402, 0.7978846
    %v2415 = vmul.f32 %v2403, 0.7978846
    %v2416 = vmul.f32 %v2404, 0.7978846
    %v2417 = vmul.f32 %v2405, 0.7978846
    %v2418 = vmul.f32 %v2406, 0.7978846
    %v2419 = vmul.f32 %v2407, 0.7978846
    %v2420 = vmul.f32 %v2408, 0.7978846
    %v2421 = vmul.f32 %v2409, 0.7978846
    %v2422 = vmul.f32 %v2410, 0.7978846
    %v2423 = vtanh.pop %v2411
    %v2424 = vtanh.pop %v2412
    %v2425 = vtanh.pop %v2413
    %v2426 = vtanh.pop %v2414
    %v2427 = vtanh.pop %v2415
    %v2428 = vtanh.pop %v2416
    %v2429 = vtanh.pop %v2417
    %v2430 = vtanh.pop %v2418
    %v2431 = vtanh.pop %v2419
    %v2432 = vtanh.pop %v2420
    %v2433 = vtanh.pop %v2421
    %v2434 = vtanh.pop %v2422
    %v2435 = vadd.f32 %v2423, 1.0
    %v2436 = vadd.f32 %v2424, 1.0
    %v2437 = vadd.f32 %v2425, 1.0
    %v2438 = vadd.f32 %v2426, 1.0
    %v2439 = vadd.f32 %v2427, 1.0
    %v2440 = vadd.f32 %v2428, 1.0
    %v2441 = vadd.f32 %v2429, 1.0
    %v2442 = vadd.f32 %v2430, 1.0
    %v2443 = vadd.f32 %v2431, 1.0
    %v2444 = vadd.f32 %v2432, 1.0
    %v2445 = vadd.f32 %v2433, 1.0
    %v2446 = vadd.f32 %v2434, 1.0
    %v2447 = vmul.f32 %v2435, 0.5
    %v2448 = vmul.f32 %v2436, 0.5
    %v2449 = vmul.f32 %v2437, 0.5
    %v2450 = vmul.f32 %v2438, 0.5
    %v2451 = vmul.f32 %v2439, 0.5
    %v2452 = vmul.f32 %v2440, 0.5
    %v2453 = vmul.f32 %v2441, 0.5
    %v2454 = vmul.f32 %v2442, 0.5
    %v2455 = vmul.f32 %v2443, 0.5
    %v2456 = vmul.f32 %v2444, 0.5
    %v2457 = vmul.f32 %v2445, 0.5
    %v2458 = vmul.f32 %v2446, 0.5
    %v2459 = vmul.f32 %v2317, %v2447
    %v2460 = vmul.f32 %v2320, %v2448
    %v2461 = vmul.f32 %v2325, %v2449
    %v2462 = vmul.f32 %v2328, %v2450
    %v2463 = vmul.f32 %v2333, %v2451
    %v2464 = vmul.f32 %v2336, %v2452
    %v2465 = vmul.f32 %v2341, %v2453
    %v2466 = vmul.f32 %v2344, %v2454
    %v2467 = vmul.f32 %v2349, %v2455
    %v2468 = vmul.f32 %v2352, %v2456
    %v2469 = vmul.f32 %v2357, %v2457
    %v2470 = vmul.f32 %v2360, %v2458
    %v2471 = vpack.c.bf16 %v2460, %v2459
    %v2472 = vpack.c.bf16 %v2462, %v2461
    %v2473 = vpack.c.bf16 %v2464, %v2463
    %v2474 = vpack.c.bf16 %v2466, %v2465
    %v2475 = vpack.c.bf16 %v2468, %v2467
    %v2476 = vpack.c.bf16 %v2470, %v2469
    %v2477 = vld [vmem:[%s1 + $0x88] sm:$0xf]
    %v2478 = vld [vmem:[%s1 + $0x8c] sm:$0xf]
    %v2479 = vld [vmem:[%s1 + $0x90] sm:$0xf]
    %v2480 = vld [vmem:[%s1 + $0x94] sm:$0xf]
    %v2481 = vld [vmem:[%s1 + $0x98] sm:$0xf]
    %v2482 = vld [vmem:[%s1 + $0x9c] sm:$0xf]
    %v2483 = vld [vmem:[%s1 + $0xa0] sm:$0xf]
    %v2484 = vld [vmem:[%s1 + $0xa4] sm:$0xf]
    %v2485 = vld [vmem:[%s2 + $0x6] sm:$0x1]
    %v2486 = vlaneseq
    %v2487 = vshrl.u32 %v2486, 7
    %v2488 = vsub.s32 0, %v2487
    %v2489 = vrot.slane %v2485, %v2488
    %v2498 = vunpack.c.l.b16 %v2477
    %v2499 = vunpack.c.l.b16 %v2478
    %v2500 = vunpack.c.l.b16 %v2479
    %v2501 = vunpack.c.l.b16 %v2480
    %v2502 = vunpack.c.l.b16 %v2481
    %v2503 = vunpack.c.l.b16 %v2482
    %v2504 = vunpack.c.l.b16 %v2483
    %v2505 = vunpack.c.l.b16 %v2484
    %v2506 = vpack.c.b16 %v2499, %v2498
    %v2507 = vpack.c.b16 %v2501, %v2500
    %v2508 = vpack.c.b16 %v2503, %v2502
    %v2509 = vpack.c.b16 %v2505, %v2504
    %vm2514 = vcmask 523264
    %v2516 = vsel %vm2514, %v2471, 0
    %v2519 = vsel %vm2514, %v2472, 0
    %v2522 = vsel %vm2514, %v2473, 0
    %v2525 = vsel %vm2514, %v2474, 0
    %v2528 = vsel %vm2514, %v2475, 0
    %v2531 = vsel %vm2514, %v2476, 0
    %2533 = vmatprep.subr.bf16.mxu0 0
    %2534 = vmatpush1.bf16.msra.mxu0 %v2506
    %2535 = vmatprep.subr.bf16.mxu0 0
    %2536 = vmatpush1.bf16.msra.mxu0 %v2507
    %2537 = vmatprep.subr.bf16.mxu0 0
    %2538 = vmatpush1.bf16.msra.mxu0 %v2508
    %2539 = vmatprep.subr.bf16.mxu0 0
    %2540 = vmatpush1.bf16.msra.mxu0 %v2509
    %2541 = vmatprep.subr.bf16.mxu0 0
    %2542 = vmatpush1.bf16.msra.mxu0 0
    %2543 = vmatprep.subr.bf16.mxu0 0
    %2544 = vmatpush1.bf16.msra.mxu0 0
    %2545 = vmatprep.subr.bf16.mxu0 0
    %2546 = vmatpush1.bf16.msra.mxu0 0
    %2547 = vmatprep.subr.bf16.mxu0 0
    %2548 = vmatpush1.bf16.msra.mxu0 0
    %2549 = vmatprep.subr.bf16.mxu0 0
    %2550 = vmatpush1.bf16.msra.mxu0 0
    %2551 = vmatprep.subr.bf16.mxu0 0
    %2552 = vmatpush1.bf16.msra.mxu0 0
    %2553 = vmatprep.subr.bf16.mxu0 0
    %2554 = vmatpush1.bf16.msra.mxu0 0
    %2555 = vmatprep.subr.bf16.mxu0 0
    %2556 = vmatpush1.bf16.msra.mxu0 0
    %2557 = vmatprep.subr.bf16.mxu0 0
    %2558 = vmatpush1.bf16.msra.mxu0 0
    %2559 = vmatprep.subr.bf16.mxu0 0
    %2560 = vmatpush1.bf16.msra.mxu0 0
    %2561 = vmatprep.subr.bf16.mxu0 0
    %2562 = vmatpush1.bf16.msra.mxu0 0
    %2563 = vmatprep.subr.bf16.mxu0 0
    %2564 = vmatpush1.bf16.msra.mxu0 0
    %2565 = vmatprep.mubr.bf16.mxu0 0
    %2566 = vmatmul.mubr.bf16.gmra.mrb[0].mxu0 %v2516
    %v2567 = vpop.f32.mrb[0].mxu0
    %v2568 = vadd.f32 %v2489, %v2567
    %v2569 = vpop.f32.mrb[0].mxu0
    %v2570 = vpop.f32.mrb[0].mxu0
    %v2571 = vadd.f32 %v2489, %v2570
    %v2572 = vpop.f32.mrb[0].mxu0
    %2573 = vmatprep.mubr.bf16.mxu0 0
    %2574 = vmatmul.mubr.bf16.gmra.mrb[0].mxu0 %v2519
    %v2575 = vpop.f32.mrb[0].mxu0
    %v2576 = vadd.f32 %v2489, %v2575
    %v2577 = vpop.f32.mrb[0].mxu0
    %v2578 = vpop.f32.mrb[0].mxu0
    %v2579 = vadd.f32 %v2489, %v2578
    %v2580 = vpop.f32.mrb[0].mxu0
    %2581 = vmatprep.mubr.bf16.mxu0 0
    %2582 = vmatmul.mubr.bf16.gmra.mrb[0].mxu0 %v2522
    %v2583 = vpop.f32.mrb[0].mxu0
    %v2584 = vadd.f32 %v2489, %v2583
    %v2585 = vpop.f32.mrb[0].mxu0
    %v2586 = vpop.f32.mrb[0].mxu0
    %v2587 = vadd.f32 %v2489, %v2586
    %v2588 = vpop.f32.mrb[0].mxu0
    %2589 = vmatprep.mubr.bf16.mxu0 0
    %2590 = vmatmul.mubr.bf16.gmra.mrb[0].mxu0 %v2525
    %v2591 = vpop.f32.mrb[0].mxu0
    %v2592 = vadd.f32 %v2489, %v2591
    %v2593 = vpop.f32.mrb[0].mxu0
    %v2594 = vpop.f32.mrb[0].mxu0
    %v2595 = vadd.f32 %v2489, %v2594
    %v2596 = vpop.f32.mrb[0].mxu0
    %2597 = vmatprep.mubr.bf16.mxu0 0
    %2598 = vmatmul.mubr.bf16.gmra.mrb[0].mxu0 %v2528
    %v2599 = vpop.f32.mrb[0].mxu0
    %v2600 = vadd.f32 %v2489, %v2599
    %v2601 = vpop.f32.mrb[0].mxu0
    %v2602 = vpop.f32.mrb[0].mxu0
    %v2603 = vadd.f32 %v2489, %v2602
    %v2604 = vpop.f32.mrb[0].mxu0
    %2605 = vmatprep.mubr.bf16.mxu0 0
    %2606 = vmatmul.mubr.bf16.gmra.mrb[0].mxu0 %v2531
    %v2607 = vpop.f32.mrb[0].mxu0
    %v2608 = vadd.f32 %v2489, %v2607
    %v2609 = vpop.f32.mrb[0].mxu0
    %v2610 = vpop.f32.mrb[0].mxu0
    %v2611 = vadd.f32 %v2489, %v2610
    %v2612 = vpop.f32.mrb[0].mxu0
    %2613 = vdwg.mxu0
    %v2614 = vadd.f32 %v2069, %v2568
    %v2615 = vadd.f32 %v2070, %v2571
    %v2616 = vadd.f32 %v2071, %v2576
    %v2617 = vadd.f32 %v2072, %v2579
    %v2618 = vadd.f32 %v2073, %v2584
    %v2619 = vadd.f32 %v2074, %v2587
    %v2620 = vadd.f32 %v2075, %v2592
    %v2621 = vadd.f32 %v2076, %v2595
    %v2622 = vadd.f32 %v2077, %v2600
    %v2623 = vadd.f32 %v2078, %v2603
    %v2624 = vadd.f32 %v2079, %v2608
    %v2625 = vadd.f32 %v2080, %v2611
    %v2626 = vsel %vm179, %v2614, 0.0
    %2627 = vadd.xlane.f32.xlu0 %v2626
    %v2628 = vpop.xlane.xlu0 %2627
    %v2629 = vsel %vm179, %v2615, 0.0
    %2630 = vadd.xlane.f32.xlu0 %v2629
    %v2631 = vpop.xlane.xlu0 %2630
    %v2632 = vsel %vm179, %v2616, 0.0
    %2633 = vadd.xlane.f32.xlu0 %v2632
    %v2634 = vpop.xlane.xlu0 %2633
    %v2635 = vsel %vm179, %v2617, 0.0
    %2636 = vadd.xlane.f32.xlu0 %v2635
    %v2637 = vpop.xlane.xlu0 %2636
    %v2638 = vsel %vm179, %v2618, 0.0
    %2639 = vadd.xlane.f32.xlu0 %v2638
    %v2640 = vpop.xlane.xlu0 %2639
    %v2641 = vsel %vm179, %v2619, 0.0
    %2642 = vadd.xlane.f32.xlu0 %v2641
    %v2643 = vpop.xlane.xlu0 %2642
    %v2644 = vsel %vm179, %v2620, 0.0
    %2645 = vadd.xlane.f32.xlu0 %v2644
    %v2646 = vpop.xlane.xlu0 %2645
    %v2647 = vsel %vm179, %v2621, 0.0
    %2648 = vadd.xlane.f32.xlu0 %v2647
    %v2649 = vpop.xlane.xlu0 %2648
    %v2650 = vsel %vm179, %v2622, 0.0
    %2651 = vadd.xlane.f32.xlu0 %v2650
    %v2652 = vpop.xlane.xlu0 %2651
    %v2653 = vsel %vm179, %v2623, 0.0
    %2654 = vadd.xlane.f32.xlu0 %v2653
    %v2655 = vpop.xlane.xlu0 %2654
    %v2656 = vsel %vm179, %v2624, 0.0
    %2657 = vadd.xlane.f32.xlu0 %v2656
    %v2658 = vpop.xlane.xlu0 %2657
    %v2659 = vsel %vm179, %v2625, 0.0
    %2660 = vadd.xlane.f32.xlu0 %v2659
    %v2661 = vpop.xlane.xlu0 %2660
    %v2662 = vmul.f32 %v2628, %v216
    %v2663 = vmul.f32 %v2631, %v216
    %v2664 = vmul.f32 %v2634, %v216
    %v2665 = vmul.f32 %v2637, %v216
    %v2666 = vmul.f32 %v2640, %v216
    %v2667 = vmul.f32 %v2643, %v216
    %v2668 = vmul.f32 %v2646, %v216
    %v2669 = vmul.f32 %v2649, %v216
    %v2670 = vmul.f32 %v2652, %v216
    %v2671 = vmul.f32 %v2655, %v216
    %v2672 = vmul.f32 %v2658, %v216
    %v2673 = vmul.f32 %v2661, %v216
    %v2674 = vsub.f32 %v2614, %v2662
    %v2675 = vsub.f32 %v2615, %v2663
    %v2676 = vsub.f32 %v2616, %v2664
    %v2677 = vsub.f32 %v2617, %v2665
    %v2678 = vsub.f32 %v2618, %v2666
    %v2679 = vsub.f32 %v2619, %v2667
    %v2680 = vsub.f32 %v2620, %v2668
    %v2681 = vsub.f32 %v2621, %v2669
    %v2682 = vsub.f32 %v2622, %v2670
    %v2683 = vsub.f32 %v2623, %v2671
    %v2684 = vsub.f32 %v2624, %v2672
    %v2685 = vsub.f32 %v2625, %v2673
    %v2686 = vmul.f32 %v2674, %v2674
    %v2687 = vmul.f32 %v2675, %v2675
    %v2688 = vmul.f32 %v2676, %v2676
    %v2689 = vmul.f32 %v2677, %v2677
    %v2690 = vmul.f32 %v2678, %v2678
    %v2691 = vmul.f32 %v2679, %v2679
    %v2692 = vmul.f32 %v2680, %v2680
    %v2693 = vmul.f32 %v2681, %v2681
    %v2694 = vmul.f32 %v2682, %v2682
    %v2695 = vmul.f32 %v2683, %v2683
    %v2696 = vmul.f32 %v2684, %v2684
    %v2697 = vmul.f32 %v2685, %v2685
    %v2698 = vsel %vm179, %v2686, 0.0
    %2699 = vadd.xlane.f32.xlu0 %v2698
    %v2700 = vpop.xlane.xlu0 %2699
    %v2701 = vsel %vm179, %v2687, 0.0
    %2702 = vadd.xlane.f32.xlu0 %v2701
    %v2703 = vpop.xlane.xlu0 %2702
    %v2704 = vsel %vm179, %v2688, 0.0
    %2705 = vadd.xlane.f32.xlu0 %v2704
    %v2706 = vpop.xlane.xlu0 %2705
    %v2707 = vsel %vm179, %v2689, 0.0
    %2708 = vadd.xlane.f32.xlu0 %v2707
    %v2709 = vpop.xlane.xlu0 %2708
    %v2710 = vsel %vm179, %v2690, 0.0
    %2711 = vadd.xlane.f32.xlu0 %v2710
    %v2712 = vpop.xlane.xlu0 %2711
    %v2713 = vsel %vm179, %v2691, 0.0
    %2714 = vadd.xlane.f32.xlu0 %v2713
    %v2715 = vpop.xlane.xlu0 %2714
    %v2716 = vsel %vm179, %v2692, 0.0
    %2717 = vadd.xlane.f32.xlu0 %v2716
    %v2718 = vpop.xlane.xlu0 %2717
    %v2719 = vsel %vm179, %v2693, 0.0
    %2720 = vadd.xlane.f32.xlu0 %v2719
    %v2721 = vpop.xlane.xlu0 %2720
    %v2722 = vsel %vm179, %v2694, 0.0
    %2723 = vadd.xlane.f32.xlu0 %v2722
    %v2724 = vpop.xlane.xlu0 %2723
    %v2725 = vsel %vm179, %v2695, 0.0
    %2726 = vadd.xlane.f32.xlu0 %v2725
    %v2727 = vpop.xlane.xlu0 %2726
    %v2728 = vsel %vm179, %v2696, 0.0
    %2729 = vadd.xlane.f32.xlu0 %v2728
    %v2730 = vpop.xlane.xlu0 %2729
    %v2731 = vsel %vm179, %v2697, 0.0
    %2732 = vadd.xlane.f32.xlu0 %v2731
    %v2733 = vpop.xlane.xlu0 %2732
    %v2734 = vmul.f32 %v2700, %v216
    %v2735 = vmul.f32 %v2703, %v216
    %v2736 = vmul.f32 %v2706, %v216
    %v2737 = vmul.f32 %v2709, %v216
    %v2738 = vmul.f32 %v2712, %v216
    %v2739 = vmul.f32 %v2715, %v216
    %v2740 = vmul.f32 %v2718, %v216
    %v2741 = vmul.f32 %v2721, %v216
    %v2742 = vmul.f32 %v2724, %v216
    %v2743 = vmul.f32 %v2727, %v216
    %v2744 = vmul.f32 %v2730, %v216
    %v2745 = vmul.f32 %v2733, %v216
    %v2746 = vadd.f32 %v2734, 1e-05
    %v2747 = vadd.f32 %v2735, 1e-05
    %v2748 = vadd.f32 %v2736, 1e-05
    %v2749 = vadd.f32 %v2737, 1e-05
    %v2750 = vadd.f32 %v2738, 1e-05
    %v2751 = vadd.f32 %v2739, 1e-05
    %v2752 = vadd.f32 %v2740, 1e-05
    %v2753 = vadd.f32 %v2741, 1e-05
    %v2754 = vadd.f32 %v2742, 1e-05
    %v2755 = vadd.f32 %v2743, 1e-05
    %v2756 = vadd.f32 %v2744, 1e-05
    %v2757 = vadd.f32 %v2745, 1e-05
    %v2758 = vrsqrt.pop %v2746
    %v2759 = vrsqrt.pop %v2747
    %v2760 = vrsqrt.pop %v2748
    %v2761 = vrsqrt.pop %v2749
    %v2762 = vrsqrt.pop %v2750
    %v2763 = vrsqrt.pop %v2751
    %v2764 = vrsqrt.pop %v2752
    %v2765 = vrsqrt.pop %v2753
    %v2766 = vrsqrt.pop %v2754
    %v2767 = vrsqrt.pop %v2755
    %v2768 = vrsqrt.pop %v2756
    %v2769 = vrsqrt.pop %v2757
    %v2770 = vmul.f32 %v2674, %v2758
    %v2771 = vmul.f32 %v2675, %v2759
    %v2772 = vmul.f32 %v2676, %v2760
    %v2773 = vmul.f32 %v2677, %v2761
    %v2774 = vmul.f32 %v2678, %v2762
    %v2775 = vmul.f32 %v2679, %v2763
    %v2776 = vmul.f32 %v2680, %v2764
    %v2777 = vmul.f32 %v2681, %v2765
    %v2778 = vmul.f32 %v2682, %v2766
    %v2779 = vmul.f32 %v2683, %v2767
    %v2780 = vmul.f32 %v2684, %v2768
    %v2781 = vmul.f32 %v2685, %v2769
    %v2782 = vpack.c.bf16 %v2771, %v2770
    %v2783 = vpack.c.bf16 %v2773, %v2772
    %v2784 = vpack.c.bf16 %v2775, %v2774
    %v2785 = vpack.c.bf16 %v2777, %v2776
    %v2786 = vpack.c.bf16 %v2779, %v2778
    %v2787 = vpack.c.bf16 %v2781, %v2780
    %v2788 = vld [vmem:[%s1 + $0x38] sm:$0xf]
    %v2789 = vld [vmem:[%s1 + $0x3c] sm:$0xf]
    %v2790 = vld [vmem:[%s1 + $0x40] sm:$0xf]
    %v2791 = vld [vmem:[%s1 + $0x44] sm:$0xf]
    %v2792 = vld [vmem:[%s2 + $0x1] sm:$0x1]
    %v2793 = vlaneseq
    %v2794 = vshrl.u32 %v2793, 7
    %v2795 = vsub.s32 0, %v2794
    %v2796 = vrot.slane %v2792, %v2795
    %v2801 = vunpack.c.l.b16 %v2788
    %v2802 = vunpack.c.l.b16 %v2789
    %v2803 = vunpack.c.l.b16 %v2790
    %v2804 = vunpack.c.l.b16 %v2791
    %v2805 = vpack.c.b16 %v2802, %v2801
    %v2806 = vpack.c.b16 %v2804, %v2803
    %v2810 = vsel %vm179, %v2782, 0
    %v2813 = vsel %vm179, %v2783, 0
    %v2816 = vsel %vm179, %v2784, 0
    %v2819 = vsel %vm179, %v2785, 0
    %v2822 = vsel %vm179, %v2786, 0
    %v2825 = vsel %vm179, %v2787, 0
    %2827 = vmatprep.subr.bf16.mxu0 0
    %2828 = vmatpush1.bf16.msra.mxu0 %v2805
    %2829 = vmatprep.subr.bf16.mxu0 0
    %2830 = vmatpush1.bf16.msra.mxu0 %v2806
    %2831 = vmatprep.subr.bf16.mxu0 0
    %2832 = vmatpush1.bf16.msra.mxu0 0
    %2833 = vmatprep.subr.bf16.mxu0 0
    %2834 = vmatpush1.bf16.msra.mxu0 0
    %2835 = vmatprep.subr.bf16.mxu0 0
    %2836 = vmatpush1.bf16.msra.mxu0 0
    %2837 = vmatprep.subr.bf16.mxu0 0
    %2838 = vmatpush1.bf16.msra.mxu0 0
    %2839 = vmatprep.subr.bf16.mxu0 0
    %2840 = vmatpush1.bf16.msra.mxu0 0
    %2841 = vmatprep.subr.bf16.mxu0 0
    %2842 = vmatpush1.bf16.msra.mxu0 0
    %2843 = vmatprep.subr.bf16.mxu0 0
    %2844 = vmatpush1.bf16.msra.mxu0 0
    %2845 = vmatprep.subr.bf16.mxu0 0
    %2846 = vmatpush1.bf16.msra.mxu0 0
    %2847 = vmatprep.subr.bf16.mxu0 0
    %2848 = vmatpush1.bf16.msra.mxu0 0
    %2849 = vmatprep.subr.bf16.mxu0 0
    %2850 = vmatpush1.bf16.msra.mxu0 0
    %2851 = vmatprep.subr.bf16.mxu0 0
    %2852 = vmatpush1.bf16.msra.mxu0 0
    %2853 = vmatprep.subr.bf16.mxu0 0
    %2854 = vmatpush1.bf16.msra.mxu0 0
    %2855 = vmatprep.subr.bf16.mxu0 0
    %2856 = vmatpush1.bf16.msra.mxu0 0
    %2857 = vmatprep.subr.bf16.mxu0 0
    %2858 = vmatpush1.bf16.msra.mxu0 0
    %2859 = vmatprep.mubr.bf16.mxu0 0
    %2860 = vmatmul.mubr.bf16.gmra.mrb[0].mxu0 %v2810
    %v2861 = vpop.f32.mrb[0].mxu0
    %v2862 = vadd.f32 %v2796, %v2861
    %v2863 = vpop.f32.mrb[0].mxu0
    %v2864 = vpop.f32.mrb[0].mxu0
    %v2865 = vadd.f32 %v2796, %v2864
    %v2866 = vpop.f32.mrb[0].mxu0
    %2867 = vmatprep.mubr.bf16.mxu0 0
    %2868 = vmatmul.mubr.bf16.gmra.mrb[0].mxu0 %v2813
    %v2869 = vpop.f32.mrb[0].mxu0
    %v2870 = vadd.f32 %v2796, %v2869
    %v2871 = vpop.f32.mrb[0].mxu0
    %v2872 = vpop.f32.mrb[0].mxu0
    %v2873 = vadd.f32 %v2796, %v2872
    %v2874 = vpop.f32.mrb[0].mxu0
    %2875 = vmatprep.mubr.bf16.mxu0 0
    %2876 = vmatmul.mubr.bf16.gmra.mrb[0].mxu0 %v2816
    %v2877 = vpop.f32.mrb[0].mxu0
    %v2878 = vadd.f32 %v2796, %v2877
    %v2879 = vpop.f32.mrb[0].mxu0
    %v2880 = vpop.f32.mrb[0].mxu0
    %v2881 = vadd.f32 %v2796, %v2880
    %v2882 = vpop.f32.mrb[0].mxu0
    %2883 = vmatprep.mubr.bf16.mxu0 0
    %2884 = vmatmul.mubr.bf16.gmra.mrb[0].mxu0 %v2819
    %v2885 = vpop.f32.mrb[0].mxu0
    %v2886 = vadd.f32 %v2796, %v2885
    %v2887 = vpop.f32.mrb[0].mxu0
    %v2888 = vpop.f32.mrb[0].mxu0
    %v2889 = vadd.f32 %v2796, %v2888
    %v2890 = vpop.f32.mrb[0].mxu0
    %2891 = vmatprep.mubr.bf16.mxu0 0
    %2892 = vmatmul.mubr.bf16.gmra.mrb[0].mxu0 %v2822
    %v2893 = vpop.f32.mrb[0].mxu0
    %v2894 = vadd.f32 %v2796, %v2893
    %v2895 = vpop.f32.mrb[0].mxu0
    %v2896 = vpop.f32.mrb[0].mxu0
    %v2897 = vadd.f32 %v2796, %v2896
    %v2898 = vpop.f32.mrb[0].mxu0
    %2899 = vmatprep.mubr.bf16.mxu0 0
    %2900 = vmatmul.mubr.bf16.gmra.mrb[0].mxu0 %v2825
    %v2901 = vpop.f32.mrb[0].mxu0
    %v2902 = vadd.f32 %v2796, %v2901
    %v2903 = vpop.f32.mrb[0].mxu0
    %v2904 = vpop.f32.mrb[0].mxu0
    %v2905 = vadd.f32 %v2796, %v2904
    %v2906 = vpop.f32.mrb[0].mxu0
    %2907 = vdwg.mxu0
    %2920 = vrot.lane.b32.xlu0 %v2862, 112
    %v2921 = vpop.permute.xlu0 %2920
    %2922 = vrot.lane.b32.xlu0 %v2865, 112
    %v2923 = vpop.permute.xlu0 %2922
    %2924 = vrot.lane.b32.xlu0 %v2870, 112
    %v2925 = vpop.permute.xlu0 %2924
    %2926 = vrot.lane.b32.xlu0 %v2873, 112
    %v2927 = vpop.permute.xlu0 %2926
    %2928 = vrot.lane.b32.xlu0 %v2878, 112
    %v2929 = vpop.permute.xlu0 %2928
    %2930 = vrot.lane.b32.xlu0 %v2881, 112
    %v2931 = vpop.permute.xlu0 %2930
    %2932 = vrot.lane.b32.xlu0 %v2886, 112
    %v2933 = vpop.permute.xlu0 %2932
    %2934 = vrot.lane.b32.xlu0 %v2889, 112
    %v2935 = vpop.permute.xlu0 %2934
    %2936 = vrot.lane.b32.xlu0 %v2894, 112
    %v2937 = vpop.permute.xlu0 %2936
    %2938 = vrot.lane.b32.xlu0 %v2897, 112
    %v2939 = vpop.permute.xlu0 %2938
    %2940 = vrot.lane.b32.xlu0 %v2902, 112
    %v2941 = vpop.permute.xlu0 %2940
    %2942 = vrot.lane.b32.xlu0 %v2905, 112
    %v2943 = vpop.permute.xlu0 %2942
    %v2956 = vpack.c.bf16 %v2865, %v2862
    %v2957 = vpack.c.bf16 %v2870, %v2870
    %v2958 = vpack.c.bf16 %v2878, %v2873
    %v2959 = vpack.c.bf16 %v2881, %v2881
    %v2960 = vpack.c.bf16 %v2889, %v2886
    %v2961 = vpack.c.bf16 %v2894, %v2894
    %v2962 = vpack.c.bf16 %v2902, %v2897
    %v2963 = vpack.c.bf16 %v2905, %v2905
    %v2964 = vpack.c.bf16 %v2923, %v2921
    %v2965 = vpack.c.bf16 %v2925, %v2925
    %v2966 = vpack.c.bf16 %v2929, %v2927
    %v2967 = vpack.c.bf16 %v2931, %v2931
    %v2968 = vpack.c.bf16 %v2935, %v2933
    %v2969 = vpack.c.bf16 %v2937, %v2937
    %v2970 = vpack.c.bf16 %v2941, %v2939
    %v2971 = vpack.c.bf16 %v2943, %v2943
    %2974 = vrot.lane.b32.xlu0 %v2956, 96
    %v2975 = vpop.permute.xlu0 %2974
    %2976 = vrot.lane.b32.xlu0 %v2957, 96
    %v2977 = vpop.permute.xlu0 %2976
    %v2979 = vsel %vm533, %v2956, 0
    %v2982 = vsel %vm533, %v2957, 0
    %v2985 = vsel %vm533, %v2975, 0
    %v2988 = vsel %vm533, %v2977, 0
    %2990 = vmatprep.subr.bf16.mxu0 0
    %2991 = vmatpush1.bf16.xpose.msra.mxu0 %v2985
    %2992 = vmatprep.subr.bf16.mxu0 0
    %2993 = vmatpush1.bf16.xpose.msra.mxu0 %v2988
    %2994 = vmatprep.subr.bf16.mxu0 0
    %2995 = vmatpush1.bf16.xpose.msra.mxu0 0
    %2996 = vmatprep.subr.bf16.mxu0 0
    %2997 = vmatpush1.bf16.xpose.msra.mxu0 0
    %2998 = vmatprep.subr.bf16.mxu0 0
    %2999 = vmatpush1.bf16.xpose.msra.mxu0 0
    %3000 = vmatprep.subr.bf16.mxu0 0
    %3001 = vmatpush1.bf16.xpose.msra.mxu0 0
    %3002 = vmatprep.subr.bf16.mxu0 0
    %3003 = vmatpush1.bf16.xpose.msra.mxu0 0
    %3004 = vmatprep.subr.bf16.mxu0 0
    %3005 = vmatpush1.bf16.xpose.msra.mxu0 0
    %3006 = vmatprep.subr.bf16.mxu0 0
    %3007 = vmatpush1.bf16.xpose.msra.mxu0 0
    %3008 = vmatprep.subr.bf16.mxu0 0
    %3009 = vmatpush1.bf16.xpose.msra.mxu0 0
    %3010 = vmatprep.subr.bf16.mxu0 0
    %3011 = vmatpush1.bf16.xpose.msra.mxu0 0
    %3012 = vmatprep.subr.bf16.mxu0 0
    %3013 = vmatpush1.bf16.xpose.msra.mxu0 0
    %3014 = vmatprep.subr.bf16.mxu0 0
    %3015 = vmatpush1.bf16.xpose.msra.mxu0 0
    %3016 = vmatprep.subr.bf16.mxu0 0
    %3017 = vmatpush1.bf16.xpose.msra.mxu0 0
    %3018 = vmatprep.subr.bf16.mxu0 0
    %3019 = vmatpush1.bf16.xpose.msra.mxu0 0
    %3020 = vmatprep.subr.bf16.mxu0 0
    %3021 = vmatpush1.bf16.xpose.msra.mxu0 0
    %3022 = vmatprep.mubr.bf16.mxu0 0
    %3023 = vmatmul.mubr.bf16.gmra.mrb[0].mxu0 %v2979
    %v3024 = vpop.f32.mrb[0].mxu0
    %v3025 = vadd.f32 0.0, %v3024
    %v3026 = vpop.f32.mrb[0].mxu0
    %v3027 = vpop.f32.mrb[0].mxu0
    %v3028 = vadd.f32 0.0, %v3027
    %v3029 = vpop.f32.mrb[0].mxu0
    %3030 = vmatprep.mubr.bf16.mxu0 0
    %3031 = vmatmul.mubr.bf16.gmra.mrb[0].mxu0 %v2982
    %v3032 = vpop.f32.mrb[0].mxu0
    %v3033 = vadd.f32 0.0, %v3032
    %v3034 = vpop.f32.mrb[0].mxu0
    %v3035 = vpop.f32.mrb[0].mxu0
    %v3036 = vpop.f32.mrb[0].mxu0
    %3037 = vdwg.mxu0
    %3040 = vrot.lane.b32.xlu0 %v2958, 96
    %v3041 = vpop.permute.xlu0 %3040
    %3042 = vrot.lane.b32.xlu0 %v2959, 96
    %v3043 = vpop.permute.xlu0 %3042
    %v3045 = vsel %vm533, %v2958, 0
    %v3048 = vsel %vm533, %v2959, 0
    %v3051 = vsel %vm533, %v3041, 0
    %v3054 = vsel %vm533, %v3043, 0
    %3056 = vmatprep.subr.bf16.mxu0 0
    %3057 = vmatpush1.bf16.xpose.msra.mxu0 %v3051
    %3058 = vmatprep.subr.bf16.mxu0 0
    %3059 = vmatpush1.bf16.xpose.msra.mxu0 %v3054
    %3060 = vmatprep.subr.bf16.mxu0 0
    %3061 = vmatpush1.bf16.xpose.msra.mxu0 0
    %3062 = vmatprep.subr.bf16.mxu0 0
    %3063 = vmatpush1.bf16.xpose.msra.mxu0 0
    %3064 = vmatprep.subr.bf16.mxu0 0
    %3065 = vmatpush1.bf16.xpose.msra.mxu0 0
    %3066 = vmatprep.subr.bf16.mxu0 0
    %3067 = vmatpush1.bf16.xpose.msra.mxu0 0
    %3068 = vmatprep.subr.bf16.mxu0 0
    %3069 = vmatpush1.bf16.xpose.msra.mxu0 0
    %3070 = vmatprep.subr.bf16.mxu0 0
    %3071 = vmatpush1.bf16.xpose.msra.mxu0 0
    %3072 = vmatprep.subr.bf16.mxu0 0
    %3073 = vmatpush1.bf16.xpose.msra.mxu0 0
    %3074 = vmatprep.subr.bf16.mxu0 0
    %3075 = vmatpush1.bf16.xpose.msra.mxu0 0
    %3076 = vmatprep.subr.bf16.mxu0 0
    %3077 = vmatpush1.bf16.xpose.msra.mxu0 0
    %3078 = vmatprep.subr.bf16.mxu0 0
    %3079 = vmatpush1.bf16.xpose.msra.mxu0 0
    %3080 = vmatprep.subr.bf16.mxu0 0
    %3081 = vmatpush1.bf16.xpose.msra.mxu0 0
    %3082 = vmatprep.subr.bf16.mxu0 0
    %3083 = vmatpush1.bf16.xpose.msra.mxu0 0
    %3084 = vmatprep.subr.bf16.mxu0 0
    %3085 = vmatpush1.bf16.xpose.msra.mxu0 0
    %3086 = vmatprep.subr.bf16.mxu0 0
    %3087 = vmatpush1.bf16.xpose.msra.mxu0 0
    %3088 = vmatprep.mubr.bf16.mxu0 0
    %3089 = vmatmul.mubr.bf16.gmra.mrb[0].mxu0 %v3045
    %v3090 = vpop.f32.mrb[0].mxu0
    %v3091 = vadd.f32 0.0, %v3090
    %v3092 = vpop.f32.mrb[0].mxu0
    %v3093 = vpop.f32.mrb[0].mxu0
    %v3094 = vadd.f32 0.0, %v3093
    %v3095 = vpop.f32.mrb[0].mxu0
    %3096 = vmatprep.mubr.bf16.mxu0 0
    %3097 = vmatmul.mubr.bf16.gmra.mrb[0].mxu0 %v3048
    %v3098 = vpop.f32.mrb[0].mxu0
    %v3099 = vadd.f32 0.0, %v3098
    %v3100 = vpop.f32.mrb[0].mxu0
    %v3101 = vpop.f32.mrb[0].mxu0
    %v3102 = vpop.f32.mrb[0].mxu0
    %3103 = vdwg.mxu0
    %3106 = vrot.lane.b32.xlu0 %v2960, 96
    %v3107 = vpop.permute.xlu0 %3106
    %3108 = vrot.lane.b32.xlu0 %v2961, 96
    %v3109 = vpop.permute.xlu0 %3108
    %v3111 = vsel %vm533, %v2960, 0
    %v3114 = vsel %vm533, %v2961, 0
    %v3117 = vsel %vm533, %v3107, 0
    %v3120 = vsel %vm533, %v3109, 0
    %3122 = vmatprep.subr.bf16.mxu0 0
    %3123 = vmatpush1.bf16.xpose.msra.mxu0 %v3117
    %3124 = vmatprep.subr.bf16.mxu0 0
    %3125 = vmatpush1.bf16.xpose.msra.mxu0 %v3120
    %3126 = vmatprep.subr.bf16.mxu0 0
    %3127 = vmatpush1.bf16.xpose.msra.mxu0 0
    %3128 = vmatprep.subr.bf16.mxu0 0
    %3129 = vmatpush1.bf16.xpose.msra.mxu0 0
    %3130 = vmatprep.subr.bf16.mxu0 0
    %3131 = vmatpush1.bf16.xpose.msra.mxu0 0
    %3132 = vmatprep.subr.bf16.mxu0 0
    %3133 = vmatpush1.bf16.xpose.msra.mxu0 0
    %3134 = vmatprep.subr.bf16.mxu0 0
    %3135 = vmatpush1.bf16.xpose.msra.mxu0 0
    %3136 = vmatprep.subr.bf16.mxu0 0
    %3137 = vmatpush1.bf16.xpose.msra.mxu0 0
    %3138 = vmatprep.subr.bf16.mxu0 0
    %3139 = vmatpush1.bf16.xpose.msra.mxu0 0
    %3140 = vmatprep.subr.bf16.mxu0 0
    %3141 = vmatpush1.bf16.xpose.msra.mxu0 0
    %3142 = vmatprep.subr.bf16.mxu0 0
    %3143 = vmatpush1.bf16.xpose.msra.mxu0 0
    %3144 = vmatprep.subr.bf16.mxu0 0
    %3145 = vmatpush1.bf16.xpose.msra.mxu0 0
    %3146 = vmatprep.subr.bf16.mxu0 0
    %3147 = vmatpush1.bf16.xpose.msra.mxu0 0
    %3148 = vmatprep.subr.bf16.mxu0 0
    %3149 = vmatpush1.bf16.xpose.msra.mxu0 0
    %3150 = vmatprep.subr.bf16.mxu0 0
    %3151 = vmatpush1.bf16.xpose.msra.mxu0 0
    %3152 = vmatprep.subr.bf16.mxu0 0
    %3153 = vmatpush1.bf16.xpose.msra.mxu0 0
    %3154 = vmatprep.mubr.bf16.mxu0 0
    %3155 = vmatmul.mubr.bf16.gmra.mrb[0].mxu0 %v3111
    %v3156 = vpop.f32.mrb[0].mxu0
    %v3157 = vadd.f32 0.0, %v3156
    %v3158 = vpop.f32.mrb[0].mxu0
    %v3159 = vpop.f32.mrb[0].mxu0
    %v3160 = vadd.f32 0.0, %v3159
    %v3161 = vpop.f32.mrb[0].mxu0
    %3162 = vmatprep.mubr.bf16.mxu0 0
    %3163 = vmatmul.mubr.bf16.gmra.mrb[0].mxu0 %v3114
    %v3164 = vpop.f32.mrb[0].mxu0
    %v3165 = vadd.f32 0.0, %v3164
    %v3166 = vpop.f32.mrb[0].mxu0
    %v3167 = vpop.f32.mrb[0].mxu0
    %v3168 = vpop.f32.mrb[0].mxu0
    %3169 = vdwg.mxu0
    %3172 = vrot.lane.b32.xlu0 %v2962, 96
    %v3173 = vpop.permute.xlu0 %3172
    %3174 = vrot.lane.b32.xlu0 %v2963, 96
    %v3175 = vpop.permute.xlu0 %3174
    %v3177 = vsel %vm533, %v2962, 0
    %v3180 = vsel %vm533, %v2963, 0
    %v3183 = vsel %vm533, %v3173, 0
    %v3186 = vsel %vm533, %v3175, 0
    %3188 = vmatprep.subr.bf16.mxu0 0
    %3189 = vmatpush1.bf16.xpose.msra.mxu0 %v3183
    %3190 = vmatprep.subr.bf16.mxu0 0
    %3191 = vmatpush1.bf16.xpose.msra.mxu0 %v3186
    %3192 = vmatprep.subr.bf16.mxu0 0
    %3193 = vmatpush1.bf16.xpose.msra.mxu0 0
    %3194 = vmatprep.subr.bf16.mxu0 0
    %3195 = vmatpush1.bf16.xpose.msra.mxu0 0
    %3196 = vmatprep.subr.bf16.mxu0 0
    %3197 = vmatpush1.bf16.xpose.msra.mxu0 0
    %3198 = vmatprep.subr.bf16.mxu0 0
    %3199 = vmatpush1.bf16.xpose.msra.mxu0 0
    %3200 = vmatprep.subr.bf16.mxu0 0
    %3201 = vmatpush1.bf16.xpose.msra.mxu0 0
    %3202 = vmatprep.subr.bf16.mxu0 0
    %3203 = vmatpush1.bf16.xpose.msra.mxu0 0
    %3204 = vmatprep.subr.bf16.mxu0 0
    %3205 = vmatpush1.bf16.xpose.msra.mxu0 0
    %3206 = vmatprep.subr.bf16.mxu0 0
    %3207 = vmatpush1.bf16.xpose.msra.mxu0 0
    %3208 = vmatprep.subr.bf16.mxu0 0
    %3209 = vmatpush1.bf16.xpose.msra.mxu0 0
    %3210 = vmatprep.subr.bf16.mxu0 0
    %3211 = vmatpush1.bf16.xpose.msra.mxu0 0
    %3212 = vmatprep.subr.bf16.mxu0 0
    %3213 = vmatpush1.bf16.xpose.msra.mxu0 0
    %3214 = vmatprep.subr.bf16.mxu0 0
    %3215 = vmatpush1.bf16.xpose.msra.mxu0 0
    %3216 = vmatprep.subr.bf16.mxu0 0
    %3217 = vmatpush1.bf16.xpose.msra.mxu0 0
    %3218 = vmatprep.subr.bf16.mxu0 0
    %3219 = vmatpush1.bf16.xpose.msra.mxu0 0
    %3220 = vmatprep.mubr.bf16.mxu0 0
    %3221 = vmatmul.mubr.bf16.gmra.mrb[0].mxu0 %v3177
    %v3222 = vpop.f32.mrb[0].mxu0
    %v3223 = vadd.f32 0.0, %v3222
    %v3224 = vpop.f32.mrb[0].mxu0
    %v3225 = vpop.f32.mrb[0].mxu0
    %v3226 = vadd.f32 0.0, %v3225
    %v3227 = vpop.f32.mrb[0].mxu0
    %3228 = vmatprep.mubr.bf16.mxu0 0
    %3229 = vmatmul.mubr.bf16.gmra.mrb[0].mxu0 %v3180
    %v3230 = vpop.f32.mrb[0].mxu0
    %v3231 = vadd.f32 0.0, %v3230
    %v3232 = vpop.f32.mrb[0].mxu0
    %v3233 = vpop.f32.mrb[0].mxu0
    %v3234 = vpop.f32.mrb[0].mxu0
    %3235 = vdwg.mxu0
    %3238 = vrot.lane.b32.xlu0 %v2964, 96
    %v3239 = vpop.permute.xlu0 %3238
    %3240 = vrot.lane.b32.xlu0 %v2965, 96
    %v3241 = vpop.permute.xlu0 %3240
    %v3243 = vsel %vm533, %v2964, 0
    %v3246 = vsel %vm533, %v2965, 0
    %v3249 = vsel %vm533, %v3239, 0
    %v3252 = vsel %vm533, %v3241, 0
    %3254 = vmatprep.subr.bf16.mxu0 0
    %3255 = vmatpush1.bf16.xpose.msra.mxu0 %v3249
    %3256 = vmatprep.subr.bf16.mxu0 0
    %3257 = vmatpush1.bf16.xpose.msra.mxu0 %v3252
    %3258 = vmatprep.subr.bf16.mxu0 0
    %3259 = vmatpush1.bf16.xpose.msra.mxu0 0
    %3260 = vmatprep.subr.bf16.mxu0 0
    %3261 = vmatpush1.bf16.xpose.msra.mxu0 0
    %3262 = vmatprep.subr.bf16.mxu0 0
    %3263 = vmatpush1.bf16.xpose.msra.mxu0 0
    %3264 = vmatprep.subr.bf16.mxu0 0
    %3265 = vmatpush1.bf16.xpose.msra.mxu0 0
    %3266 = vmatprep.subr.bf16.mxu0 0
    %3267 = vmatpush1.bf16.xpose.msra.mxu0 0
    %3268 = vmatprep.subr.bf16.mxu0 0
    %3269 = vmatpush1.bf16.xpose.msra.mxu0 0
    %3270 = vmatprep.subr.bf16.mxu0 0
    %3271 = vmatpush1.bf16.xpose.msra.mxu0 0
    %3272 = vmatprep.subr.bf16.mxu0 0
    %3273 = vmatpush1.bf16.xpose.msra.mxu0 0
    %3274 = vmatprep.subr.bf16.mxu0 0
    %3275 = vmatpush1.bf16.xpose.msra.mxu0 0
    %3276 = vmatprep.subr.bf16.mxu0 0
    %3277 = vmatpush1.bf16.xpose.msra.mxu0 0
    %3278 = vmatprep.subr.bf16.mxu0 0
    %3279 = vmatpush1.bf16.xpose.msra.mxu0 0
    %3280 = vmatprep.subr.bf16.mxu0 0
    %3281 = vmatpush1.bf16.xpose.msra.mxu0 0
    %3282 = vmatprep.subr.bf16.mxu0 0
    %3283 = vmatpush1.bf16.xpose.msra.mxu0 0
    %3284 = vmatprep.subr.bf16.mxu0 0
    %3285 = vmatpush1.bf16.xpose.msra.mxu0 0
    %3286 = vmatprep.mubr.bf16.mxu0 0
    %3287 = vmatmul.mubr.bf16.gmra.mrb[0].mxu0 %v3243
    %v3288 = vpop.f32.mrb[0].mxu0
    %v3289 = vadd.f32 0.0, %v3288
    %v3290 = vpop.f32.mrb[0].mxu0
    %v3291 = vpop.f32.mrb[0].mxu0
    %v3292 = vadd.f32 0.0, %v3291
    %v3293 = vpop.f32.mrb[0].mxu0
    %3294 = vmatprep.mubr.bf16.mxu0 0
    %3295 = vmatmul.mubr.bf16.gmra.mrb[0].mxu0 %v3246
    %v3296 = vpop.f32.mrb[0].mxu0
    %v3297 = vadd.f32 0.0, %v3296
    %v3298 = vpop.f32.mrb[0].mxu0
    %v3299 = vpop.f32.mrb[0].mxu0
    %v3300 = vpop.f32.mrb[0].mxu0
    %3301 = vdwg.mxu0
    %3304 = vrot.lane.b32.xlu0 %v2966, 96
    %v3305 = vpop.permute.xlu0 %3304
    %3306 = vrot.lane.b32.xlu0 %v2967, 96
    %v3307 = vpop.permute.xlu0 %3306
    %v3309 = vsel %vm533, %v2966, 0
    %v3312 = vsel %vm533, %v2967, 0
    %v3315 = vsel %vm533, %v3305, 0
    %v3318 = vsel %vm533, %v3307, 0
    %3320 = vmatprep.subr.bf16.mxu0 0
    %3321 = vmatpush1.bf16.xpose.msra.mxu0 %v3315
    %3322 = vmatprep.subr.bf16.mxu0 0
    %3323 = vmatpush1.bf16.xpose.msra.mxu0 %v3318
    %3324 = vmatprep.subr.bf16.mxu0 0
    %3325 = vmatpush1.bf16.xpose.msra.mxu0 0
    %3326 = vmatprep.subr.bf16.mxu0 0
    %3327 = vmatpush1.bf16.xpose.msra.mxu0 0
    %3328 = vmatprep.subr.bf16.mxu0 0
    %3329 = vmatpush1.bf16.xpose.msra.mxu0 0
    %3330 = vmatprep.subr.bf16.mxu0 0
    %3331 = vmatpush1.bf16.xpose.msra.mxu0 0
    %3332 = vmatprep.subr.bf16.mxu0 0
    %3333 = vmatpush1.bf16.xpose.msra.mxu0 0
    %3334 = vmatprep.subr.bf16.mxu0 0
    %3335 = vmatpush1.bf16.xpose.msra.mxu0 0
    %3336 = vmatprep.subr.bf16.mxu0 0
    %3337 = vmatpush1.bf16.xpose.msra.mxu0 0
    %3338 = vmatprep.subr.bf16.mxu0 0
    %3339 = vmatpush1.bf16.xpose.msra.mxu0 0
    %3340 = vmatprep.subr.bf16.mxu0 0
    %3341 = vmatpush1.bf16.xpose.msra.mxu0 0
    %3342 = vmatprep.subr.bf16.mxu0 0
    %3343 = vmatpush1.bf16.xpose.msra.mxu0 0
    %3344 = vmatprep.subr.bf16.mxu0 0
    %3345 = vmatpush1.bf16.xpose.msra.mxu0 0
    %3346 = vmatprep.subr.bf16.mxu0 0
    %3347 = vmatpush1.bf16.xpose.msra.mxu0 0
    %3348 = vmatprep.subr.bf16.mxu0 0
    %3349 = vmatpush1.bf16.xpose.msra.mxu0 0
    %3350 = vmatprep.subr.bf16.mxu0 0
    %3351 = vmatpush1.bf16.xpose.msra.mxu0 0
    %3352 = vmatprep.mubr.bf16.mxu0 0
    %3353 = vmatmul.mubr.bf16.gmra.mrb[0].mxu0 %v3309
    %v3354 = vpop.f32.mrb[0].mxu0
    %v3355 = vadd.f32 0.0, %v3354
    %v3356 = vpop.f32.mrb[0].mxu0
    %v3357 = vpop.f32.mrb[0].mxu0
    %v3358 = vadd.f32 0.0, %v3357
    %v3359 = vpop.f32.mrb[0].mxu0
    %3360 = vmatprep.mubr.bf16.mxu0 0
    %3361 = vmatmul.mubr.bf16.gmra.mrb[0].mxu0 %v3312
    %v3362 = vpop.f32.mrb[0].mxu0
    %v3363 = vadd.f32 0.0, %v3362
    %v3364 = vpop.f32.mrb[0].mxu0
    %v3365 = vpop.f32.mrb[0].mxu0
    %v3366 = vpop.f32.mrb[0].mxu0
    %3367 = vdwg.mxu0
    %3370 = vrot.lane.b32.xlu0 %v2968, 96
    %v3371 = vpop.permute.xlu0 %3370
    %3372 = vrot.lane.b32.xlu0 %v2969, 96
    %v3373 = vpop.permute.xlu0 %3372
    %v3375 = vsel %vm533, %v2968, 0
    %v3378 = vsel %vm533, %v2969, 0
    %v3381 = vsel %vm533, %v3371, 0
    %v3384 = vsel %vm533, %v3373, 0
    %3386 = vmatprep.subr.bf16.mxu0 0
    %3387 = vmatpush1.bf16.xpose.msra.mxu0 %v3381
    %3388 = vmatprep.subr.bf16.mxu0 0
    %3389 = vmatpush1.bf16.xpose.msra.mxu0 %v3384
    %3390 = vmatprep.subr.bf16.mxu0 0
    %3391 = vmatpush1.bf16.xpose.msra.mxu0 0
    %3392 = vmatprep.subr.bf16.mxu0 0
    %3393 = vmatpush1.bf16.xpose.msra.mxu0 0
    %3394 = vmatprep.subr.bf16.mxu0 0
    %3395 = vmatpush1.bf16.xpose.msra.mxu0 0
    %3396 = vmatprep.subr.bf16.mxu0 0
    %3397 = vmatpush1.bf16.xpose.msra.mxu0 0
    %3398 = vmatprep.subr.bf16.mxu0 0
    %3399 = vmatpush1.bf16.xpose.msra.mxu0 0
    %3400 = vmatprep.subr.bf16.mxu0 0
    %3401 = vmatpush1.bf16.xpose.msra.mxu0 0
    %3402 = vmatprep.subr.bf16.mxu0 0
    %3403 = vmatpush1.bf16.xpose.msra.mxu0 0
    %3404 = vmatprep.subr.bf16.mxu0 0
    %3405 = vmatpush1.bf16.xpose.msra.mxu0 0
    %3406 = vmatprep.subr.bf16.mxu0 0
    %3407 = vmatpush1.bf16.xpose.msra.mxu0 0
    %3408 = vmatprep.subr.bf16.mxu0 0
    %3409 = vmatpush1.bf16.xpose.msra.mxu0 0
    %3410 = vmatprep.subr.bf16.mxu0 0
    %3411 = vmatpush1.bf16.xpose.msra.mxu0 0
    %3412 = vmatprep.subr.bf16.mxu0 0
    %3413 = vmatpush1.bf16.xpose.msra.mxu0 0
    %3414 = vmatprep.subr.bf16.mxu0 0
    %3415 = vmatpush1.bf16.xpose.msra.mxu0 0
    %3416 = vmatprep.subr.bf16.mxu0 0
    %3417 = vmatpush1.bf16.xpose.msra.mxu0 0
    %3418 = vmatprep.mubr.bf16.mxu0 0
    %3419 = vmatmul.mubr.bf16.gmra.mrb[0].mxu0 %v3375
    %v3420 = vpop.f32.mrb[0].mxu0
    %v3421 = vadd.f32 0.0, %v3420
    %v3422 = vpop.f32.mrb[0].mxu0
    %v3423 = vpop.f32.mrb[0].mxu0
    %v3424 = vadd.f32 0.0, %v3423
    %v3425 = vpop.f32.mrb[0].mxu0
    %3426 = vmatprep.mubr.bf16.mxu0 0
    %3427 = vmatmul.mubr.bf16.gmra.mrb[0].mxu0 %v3378
    %v3428 = vpop.f32.mrb[0].mxu0
    %v3429 = vadd.f32 0.0, %v3428
    %v3430 = vpop.f32.mrb[0].mxu0
    %v3431 = vpop.f32.mrb[0].mxu0
    %v3432 = vpop.f32.mrb[0].mxu0
    %3433 = vdwg.mxu0
    %3436 = vrot.lane.b32.xlu0 %v2970, 96
    %v3437 = vpop.permute.xlu0 %3436
    %3438 = vrot.lane.b32.xlu0 %v2971, 96
    %v3439 = vpop.permute.xlu0 %3438
    %v3441 = vsel %vm533, %v2970, 0
    %v3444 = vsel %vm533, %v2971, 0
    %v3447 = vsel %vm533, %v3437, 0
    %v3450 = vsel %vm533, %v3439, 0
    %3452 = vmatprep.subr.bf16.mxu0 0
    %3453 = vmatpush1.bf16.xpose.msra.mxu0 %v3447
    %3454 = vmatprep.subr.bf16.mxu0 0
    %3455 = vmatpush1.bf16.xpose.msra.mxu0 %v3450
    %3456 = vmatprep.subr.bf16.mxu0 0
    %3457 = vmatpush1.bf16.xpose.msra.mxu0 0
    %3458 = vmatprep.subr.bf16.mxu0 0
    %3459 = vmatpush1.bf16.xpose.msra.mxu0 0
    %3460 = vmatprep.subr.bf16.mxu0 0
    %3461 = vmatpush1.bf16.xpose.msra.mxu0 0
    %3462 = vmatprep.subr.bf16.mxu0 0
    %3463 = vmatpush1.bf16.xpose.msra.mxu0 0
    %3464 = vmatprep.subr.bf16.mxu0 0
    %3465 = vmatpush1.bf16.xpose.msra.mxu0 0
    %3466 = vmatprep.subr.bf16.mxu0 0
    %3467 = vmatpush1.bf16.xpose.msra.mxu0 0
    %3468 = vmatprep.subr.bf16.mxu0 0
    %3469 = vmatpush1.bf16.xpose.msra.mxu0 0
    %3470 = vmatprep.subr.bf16.mxu0 0
    %3471 = vmatpush1.bf16.xpose.msra.mxu0 0
    %3472 = vmatprep.subr.bf16.mxu0 0
    %3473 = vmatpush1.bf16.xpose.msra.mxu0 0
    %3474 = vmatprep.subr.bf16.mxu0 0
    %3475 = vmatpush1.bf16.xpose.msra.mxu0 0
    %3476 = vmatprep.subr.bf16.mxu0 0
    %3477 = vmatpush1.bf16.xpose.msra.mxu0 0
    %3478 = vmatprep.subr.bf16.mxu0 0
    %3479 = vmatpush1.bf16.xpose.msra.mxu0 0
    %3480 = vmatprep.subr.bf16.mxu0 0
    %3481 = vmatpush1.bf16.xpose.msra.mxu0 0
    %3482 = vmatprep.subr.bf16.mxu0 0
    %3483 = vmatpush1.bf16.xpose.msra.mxu0 0
    %3484 = vmatprep.mubr.bf16.mxu0 0
    %3485 = vmatmul.mubr.bf16.gmra.mrb[0].mxu0 %v3441
    %v3486 = vpop.f32.mrb[0].mxu0
    %v3487 = vadd.f32 0.0, %v3486
    %v3488 = vpop.f32.mrb[0].mxu0
    %v3489 = vpop.f32.mrb[0].mxu0
    %v3490 = vadd.f32 0.0, %v3489
    %v3491 = vpop.f32.mrb[0].mxu0
    %3492 = vmatprep.mubr.bf16.mxu0 0
    %3493 = vmatmul.mubr.bf16.gmra.mrb[0].mxu0 %v3444
    %v3494 = vpop.f32.mrb[0].mxu0
    %v3495 = vadd.f32 0.0, %v3494
    %v3496 = vpop.f32.mrb[0].mxu0
    %v3497 = vpop.f32.mrb[0].mxu0
    %v3498 = vpop.f32.mrb[0].mxu0
    %3499 = vdwg.mxu0
    %v3500 = vmul.f32 %v3025, 0.25
    %v3501 = vmul.f32 %v3028, 0.25
    %v3502 = vmul.f32 %v3033, 0.25
    %v3503 = vmul.f32 %v3091, 0.25
    %v3504 = vmul.f32 %v3094, 0.25
    %v3505 = vmul.f32 %v3099, 0.25
    %v3506 = vmul.f32 %v3157, 0.25
    %v3507 = vmul.f32 %v3160, 0.25
    %v3508 = vmul.f32 %v3165, 0.25
    %v3509 = vmul.f32 %v3223, 0.25
    %v3510 = vmul.f32 %v3226, 0.25
    %v3511 = vmul.f32 %v3231, 0.25
    %v3512 = vmul.f32 %v3289, 0.25
    %v3513 = vmul.f32 %v3292, 0.25
    %v3514 = vmul.f32 %v3297, 0.25
    %v3515 = vmul.f32 %v3355, 0.25
    %v3516 = vmul.f32 %v3358, 0.25
    %v3517 = vmul.f32 %v3363, 0.25
    %v3518 = vmul.f32 %v3421, 0.25
    %v3519 = vmul.f32 %v3424, 0.25
    %v3520 = vmul.f32 %v3429, 0.25
    %v3521 = vmul.f32 %v3487, 0.25
    %v3522 = vmul.f32 %v3490, 0.25
    %v3523 = vmul.f32 %v3495, 0.25
    %v3524 = vsel %vm1081, %v3500, -1e+30
    %v3525 = vsel %vm1081, %v3501, -1e+30
    %v3526 = vsel %vm1081, %v3502, -1e+30
    %v3527 = vsel %vm1081, %v3503, -1e+30
    %v3528 = vsel %vm1081, %v3504, -1e+30
    %v3529 = vsel %vm1081, %v3505, -1e+30
    %v3530 = vsel %vm1081, %v3506, -1e+30
    %v3531 = vsel %vm1081, %v3507, -1e+30
    %v3532 = vsel %vm1081, %v3508, -1e+30
    %v3533 = vsel %vm1081, %v3509, -1e+30
    %v3534 = vsel %vm1081, %v3510, -1e+30
    %v3535 = vsel %vm1081, %v3511, -1e+30
    %v3536 = vsel %vm1081, %v3512, -1e+30
    %v3537 = vsel %vm1081, %v3513, -1e+30
    %v3538 = vsel %vm1081, %v3514, -1e+30
    %v3539 = vsel %vm1081, %v3515, -1e+30
    %v3540 = vsel %vm1081, %v3516, -1e+30
    %v3541 = vsel %vm1081, %v3517, -1e+30
    %v3542 = vsel %vm1081, %v3518, -1e+30
    %v3543 = vsel %vm1081, %v3519, -1e+30
    %v3544 = vsel %vm1081, %v3520, -1e+30
    %v3545 = vsel %vm1081, %v3521, -1e+30
    %v3546 = vsel %vm1081, %v3522, -1e+30
    %v3547 = vsel %vm1081, %v3523, -1e+30
    %v3548 = vsel %vm1106, %v3524, -inf
    %3549 = vmax.xlane.f32.xlu0 %v3548
    %v3550 = vpop.xlane.xlu0 %3549
    %v3551 = vsel %vm1106, %v3525, -inf
    %3552 = vmax.xlane.f32.xlu0 %v3551
    %v3553 = vpop.xlane.xlu0 %3552
    %v3554 = vsel %vm1106, %v3526, -inf
    %3555 = vmax.xlane.f32.xlu0 %v3554
    %v3556 = vpop.xlane.xlu0 %3555
    %v3557 = vsel %vm1106, %v3527, -inf
    %3558 = vmax.xlane.f32.xlu0 %v3557
    %v3559 = vpop.xlane.xlu0 %3558
    %v3560 = vsel %vm1106, %v3528, -inf
    %3561 = vmax.xlane.f32.xlu0 %v3560
    %v3562 = vpop.xlane.xlu0 %3561
    %v3563 = vsel %vm1106, %v3529, -inf
    %3564 = vmax.xlane.f32.xlu0 %v3563
    %v3565 = vpop.xlane.xlu0 %3564
    %v3566 = vsel %vm1106, %v3530, -inf
    %3567 = vmax.xlane.f32.xlu0 %v3566
    %v3568 = vpop.xlane.xlu0 %3567
    %v3569 = vsel %vm1106, %v3531, -inf
    %3570 = vmax.xlane.f32.xlu0 %v3569
    %v3571 = vpop.xlane.xlu0 %3570
    %v3572 = vsel %vm1106, %v3532, -inf
    %3573 = vmax.xlane.f32.xlu0 %v3572
    %v3574 = vpop.xlane.xlu0 %3573
    %v3575 = vsel %vm1106, %v3533, -inf
    %3576 = vmax.xlane.f32.xlu0 %v3575
    %v3577 = vpop.xlane.xlu0 %3576
    %v3578 = vsel %vm1106, %v3534, -inf
    %3579 = vmax.xlane.f32.xlu0 %v3578
    %v3580 = vpop.xlane.xlu0 %3579
    %v3581 = vsel %vm1106, %v3535, -inf
    %3582 = vmax.xlane.f32.xlu0 %v3581
    %v3583 = vpop.xlane.xlu0 %3582
    %v3584 = vsel %vm1106, %v3536, -inf
    %3585 = vmax.xlane.f32.xlu0 %v3584
    %v3586 = vpop.xlane.xlu0 %3585
    %v3587 = vsel %vm1106, %v3537, -inf
    %3588 = vmax.xlane.f32.xlu0 %v3587
    %v3589 = vpop.xlane.xlu0 %3588
    %v3590 = vsel %vm1106, %v3538, -inf
    %3591 = vmax.xlane.f32.xlu0 %v3590
    %v3592 = vpop.xlane.xlu0 %3591
    %v3593 = vsel %vm1106, %v3539, -inf
    %3594 = vmax.xlane.f32.xlu0 %v3593
    %v3595 = vpop.xlane.xlu0 %3594
    %v3596 = vsel %vm1106, %v3540, -inf
    %3597 = vmax.xlane.f32.xlu0 %v3596
    %v3598 = vpop.xlane.xlu0 %3597
    %v3599 = vsel %vm1106, %v3541, -inf
    %3600 = vmax.xlane.f32.xlu0 %v3599
    %v3601 = vpop.xlane.xlu0 %3600
    %v3602 = vsel %vm1106, %v3542, -inf
    %3603 = vmax.xlane.f32.xlu0 %v3602
    %v3604 = vpop.xlane.xlu0 %3603
    %v3605 = vsel %vm1106, %v3543, -inf
    %3606 = vmax.xlane.f32.xlu0 %v3605
    %v3607 = vpop.xlane.xlu0 %3606
    %v3608 = vsel %vm1106, %v3544, -inf
    %3609 = vmax.xlane.f32.xlu0 %v3608
    %v3610 = vpop.xlane.xlu0 %3609
    %v3611 = vsel %vm1106, %v3545, -inf
    %3612 = vmax.xlane.f32.xlu0 %v3611
    %v3613 = vpop.xlane.xlu0 %3612
    %v3614 = vsel %vm1106, %v3546, -inf
    %3615 = vmax.xlane.f32.xlu0 %v3614
    %v3616 = vpop.xlane.xlu0 %3615
    %v3617 = vsel %vm1106, %v3547, -inf
    %3618 = vmax.xlane.f32.xlu0 %v3617
    %v3619 = vpop.xlane.xlu0 %3618
    %v3620 = vsub.f32 %v3524, %v3550
    %v3621 = vsub.f32 %v3525, %v3553
    %v3622 = vsub.f32 %v3526, %v3556
    %v3623 = vsub.f32 %v3527, %v3559
    %v3624 = vsub.f32 %v3528, %v3562
    %v3625 = vsub.f32 %v3529, %v3565
    %v3626 = vsub.f32 %v3530, %v3568
    %v3627 = vsub.f32 %v3531, %v3571
    %v3628 = vsub.f32 %v3532, %v3574
    %v3629 = vsub.f32 %v3533, %v3577
    %v3630 = vsub.f32 %v3534, %v3580
    %v3631 = vsub.f32 %v3535, %v3583
    %v3632 = vsub.f32 %v3536, %v3586
    %v3633 = vsub.f32 %v3537, %v3589
    %v3634 = vsub.f32 %v3538, %v3592
    %v3635 = vsub.f32 %v3539, %v3595
    %v3636 = vsub.f32 %v3540, %v3598
    %v3637 = vsub.f32 %v3541, %v3601
    %v3638 = vsub.f32 %v3542, %v3604
    %v3639 = vsub.f32 %v3543, %v3607
    %v3640 = vsub.f32 %v3544, %v3610
    %v3641 = vsub.f32 %v3545, %v3613
    %v3642 = vsub.f32 %v3546, %v3616
    %v3643 = vsub.f32 %v3547, %v3619
    %v3644 = vmul.f32 %v3620, 1.442695
    %v3645 = vpow.pop %v3644
    %v3646 = vmul.f32 %v3621, 1.442695
    %v3647 = vpow.pop %v3646
    %v3648 = vmul.f32 %v3622, 1.442695
    %v3649 = vpow.pop %v3648
    %v3650 = vmul.f32 %v3623, 1.442695
    %v3651 = vpow.pop %v3650
    %v3652 = vmul.f32 %v3624, 1.442695
    %v3653 = vpow.pop %v3652
    %v3654 = vmul.f32 %v3625, 1.442695
    %v3655 = vpow.pop %v3654
    %v3656 = vmul.f32 %v3626, 1.442695
    %v3657 = vpow.pop %v3656
    %v3658 = vmul.f32 %v3627, 1.442695
    %v3659 = vpow.pop %v3658
    %v3660 = vmul.f32 %v3628, 1.442695
    %v3661 = vpow.pop %v3660
    %v3662 = vmul.f32 %v3629, 1.442695
    %v3663 = vpow.pop %v3662
    %v3664 = vmul.f32 %v3630, 1.442695
    %v3665 = vpow.pop %v3664
    %v3666 = vmul.f32 %v3631, 1.442695
    %v3667 = vpow.pop %v3666
    %v3668 = vmul.f32 %v3632, 1.442695
    %v3669 = vpow.pop %v3668
    %v3670 = vmul.f32 %v3633, 1.442695
    %v3671 = vpow.pop %v3670
    %v3672 = vmul.f32 %v3634, 1.442695
    %v3673 = vpow.pop %v3672
    %v3674 = vmul.f32 %v3635, 1.442695
    %v3675 = vpow.pop %v3674
    %v3676 = vmul.f32 %v3636, 1.442695
    %v3677 = vpow.pop %v3676
    %v3678 = vmul.f32 %v3637, 1.442695
    %v3679 = vpow.pop %v3678
    %v3680 = vmul.f32 %v3638, 1.442695
    %v3681 = vpow.pop %v3680
    %v3682 = vmul.f32 %v3639, 1.442695
    %v3683 = vpow.pop %v3682
    %v3684 = vmul.f32 %v3640, 1.442695
    %v3685 = vpow.pop %v3684
    %v3686 = vmul.f32 %v3641, 1.442695
    %v3687 = vpow.pop %v3686
    %v3688 = vmul.f32 %v3642, 1.442695
    %v3689 = vpow.pop %v3688
    %v3690 = vmul.f32 %v3643, 1.442695
    %v3691 = vpow.pop %v3690
    %v3692 = vsel %vm1106, %v3645, 0.0
    %3693 = vadd.xlane.f32.xlu0 %v3692
    %v3694 = vpop.xlane.xlu0 %3693
    %v3695 = vsel %vm1106, %v3647, 0.0
    %3696 = vadd.xlane.f32.xlu0 %v3695
    %v3697 = vpop.xlane.xlu0 %3696
    %v3698 = vsel %vm1106, %v3649, 0.0
    %3699 = vadd.xlane.f32.xlu0 %v3698
    %v3700 = vpop.xlane.xlu0 %3699
    %v3701 = vsel %vm1106, %v3651, 0.0
    %3702 = vadd.xlane.f32.xlu0 %v3701
    %v3703 = vpop.xlane.xlu0 %3702
    %v3704 = vsel %vm1106, %v3653, 0.0
    %3705 = vadd.xlane.f32.xlu0 %v3704
    %v3706 = vpop.xlane.xlu0 %3705
    %v3707 = vsel %vm1106, %v3655, 0.0
    %3708 = vadd.xlane.f32.xlu0 %v3707
    %v3709 = vpop.xlane.xlu0 %3708
    %v3710 = vsel %vm1106, %v3657, 0.0
    %3711 = vadd.xlane.f32.xlu0 %v3710
    %v3712 = vpop.xlane.xlu0 %3711
    %v3713 = vsel %vm1106, %v3659, 0.0
    %3714 = vadd.xlane.f32.xlu0 %v3713
    %v3715 = vpop.xlane.xlu0 %3714
    %v3716 = vsel %vm1106, %v3661, 0.0
    %3717 = vadd.xlane.f32.xlu0 %v3716
    %v3718 = vpop.xlane.xlu0 %3717
    %v3719 = vsel %vm1106, %v3663, 0.0
    %3720 = vadd.xlane.f32.xlu0 %v3719
    %v3721 = vpop.xlane.xlu0 %3720
    %v3722 = vsel %vm1106, %v3665, 0.0
    %3723 = vadd.xlane.f32.xlu0 %v3722
    %v3724 = vpop.xlane.xlu0 %3723
    %v3725 = vsel %vm1106, %v3667, 0.0
    %3726 = vadd.xlane.f32.xlu0 %v3725
    %v3727 = vpop.xlane.xlu0 %3726
    %v3728 = vsel %vm1106, %v3669, 0.0
    %3729 = vadd.xlane.f32.xlu0 %v3728
    %v3730 = vpop.xlane.xlu0 %3729
    %v3731 = vsel %vm1106, %v3671, 0.0
    %3732 = vadd.xlane.f32.xlu0 %v3731
    %v3733 = vpop.xlane.xlu0 %3732
    %v3734 = vsel %vm1106, %v3673, 0.0
    %3735 = vadd.xlane.f32.xlu0 %v3734
    %v3736 = vpop.xlane.xlu0 %3735
    %v3737 = vsel %vm1106, %v3675, 0.0
    %3738 = vadd.xlane.f32.xlu0 %v3737
    %v3739 = vpop.xlane.xlu0 %3738
    %v3740 = vsel %vm1106, %v3677, 0.0
    %3741 = vadd.xlane.f32.xlu0 %v3740
    %v3742 = vpop.xlane.xlu0 %3741
    %v3743 = vsel %vm1106, %v3679, 0.0
    %3744 = vadd.xlane.f32.xlu0 %v3743
    %v3745 = vpop.xlane.xlu0 %3744
    %v3746 = vsel %vm1106, %v3681, 0.0
    %3747 = vadd.xlane.f32.xlu0 %v3746
    %v3748 = vpop.xlane.xlu0 %3747
    %v3749 = vsel %vm1106, %v3683, 0.0
    %3750 = vadd.xlane.f32.xlu0 %v3749
    %v3751 = vpop.xlane.xlu0 %3750
    %v3752 = vsel %vm1106, %v3685, 0.0
    %3753 = vadd.xlane.f32.xlu0 %v3752
    %v3754 = vpop.xlane.xlu0 %3753
    %v3755 = vsel %vm1106, %v3687, 0.0
    %3756 = vadd.xlane.f32.xlu0 %v3755
    %v3757 = vpop.xlane.xlu0 %3756
    %v3758 = vsel %vm1106, %v3689, 0.0
    %3759 = vadd.xlane.f32.xlu0 %v3758
    %v3760 = vpop.xlane.xlu0 %3759
    %v3761 = vsel %vm1106, %v3691, 0.0
    %3762 = vadd.xlane.f32.xlu0 %v3761
    %v3763 = vpop.xlane.xlu0 %3762
    %v3764 = vrcp.pop %v3694
    %v3765 = vrcp.pop %v3697
    %v3766 = vrcp.pop %v3700
    %v3767 = vrcp.pop %v3703
    %v3768 = vrcp.pop %v3706
    %v3769 = vrcp.pop %v3709
    %v3770 = vrcp.pop %v3712
    %v3771 = vrcp.pop %v3715
    %v3772 = vrcp.pop %v3718
    %v3773 = vrcp.pop %v3721
    %v3774 = vrcp.pop %v3724
    %v3775 = vrcp.pop %v3727
    %v3776 = vrcp.pop %v3730
    %v3777 = vrcp.pop %v3733
    %v3778 = vrcp.pop %v3736
    %v3779 = vrcp.pop %v3739
    %v3780 = vrcp.pop %v3742
    %v3781 = vrcp.pop %v3745
    %v3782 = vrcp.pop %v3748
    %v3783 = vrcp.pop %v3751
    %v3784 = vrcp.pop %v3754
    %v3785 = vrcp.pop %v3757
    %v3786 = vrcp.pop %v3760
    %v3787 = vrcp.pop %v3763
    %v3788 = vmul.f32 %v3645, %v3764
    %v3789 = vmul.f32 %v3647, %v3765
    %v3790 = vmul.f32 %v3649, %v3766
    %v3791 = vmul.f32 %v3651, %v3767
    %v3792 = vmul.f32 %v3653, %v3768
    %v3793 = vmul.f32 %v3655, %v3769
    %v3794 = vmul.f32 %v3657, %v3770
    %v3795 = vmul.f32 %v3659, %v3771
    %v3796 = vmul.f32 %v3661, %v3772
    %v3797 = vmul.f32 %v3663, %v3773
    %v3798 = vmul.f32 %v3665, %v3774
    %v3799 = vmul.f32 %v3667, %v3775
    %v3800 = vmul.f32 %v3669, %v3776
    %v3801 = vmul.f32 %v3671, %v3777
    %v3802 = vmul.f32 %v3673, %v3778
    %v3803 = vmul.f32 %v3675, %v3779
    %v3804 = vmul.f32 %v3677, %v3780
    %v3805 = vmul.f32 %v3679, %v3781
    %v3806 = vmul.f32 %v3681, %v3782
    %v3807 = vmul.f32 %v3683, %v3783
    %v3808 = vmul.f32 %v3685, %v3784
    %v3809 = vmul.f32 %v3687, %v3785
    %v3810 = vmul.f32 %v3689, %v3786
    %v3811 = vmul.f32 %v3691, %v3787
    %v3812 = vpack.c.bf16 %v3789, %v3788
    %v3813 = vpack.c.bf16 %v3790, %v3790
    %v3814 = vpack.c.bf16 %v3792, %v3791
    %v3815 = vpack.c.bf16 %v3793, %v3793
    %v3816 = vpack.c.bf16 %v3795, %v3794
    %v3817 = vpack.c.bf16 %v3796, %v3796
    %v3818 = vpack.c.bf16 %v3798, %v3797
    %v3819 = vpack.c.bf16 %v3799, %v3799
    %v3820 = vpack.c.bf16 %v3801, %v3800
    %v3821 = vpack.c.bf16 %v3802, %v3802
    %v3822 = vpack.c.bf16 %v3804, %v3803
    %v3823 = vpack.c.bf16 %v3805, %v3805
    %v3824 = vpack.c.bf16 %v3807, %v3806
    %v3825 = vpack.c.bf16 %v3808, %v3808
    %v3826 = vpack.c.bf16 %v3810, %v3809
    %v3827 = vpack.c.bf16 %v3811, %v3811
    %3828 = vrot.lane.b32.xlu0 %v2956, 64
    %v3829 = vpop.permute.xlu0 %3828
    %3830 = vrot.lane.b32.xlu0 %v2957, 64
    %v3831 = vpop.permute.xlu0 %3830
    %v3834 = vsel %vm1106, %v3812, 0
    %v3837 = vsel %vm1106, %v3813, 0
    %v3840 = vsel %vm89, %v3831, 0
    %3842 = vmatprep.subr.bf16.mxu0 0
    %3843 = vmatpush1.bf16.msra.mxu0 %v3829
    %3844 = vmatprep.subr.bf16.mxu0 0
    %3845 = vmatpush1.bf16.msra.mxu0 %v3840
    %3846 = vmatprep.subr.bf16.mxu0 0
    %3847 = vmatpush1.bf16.msra.mxu0 0
    %3848 = vmatprep.subr.bf16.mxu0 0
    %3849 = vmatpush1.bf16.msra.mxu0 0
    %3850 = vmatprep.subr.bf16.mxu0 0
    %3851 = vmatpush1.bf16.msra.mxu0 0
    %3852 = vmatprep.subr.bf16.mxu0 0
    %3853 = vmatpush1.bf16.msra.mxu0 0
    %3854 = vmatprep.subr.bf16.mxu0 0
    %3855 = vmatpush1.bf16.msra.mxu0 0
    %3856 = vmatprep.subr.bf16.mxu0 0
    %3857 = vmatpush1.bf16.msra.mxu0 0
    %3858 = vmatprep.subr.bf16.mxu0 0
    %3859 = vmatpush1.bf16.msra.mxu0 0
    %3860 = vmatprep.subr.bf16.mxu0 0
    %3861 = vmatpush1.bf16.msra.mxu0 0
    %3862 = vmatprep.subr.bf16.mxu0 0
    %3863 = vmatpush1.bf16.msra.mxu0 0
    %3864 = vmatprep.subr.bf16.mxu0 0
    %3865 = vmatpush1.bf16.msra.mxu0 0
    %3866 = vmatprep.subr.bf16.mxu0 0
    %3867 = vmatpush1.bf16.msra.mxu0 0
    %3868 = vmatprep.subr.bf16.mxu0 0
    %3869 = vmatpush1.bf16.msra.mxu0 0
    %3870 = vmatprep.subr.bf16.mxu0 0
    %3871 = vmatpush1.bf16.msra.mxu0 0
    %3872 = vmatprep.subr.bf16.mxu0 0
    %3873 = vmatpush1.bf16.msra.mxu0 0
    %3874 = vmatprep.mubr.bf16.mxu0 0
    %3875 = vmatmul.mubr.bf16.gmra.mrb[0].mxu0 %v3834
    %v3876 = vpop.f32.mrb[0].mxu0
    %v3877 = vadd.f32 0.0, %v3876
    %v3878 = vpop.f32.mrb[0].mxu0
    %v3879 = vpop.f32.mrb[0].mxu0
    %v3880 = vadd.f32 0.0, %v3879
    %v3881 = vpop.f32.mrb[0].mxu0
    %3882 = vmatprep.mubr.bf16.mxu0 0
    %3883 = vmatmul.mubr.bf16.gmra.mrb[0].mxu0 %v3837
    %v3884 = vpop.f32.mrb[0].mxu0
    %v3885 = vadd.f32 0.0, %v3884
    %v3886 = vpop.f32.mrb[0].mxu0
    %v3887 = vpop.f32.mrb[0].mxu0
    %v3888 = vpop.f32.mrb[0].mxu0
    %3889 = vdwg.mxu0
    %3890 = vrot.lane.b32.xlu0 %v2958, 64
    %v3891 = vpop.permute.xlu0 %3890
    %3892 = vrot.lane.b32.xlu0 %v2959, 64
    %v3893 = vpop.permute.xlu0 %3892
    %v3896 = vsel %vm1106, %v3814, 0
    %v3899 = vsel %vm1106, %v3815, 0
    %v3902 = vsel %vm89, %v3893, 0
    %3904 = vmatprep.subr.bf16.mxu0 0
    %3905 = vmatpush1.bf16.msra.mxu0 %v3891
    %3906 = vmatprep.subr.bf16.mxu0 0
    %3907 = vmatpush1.bf16.msra.mxu0 %v3902
    %3908 = vmatprep.subr.bf16.mxu0 0
    %3909 = vmatpush1.bf16.msra.mxu0 0
    %3910 = vmatprep.subr.bf16.mxu0 0
    %3911 = vmatpush1.bf16.msra.mxu0 0
    %3912 = vmatprep.subr.bf16.mxu0 0
    %3913 = vmatpush1.bf16.msra.mxu0 0
    %3914 = vmatprep.subr.bf16.mxu0 0
    %3915 = vmatpush1.bf16.msra.mxu0 0
    %3916 = vmatprep.subr.bf16.mxu0 0
    %3917 = vmatpush1.bf16.msra.mxu0 0
    %3918 = vmatprep.subr.bf16.mxu0 0
    %3919 = vmatpush1.bf16.msra.mxu0 0
    %3920 = vmatprep.subr.bf16.mxu0 0
    %3921 = vmatpush1.bf16.msra.mxu0 0
    %3922 = vmatprep.subr.bf16.mxu0 0
    %3923 = vmatpush1.bf16.msra.mxu0 0
    %3924 = vmatprep.subr.bf16.mxu0 0
    %3925 = vmatpush1.bf16.msra.mxu0 0
    %3926 = vmatprep.subr.bf16.mxu0 0
    %3927 = vmatpush1.bf16.msra.mxu0 0
    %3928 = vmatprep.subr.bf16.mxu0 0
    %3929 = vmatpush1.bf16.msra.mxu0 0
    %3930 = vmatprep.subr.bf16.mxu0 0
    %3931 = vmatpush1.bf16.msra.mxu0 0
    %3932 = vmatprep.subr.bf16.mxu0 0
    %3933 = vmatpush1.bf16.msra.mxu0 0
    %3934 = vmatprep.subr.bf16.mxu0 0
    %3935 = vmatpush1.bf16.msra.mxu0 0
    %3936 = vmatprep.mubr.bf16.mxu0 0
    %3937 = vmatmul.mubr.bf16.gmra.mrb[0].mxu0 %v3896
    %v3938 = vpop.f32.mrb[0].mxu0
    %v3939 = vadd.f32 0.0, %v3938
    %v3940 = vpop.f32.mrb[0].mxu0
    %v3941 = vpop.f32.mrb[0].mxu0
    %v3942 = vadd.f32 0.0, %v3941
    %v3943 = vpop.f32.mrb[0].mxu0
    %3944 = vmatprep.mubr.bf16.mxu0 0
    %3945 = vmatmul.mubr.bf16.gmra.mrb[0].mxu0 %v3899
    %v3946 = vpop.f32.mrb[0].mxu0
    %v3947 = vadd.f32 0.0, %v3946
    %v3948 = vpop.f32.mrb[0].mxu0
    %v3949 = vpop.f32.mrb[0].mxu0
    %v3950 = vpop.f32.mrb[0].mxu0
    %3951 = vdwg.mxu0
    %3952 = vrot.lane.b32.xlu0 %v2960, 64
    %v3953 = vpop.permute.xlu0 %3952
    %3954 = vrot.lane.b32.xlu0 %v2961, 64
    %v3955 = vpop.permute.xlu0 %3954
    %v3958 = vsel %vm1106, %v3816, 0
    %v3961 = vsel %vm1106, %v3817, 0
    %v3964 = vsel %vm89, %v3955, 0
    %3966 = vmatprep.subr.bf16.mxu0 0
    %3967 = vmatpush1.bf16.msra.mxu0 %v3953
    %3968 = vmatprep.subr.bf16.mxu0 0
    %3969 = vmatpush1.bf16.msra.mxu0 %v3964
    %3970 = vmatprep.subr.bf16.mxu0 0
    %3971 = vmatpush1.bf16.msra.mxu0 0
    %3972 = vmatprep.subr.bf16.mxu0 0
    %3973 = vmatpush1.bf16.msra.mxu0 0
    %3974 = vmatprep.subr.bf16.mxu0 0
    %3975 = vmatpush1.bf16.msra.mxu0 0
    %3976 = vmatprep.subr.bf16.mxu0 0
    %3977 = vmatpush1.bf16.msra.mxu0 0
    %3978 = vmatprep.subr.bf16.mxu0 0
    %3979 = vmatpush1.bf16.msra.mxu0 0
    %3980 = vmatprep.subr.bf16.mxu0 0
    %3981 = vmatpush1.bf16.msra.mxu0 0
    %3982 = vmatprep.subr.bf16.mxu0 0
    %3983 = vmatpush1.bf16.msra.mxu0 0
    %3984 = vmatprep.subr.bf16.mxu0 0
    %3985 = vmatpush1.bf16.msra.mxu0 0
    %3986 = vmatprep.subr.bf16.mxu0 0
    %3987 = vmatpush1.bf16.msra.mxu0 0
    %3988 = vmatprep.subr.bf16.mxu0 0
    %3989 = vmatpush1.bf16.msra.mxu0 0
    %3990 = vmatprep.subr.bf16.mxu0 0
    %3991 = vmatpush1.bf16.msra.mxu0 0
    %3992 = vmatprep.subr.bf16.mxu0 0
    %3993 = vmatpush1.bf16.msra.mxu0 0
    %3994 = vmatprep.subr.bf16.mxu0 0
    %3995 = vmatpush1.bf16.msra.mxu0 0
    %3996 = vmatprep.subr.bf16.mxu0 0
    %3997 = vmatpush1.bf16.msra.mxu0 0
    %3998 = vmatprep.mubr.bf16.mxu0 0
    %3999 = vmatmul.mubr.bf16.gmra.mrb[0].mxu0 %v3958
    %v4000 = vpop.f32.mrb[0].mxu0
    %v4001 = vadd.f32 0.0, %v4000
    %v4002 = vpop.f32.mrb[0].mxu0
    %v4003 = vpop.f32.mrb[0].mxu0
    %v4004 = vadd.f32 0.0, %v4003
    %v4005 = vpop.f32.mrb[0].mxu0
    %4006 = vmatprep.mubr.bf16.mxu0 0
    %4007 = vmatmul.mubr.bf16.gmra.mrb[0].mxu0 %v3961
    %v4008 = vpop.f32.mrb[0].mxu0
    %v4009 = vadd.f32 0.0, %v4008
    %v4010 = vpop.f32.mrb[0].mxu0
    %v4011 = vpop.f32.mrb[0].mxu0
    %v4012 = vpop.f32.mrb[0].mxu0
    %4013 = vdwg.mxu0
    %4014 = vrot.lane.b32.xlu0 %v2962, 64
    %v4015 = vpop.permute.xlu0 %4014
    %4016 = vrot.lane.b32.xlu0 %v2963, 64
    %v4017 = vpop.permute.xlu0 %4016
    %v4020 = vsel %vm1106, %v3818, 0
    %v4023 = vsel %vm1106, %v3819, 0
    %v4026 = vsel %vm89, %v4017, 0
    %4028 = vmatprep.subr.bf16.mxu0 0
    %4029 = vmatpush1.bf16.msra.mxu0 %v4015
    %4030 = vmatprep.subr.bf16.mxu0 0
    %4031 = vmatpush1.bf16.msra.mxu0 %v4026
    %4032 = vmatprep.subr.bf16.mxu0 0
    %4033 = vmatpush1.bf16.msra.mxu0 0
    %4034 = vmatprep.subr.bf16.mxu0 0
    %4035 = vmatpush1.bf16.msra.mxu0 0
    %4036 = vmatprep.subr.bf16.mxu0 0
    %4037 = vmatpush1.bf16.msra.mxu0 0
    %4038 = vmatprep.subr.bf16.mxu0 0
    %4039 = vmatpush1.bf16.msra.mxu0 0
    %4040 = vmatprep.subr.bf16.mxu0 0
    %4041 = vmatpush1.bf16.msra.mxu0 0
    %4042 = vmatprep.subr.bf16.mxu0 0
    %4043 = vmatpush1.bf16.msra.mxu0 0
    %4044 = vmatprep.subr.bf16.mxu0 0
    %4045 = vmatpush1.bf16.msra.mxu0 0
    %4046 = vmatprep.subr.bf16.mxu0 0
    %4047 = vmatpush1.bf16.msra.mxu0 0
    %4048 = vmatprep.subr.bf16.mxu0 0
    %4049 = vmatpush1.bf16.msra.mxu0 0
    %4050 = vmatprep.subr.bf16.mxu0 0
    %4051 = vmatpush1.bf16.msra.mxu0 0
    %4052 = vmatprep.subr.bf16.mxu0 0
    %4053 = vmatpush1.bf16.msra.mxu0 0
    %4054 = vmatprep.subr.bf16.mxu0 0
    %4055 = vmatpush1.bf16.msra.mxu0 0
    %4056 = vmatprep.subr.bf16.mxu0 0
    %4057 = vmatpush1.bf16.msra.mxu0 0
    %4058 = vmatprep.subr.bf16.mxu0 0
    %4059 = vmatpush1.bf16.msra.mxu0 0
    %4060 = vmatprep.mubr.bf16.mxu0 0
    %4061 = vmatmul.mubr.bf16.gmra.mrb[0].mxu0 %v4020
    %v4062 = vpop.f32.mrb[0].mxu0
    %v4063 = vadd.f32 0.0, %v4062
    %v4064 = vpop.f32.mrb[0].mxu0
    %v4065 = vpop.f32.mrb[0].mxu0
    %v4066 = vadd.f32 0.0, %v4065
    %v4067 = vpop.f32.mrb[0].mxu0
    %4068 = vmatprep.mubr.bf16.mxu0 0
    %4069 = vmatmul.mubr.bf16.gmra.mrb[0].mxu0 %v4023
    %v4070 = vpop.f32.mrb[0].mxu0
    %v4071 = vadd.f32 0.0, %v4070
    %v4072 = vpop.f32.mrb[0].mxu0
    %v4073 = vpop.f32.mrb[0].mxu0
    %v4074 = vpop.f32.mrb[0].mxu0
    %4075 = vdwg.mxu0
    %4076 = vrot.lane.b32.xlu0 %v2964, 64
    %v4077 = vpop.permute.xlu0 %4076
    %4078 = vrot.lane.b32.xlu0 %v2965, 64
    %v4079 = vpop.permute.xlu0 %4078
    %v4082 = vsel %vm1106, %v3820, 0
    %v4085 = vsel %vm1106, %v3821, 0
    %v4088 = vsel %vm89, %v4079, 0
    %4090 = vmatprep.subr.bf16.mxu0 0
    %4091 = vmatpush1.bf16.msra.mxu0 %v4077
    %4092 = vmatprep.subr.bf16.mxu0 0
    %4093 = vmatpush1.bf16.msra.mxu0 %v4088
    %4094 = vmatprep.subr.bf16.mxu0 0
    %4095 = vmatpush1.bf16.msra.mxu0 0
    %4096 = vmatprep.subr.bf16.mxu0 0
    %4097 = vmatpush1.bf16.msra.mxu0 0
    %4098 = vmatprep.subr.bf16.mxu0 0
    %4099 = vmatpush1.bf16.msra.mxu0 0
    %4100 = vmatprep.subr.bf16.mxu0 0
    %4101 = vmatpush1.bf16.msra.mxu0 0
    %4102 = vmatprep.subr.bf16.mxu0 0
    %4103 = vmatpush1.bf16.msra.mxu0 0
    %4104 = vmatprep.subr.bf16.mxu0 0
    %4105 = vmatpush1.bf16.msra.mxu0 0
    %4106 = vmatprep.subr.bf16.mxu0 0
    %4107 = vmatpush1.bf16.msra.mxu0 0
    %4108 = vmatprep.subr.bf16.mxu0 0
    %4109 = vmatpush1.bf16.msra.mxu0 0
    %4110 = vmatprep.subr.bf16.mxu0 0
    %4111 = vmatpush1.bf16.msra.mxu0 0
    %4112 = vmatprep.subr.bf16.mxu0 0
    %4113 = vmatpush1.bf16.msra.mxu0 0
    %4114 = vmatprep.subr.bf16.mxu0 0
    %4115 = vmatpush1.bf16.msra.mxu0 0
    %4116 = vmatprep.subr.bf16.mxu0 0
    %4117 = vmatpush1.bf16.msra.mxu0 0
    %4118 = vmatprep.subr.bf16.mxu0 0
    %4119 = vmatpush1.bf16.msra.mxu0 0
    %4120 = vmatprep.subr.bf16.mxu0 0
    %4121 = vmatpush1.bf16.msra.mxu0 0
    %4122 = vmatprep.mubr.bf16.mxu0 0
    %4123 = vmatmul.mubr.bf16.gmra.mrb[0].mxu0 %v4082
    %v4124 = vpop.f32.mrb[0].mxu0
    %v4125 = vadd.f32 0.0, %v4124
    %v4126 = vpop.f32.mrb[0].mxu0
    %v4127 = vpop.f32.mrb[0].mxu0
    %v4128 = vadd.f32 0.0, %v4127
    %v4129 = vpop.f32.mrb[0].mxu0
    %4130 = vmatprep.mubr.bf16.mxu0 0
    %4131 = vmatmul.mubr.bf16.gmra.mrb[0].mxu0 %v4085
    %v4132 = vpop.f32.mrb[0].mxu0
    %v4133 = vadd.f32 0.0, %v4132
    %v4134 = vpop.f32.mrb[0].mxu0
    %v4135 = vpop.f32.mrb[0].mxu0
    %v4136 = vpop.f32.mrb[0].mxu0
    %4137 = vdwg.mxu0
    %4138 = vrot.lane.b32.xlu0 %v2966, 64
    %v4139 = vpop.permute.xlu0 %4138
    %4140 = vrot.lane.b32.xlu0 %v2967, 64
    %v4141 = vpop.permute.xlu0 %4140
    %v4144 = vsel %vm1106, %v3822, 0
    %v4147 = vsel %vm1106, %v3823, 0
    %v4150 = vsel %vm89, %v4141, 0
    %4152 = vmatprep.subr.bf16.mxu0 0
    %4153 = vmatpush1.bf16.msra.mxu0 %v4139
    %4154 = vmatprep.subr.bf16.mxu0 0
    %4155 = vmatpush1.bf16.msra.mxu0 %v4150
    %4156 = vmatprep.subr.bf16.mxu0 0
    %4157 = vmatpush1.bf16.msra.mxu0 0
    %4158 = vmatprep.subr.bf16.mxu0 0
    %4159 = vmatpush1.bf16.msra.mxu0 0
    %4160 = vmatprep.subr.bf16.mxu0 0
    %4161 = vmatpush1.bf16.msra.mxu0 0
    %4162 = vmatprep.subr.bf16.mxu0 0
    %4163 = vmatpush1.bf16.msra.mxu0 0
    %4164 = vmatprep.subr.bf16.mxu0 0
    %4165 = vmatpush1.bf16.msra.mxu0 0
    %4166 = vmatprep.subr.bf16.mxu0 0
    %4167 = vmatpush1.bf16.msra.mxu0 0
    %4168 = vmatprep.subr.bf16.mxu0 0
    %4169 = vmatpush1.bf16.msra.mxu0 0
    %4170 = vmatprep.subr.bf16.mxu0 0
    %4171 = vmatpush1.bf16.msra.mxu0 0
    %4172 = vmatprep.subr.bf16.mxu0 0
    %4173 = vmatpush1.bf16.msra.mxu0 0
    %4174 = vmatprep.subr.bf16.mxu0 0
    %4175 = vmatpush1.bf16.msra.mxu0 0
    %4176 = vmatprep.subr.bf16.mxu0 0
    %4177 = vmatpush1.bf16.msra.mxu0 0
    %4178 = vmatprep.subr.bf16.mxu0 0
    %4179 = vmatpush1.bf16.msra.mxu0 0
    %4180 = vmatprep.subr.bf16.mxu0 0
    %4181 = vmatpush1.bf16.msra.mxu0 0
    %4182 = vmatprep.subr.bf16.mxu0 0
    %4183 = vmatpush1.bf16.msra.mxu0 0
    %4184 = vmatprep.mubr.bf16.mxu0 0
    %4185 = vmatmul.mubr.bf16.gmra.mrb[0].mxu0 %v4144
    %v4186 = vpop.f32.mrb[0].mxu0
    %v4187 = vadd.f32 0.0, %v4186
    %v4188 = vpop.f32.mrb[0].mxu0
    %v4189 = vpop.f32.mrb[0].mxu0
    %v4190 = vadd.f32 0.0, %v4189
    %v4191 = vpop.f32.mrb[0].mxu0
    %4192 = vmatprep.mubr.bf16.mxu0 0
    %4193 = vmatmul.mubr.bf16.gmra.mrb[0].mxu0 %v4147
    %v4194 = vpop.f32.mrb[0].mxu0
    %v4195 = vadd.f32 0.0, %v4194
    %v4196 = vpop.f32.mrb[0].mxu0
    %v4197 = vpop.f32.mrb[0].mxu0
    %v4198 = vpop.f32.mrb[0].mxu0
    %4199 = vdwg.mxu0
    %4200 = vrot.lane.b32.xlu0 %v2968, 64
    %v4201 = vpop.permute.xlu0 %4200
    %4202 = vrot.lane.b32.xlu0 %v2969, 64
    %v4203 = vpop.permute.xlu0 %4202
    %v4206 = vsel %vm1106, %v3824, 0
    %v4209 = vsel %vm1106, %v3825, 0
    %v4212 = vsel %vm89, %v4203, 0
    %4214 = vmatprep.subr.bf16.mxu0 0
    %4215 = vmatpush1.bf16.msra.mxu0 %v4201
    %4216 = vmatprep.subr.bf16.mxu0 0
    %4217 = vmatpush1.bf16.msra.mxu0 %v4212
    %4218 = vmatprep.subr.bf16.mxu0 0
    %4219 = vmatpush1.bf16.msra.mxu0 0
    %4220 = vmatprep.subr.bf16.mxu0 0
    %4221 = vmatpush1.bf16.msra.mxu0 0
    %4222 = vmatprep.subr.bf16.mxu0 0
    %4223 = vmatpush1.bf16.msra.mxu0 0
    %4224 = vmatprep.subr.bf16.mxu0 0
    %4225 = vmatpush1.bf16.msra.mxu0 0
    %4226 = vmatprep.subr.bf16.mxu0 0
    %4227 = vmatpush1.bf16.msra.mxu0 0
    %4228 = vmatprep.subr.bf16.mxu0 0
    %4229 = vmatpush1.bf16.msra.mxu0 0
    %4230 = vmatprep.subr.bf16.mxu0 0
    %4231 = vmatpush1.bf16.msra.mxu0 0
    %4232 = vmatprep.subr.bf16.mxu0 0
    %4233 = vmatpush1.bf16.msra.mxu0 0
    %4234 = vmatprep.subr.bf16.mxu0 0
    %4235 = vmatpush1.bf16.msra.mxu0 0
    %4236 = vmatprep.subr.bf16.mxu0 0
    %4237 = vmatpush1.bf16.msra.mxu0 0
    %4238 = vmatprep.subr.bf16.mxu0 0
    %4239 = vmatpush1.bf16.msra.mxu0 0
    %4240 = vmatprep.subr.bf16.mxu0 0
    %4241 = vmatpush1.bf16.msra.mxu0 0
    %4242 = vmatprep.subr.bf16.mxu0 0
    %4243 = vmatpush1.bf16.msra.mxu0 0
    %4244 = vmatprep.subr.bf16.mxu0 0
    %4245 = vmatpush1.bf16.msra.mxu0 0
    %4246 = vmatprep.mubr.bf16.mxu0 0
    %4247 = vmatmul.mubr.bf16.gmra.mrb[0].mxu0 %v4206
    %v4248 = vpop.f32.mrb[0].mxu0
    %v4249 = vadd.f32 0.0, %v4248
    %v4250 = vpop.f32.mrb[0].mxu0
    %v4251 = vpop.f32.mrb[0].mxu0
    %v4252 = vadd.f32 0.0, %v4251
    %v4253 = vpop.f32.mrb[0].mxu0
    %4254 = vmatprep.mubr.bf16.mxu0 0
    %4255 = vmatmul.mubr.bf16.gmra.mrb[0].mxu0 %v4209
    %v4256 = vpop.f32.mrb[0].mxu0
    %v4257 = vadd.f32 0.0, %v4256
    %v4258 = vpop.f32.mrb[0].mxu0
    %v4259 = vpop.f32.mrb[0].mxu0
    %v4260 = vpop.f32.mrb[0].mxu0
    %4261 = vdwg.mxu0
    %4262 = vrot.lane.b32.xlu0 %v2970, 64
    %v4263 = vpop.permute.xlu0 %4262
    %4264 = vrot.lane.b32.xlu0 %v2971, 64
    %v4265 = vpop.permute.xlu0 %4264
    %v4268 = vsel %vm1106, %v3826, 0
    %v4271 = vsel %vm1106, %v3827, 0
    %v4274 = vsel %vm89, %v4265, 0
    %4276 = vmatprep.subr.bf16.mxu0 0
    %4277 = vmatpush1.bf16.msra.mxu0 %v4263
    %4278 = vmatprep.subr.bf16.mxu0 0
    %4279 = vmatpush1.bf16.msra.mxu0 %v4274
    %4280 = vmatprep.subr.bf16.mxu0 0
    %4281 = vmatpush1.bf16.msra.mxu0 0
    %4282 = vmatprep.subr.bf16.mxu0 0
    %4283 = vmatpush1.bf16.msra.mxu0 0
    %4284 = vmatprep.subr.bf16.mxu0 0
    %4285 = vmatpush1.bf16.msra.mxu0 0
    %4286 = vmatprep.subr.bf16.mxu0 0
    %4287 = vmatpush1.bf16.msra.mxu0 0
    %4288 = vmatprep.subr.bf16.mxu0 0
    %4289 = vmatpush1.bf16.msra.mxu0 0
    %4290 = vmatprep.subr.bf16.mxu0 0
    %4291 = vmatpush1.bf16.msra.mxu0 0
    %4292 = vmatprep.subr.bf16.mxu0 0
    %4293 = vmatpush1.bf16.msra.mxu0 0
    %4294 = vmatprep.subr.bf16.mxu0 0
    %4295 = vmatpush1.bf16.msra.mxu0 0
    %4296 = vmatprep.subr.bf16.mxu0 0
    %4297 = vmatpush1.bf16.msra.mxu0 0
    %4298 = vmatprep.subr.bf16.mxu0 0
    %4299 = vmatpush1.bf16.msra.mxu0 0
    %4300 = vmatprep.subr.bf16.mxu0 0
    %4301 = vmatpush1.bf16.msra.mxu0 0
    %4302 = vmatprep.subr.bf16.mxu0 0
    %4303 = vmatpush1.bf16.msra.mxu0 0
    %4304 = vmatprep.subr.bf16.mxu0 0
    %4305 = vmatpush1.bf16.msra.mxu0 0
    %4306 = vmatprep.subr.bf16.mxu0 0
    %4307 = vmatpush1.bf16.msra.mxu0 0
    %4308 = vmatprep.mubr.bf16.mxu0 0
    %4309 = vmatmul.mubr.bf16.gmra.mrb[0].mxu0 %v4268
    %v4310 = vpop.f32.mrb[0].mxu0
    %v4311 = vadd.f32 0.0, %v4310
    %v4312 = vpop.f32.mrb[0].mxu0
    %v4313 = vpop.f32.mrb[0].mxu0
    %v4314 = vadd.f32 0.0, %v4313
    %v4315 = vpop.f32.mrb[0].mxu0
    %4316 = vmatprep.mubr.bf16.mxu0 0
    %4317 = vmatmul.mubr.bf16.gmra.mrb[0].mxu0 %v4271
    %v4318 = vpop.f32.mrb[0].mxu0
    %v4319 = vadd.f32 0.0, %v4318
    %v4320 = vpop.f32.mrb[0].mxu0
    %v4321 = vpop.f32.mrb[0].mxu0
    %v4322 = vpop.f32.mrb[0].mxu0
    %4323 = vdwg.mxu0
    %4336 = vrot.lane.b32.xlu0 %v4125, 16
    %v4337 = vpop.permute.xlu0 %4336
    %4338 = vrot.lane.b32.xlu0 %v4128, 16
    %v4339 = vpop.permute.xlu0 %4338
    %4340 = vrot.lane.b32.xlu0 %v4133, 16
    %v4341 = vpop.permute.xlu0 %4340
    %4342 = vrot.lane.b32.xlu0 %v4187, 16
    %v4343 = vpop.permute.xlu0 %4342
    %4344 = vrot.lane.b32.xlu0 %v4190, 16
    %v4345 = vpop.permute.xlu0 %4344
    %4346 = vrot.lane.b32.xlu0 %v4195, 16
    %v4347 = vpop.permute.xlu0 %4346
    %4348 = vrot.lane.b32.xlu0 %v4249, 16
    %v4349 = vpop.permute.xlu0 %4348
    %4350 = vrot.lane.b32.xlu0 %v4252, 16
    %v4351 = vpop.permute.xlu0 %4350
    %4352 = vrot.lane.b32.xlu0 %v4257, 16
    %v4353 = vpop.permute.xlu0 %4352
    %4354 = vrot.lane.b32.xlu0 %v4311, 16
    %v4355 = vpop.permute.xlu0 %4354
    %4356 = vrot.lane.b32.xlu0 %v4314, 16
    %v4357 = vpop.permute.xlu0 %4356
    %4358 = vrot.lane.b32.xlu0 %v4319, 16
    %v4359 = vpop.permute.xlu0 %4358
    %v4372 = vsel %vm533, %v3877, %v4337
    %v4373 = vsel %vm533, %v3880, %v4339
    %v4374 = vsel %vm533, %v3885, %v4341
    %v4375 = vsel %vm533, %v3939, %v4343
    %v4376 = vsel %vm533, %v3942, %v4345
    %v4377 = vsel %vm533, %v3947, %v4347
    %v4378 = vsel %vm533, %v4001, %v4349
    %v4379 = vsel %vm533, %v4004, %v4351
    %v4380 = vsel %vm533, %v4009, %v4353
    %v4381 = vsel %vm533, %v4063, %v4355
    %v4382 = vsel %vm533, %v4066, %v4357
    %v4383 = vsel %vm533, %v4071, %v4359
    %v4384 = vpack.c.bf16 %v4373, %v4372
    %v4385 = vpack.c.bf16 %v4375, %v4374
    %v4386 = vpack.c.bf16 %v4377, %v4376
    %v4387 = vpack.c.bf16 %v4379, %v4378
    %v4388 = vpack.c.bf16 %v4381, %v4380
    %v4389 = vpack.c.bf16 %v4383, %v4382
    %v4390 = vld [vmem:[%s1 + $0x58] sm:$0xf]
    %v4391 = vld [vmem:[%s1 + $0x5c] sm:$0xf]
    %v4392 = vld [vmem:[%s1 + $0x60] sm:$0xf]
    %v4393 = vld [vmem:[%s1 + $0x64] sm:$0xf]
    %v4394 = vld [vmem:[%s2 + $0x3] sm:$0x1]
    %v4395 = vlaneseq
    %v4396 = vshrl.u32 %v4395, 7
    %v4397 = vsub.s32 0, %v4396
    %v4398 = vrot.slane %v4394, %v4397
    %v4403 = vunpack.c.l.b16 %v4390
    %v4404 = vunpack.c.l.b16 %v4391
    %v4405 = vunpack.c.l.b16 %v4392
    %v4406 = vunpack.c.l.b16 %v4393
    %v4407 = vpack.c.b16 %v4404, %v4403
    %v4408 = vpack.c.b16 %v4406, %v4405
    %v4412 = vsel %vm179, %v4384, 0
    %v4415 = vsel %vm179, %v4385, 0
    %v4418 = vsel %vm179, %v4386, 0
    %v4421 = vsel %vm179, %v4387, 0
    %v4424 = vsel %vm179, %v4388, 0
    %v4427 = vsel %vm179, %v4389, 0
    %4429 = vmatprep.subr.bf16.mxu0 0
    %4430 = vmatpush1.bf16.msra.mxu0 %v4407
    %4431 = vmatprep.subr.bf16.mxu0 0
    %4432 = vmatpush1.bf16.msra.mxu0 %v4408
    %4433 = vmatprep.subr.bf16.mxu0 0
    %4434 = vmatpush1.bf16.msra.mxu0 0
    %4435 = vmatprep.subr.bf16.mxu0 0
    %4436 = vmatpush1.bf16.msra.mxu0 0
    %4437 = vmatprep.subr.bf16.mxu0 0
    %4438 = vmatpush1.bf16.msra.mxu0 0
    %4439 = vmatprep.subr.bf16.mxu0 0
    %4440 = vmatpush1.bf16.msra.mxu0 0
    %4441 = vmatprep.subr.bf16.mxu0 0
    %4442 = vmatpush1.bf16.msra.mxu0 0
    %4443 = vmatprep.subr.bf16.mxu0 0
    %4444 = vmatpush1.bf16.msra.mxu0 0
    %4445 = vmatprep.subr.bf16.mxu0 0
    %4446 = vmatpush1.bf16.msra.mxu0 0
    %4447 = vmatprep.subr.bf16.mxu0 0
    %4448 = vmatpush1.bf16.msra.mxu0 0
    %4449 = vmatprep.subr.bf16.mxu0 0
    %4450 = vmatpush1.bf16.msra.mxu0 0
    %4451 = vmatprep.subr.bf16.mxu0 0
    %4452 = vmatpush1.bf16.msra.mxu0 0
    %4453 = vmatprep.subr.bf16.mxu0 0
    %4454 = vmatpush1.bf16.msra.mxu0 0
    %4455 = vmatprep.subr.bf16.mxu0 0
    %4456 = vmatpush1.bf16.msra.mxu0 0
    %4457 = vmatprep.subr.bf16.mxu0 0
    %4458 = vmatpush1.bf16.msra.mxu0 0
    %4459 = vmatprep.subr.bf16.mxu0 0
    %4460 = vmatpush1.bf16.msra.mxu0 0
    %4461 = vmatprep.mubr.bf16.mxu0 0
    %4462 = vmatmul.mubr.bf16.gmra.mrb[0].mxu0 %v4412
    %v4463 = vpop.f32.mrb[0].mxu0
    %v4464 = vadd.f32 %v4398, %v4463
    %v4465 = vpop.f32.mrb[0].mxu0
    %v4466 = vpop.f32.mrb[0].mxu0
    %v4467 = vadd.f32 %v4398, %v4466
    %v4468 = vpop.f32.mrb[0].mxu0
    %4469 = vmatprep.mubr.bf16.mxu0 0
    %4470 = vmatmul.mubr.bf16.gmra.mrb[0].mxu0 %v4415
    %v4471 = vpop.f32.mrb[0].mxu0
    %v4472 = vadd.f32 %v4398, %v4471
    %v4473 = vpop.f32.mrb[0].mxu0
    %v4474 = vpop.f32.mrb[0].mxu0
    %v4475 = vadd.f32 %v4398, %v4474
    %v4476 = vpop.f32.mrb[0].mxu0
    %4477 = vmatprep.mubr.bf16.mxu0 0
    %4478 = vmatmul.mubr.bf16.gmra.mrb[0].mxu0 %v4418
    %v4479 = vpop.f32.mrb[0].mxu0
    %v4480 = vadd.f32 %v4398, %v4479
    %v4481 = vpop.f32.mrb[0].mxu0
    %v4482 = vpop.f32.mrb[0].mxu0
    %v4483 = vadd.f32 %v4398, %v4482
    %v4484 = vpop.f32.mrb[0].mxu0
    %4485 = vmatprep.mubr.bf16.mxu0 0
    %4486 = vmatmul.mubr.bf16.gmra.mrb[0].mxu0 %v4421
    %v4487 = vpop.f32.mrb[0].mxu0
    %v4488 = vadd.f32 %v4398, %v4487
    %v4489 = vpop.f32.mrb[0].mxu0
    %v4490 = vpop.f32.mrb[0].mxu0
    %v4491 = vadd.f32 %v4398, %v4490
    %v4492 = vpop.f32.mrb[0].mxu0
    %4493 = vmatprep.mubr.bf16.mxu0 0
    %4494 = vmatmul.mubr.bf16.gmra.mrb[0].mxu0 %v4424
    %v4495 = vpop.f32.mrb[0].mxu0
    %v4496 = vadd.f32 %v4398, %v4495
    %v4497 = vpop.f32.mrb[0].mxu0
    %v4498 = vpop.f32.mrb[0].mxu0
    %v4499 = vadd.f32 %v4398, %v4498
    %v4500 = vpop.f32.mrb[0].mxu0
    %4501 = vmatprep.mubr.bf16.mxu0 0
    %4502 = vmatmul.mubr.bf16.gmra.mrb[0].mxu0 %v4427
    %v4503 = vpop.f32.mrb[0].mxu0
    %v4504 = vadd.f32 %v4398, %v4503
    %v4505 = vpop.f32.mrb[0].mxu0
    %v4506 = vpop.f32.mrb[0].mxu0
    %v4507 = vadd.f32 %v4398, %v4506
    %v4508 = vpop.f32.mrb[0].mxu0
    %4509 = vdwg.mxu0
    %v4510 = vadd.f32 %v2614, %v4464
    %v4511 = vadd.f32 %v2615, %v4467
    %v4512 = vadd.f32 %v2616, %v4472
    %v4513 = vadd.f32 %v2617, %v4475
    %v4514 = vadd.f32 %v2618, %v4480
    %v4515 = vadd.f32 %v2619, %v4483
    %v4516 = vadd.f32 %v2620, %v4488
    %v4517 = vadd.f32 %v2621, %v4491
    %v4518 = vadd.f32 %v2622, %v4496
    %v4519 = vadd.f32 %v2623, %v4499
    %v4520 = vadd.f32 %v2624, %v4504
    %v4521 = vadd.f32 %v2625, %v4507
    %v4522 = vsel %vm179, %v4510, 0.0
    %4523 = vadd.xlane.f32.xlu0 %v4522
    %v4524 = vpop.xlane.xlu0 %4523
    %v4525 = vsel %vm179, %v4511, 0.0
    %4526 = vadd.xlane.f32.xlu0 %v4525
    %v4527 = vpop.xlane.xlu0 %4526
    %v4528 = vsel %vm179, %v4512, 0.0
    %4529 = vadd.xlane.f32.xlu0 %v4528
    %v4530 = vpop.xlane.xlu0 %4529
    %v4531 = vsel %vm179, %v4513, 0.0
    %4532 = vadd.xlane.f32.xlu0 %v4531
    %v4533 = vpop.xlane.xlu0 %4532
    %v4534 = vsel %vm179, %v4514, 0.0
    %4535 = vadd.xlane.f32.xlu0 %v4534
    %v4536 = vpop.xlane.xlu0 %4535
    %v4537 = vsel %vm179, %v4515, 0.0
    %4538 = vadd.xlane.f32.xlu0 %v4537
    %v4539 = vpop.xlane.xlu0 %4538
    %v4540 = vsel %vm179, %v4516, 0.0
    %4541 = vadd.xlane.f32.xlu0 %v4540
    %v4542 = vpop.xlane.xlu0 %4541
    %v4543 = vsel %vm179, %v4517, 0.0
    %4544 = vadd.xlane.f32.xlu0 %v4543
    %v4545 = vpop.xlane.xlu0 %4544
    %v4546 = vsel %vm179, %v4518, 0.0
    %4547 = vadd.xlane.f32.xlu0 %v4546
    %v4548 = vpop.xlane.xlu0 %4547
    %v4549 = vsel %vm179, %v4519, 0.0
    %4550 = vadd.xlane.f32.xlu0 %v4549
    %v4551 = vpop.xlane.xlu0 %4550
    %v4552 = vsel %vm179, %v4520, 0.0
    %4553 = vadd.xlane.f32.xlu0 %v4552
    %v4554 = vpop.xlane.xlu0 %4553
    %v4555 = vsel %vm179, %v4521, 0.0
    %4556 = vadd.xlane.f32.xlu0 %v4555
    %v4557 = vpop.xlane.xlu0 %4556
    %v4558 = vmul.f32 %v4524, %v216
    %v4559 = vmul.f32 %v4527, %v216
    %v4560 = vmul.f32 %v4530, %v216
    %v4561 = vmul.f32 %v4533, %v216
    %v4562 = vmul.f32 %v4536, %v216
    %v4563 = vmul.f32 %v4539, %v216
    %v4564 = vmul.f32 %v4542, %v216
    %v4565 = vmul.f32 %v4545, %v216
    %v4566 = vmul.f32 %v4548, %v216
    %v4567 = vmul.f32 %v4551, %v216
    %v4568 = vmul.f32 %v4554, %v216
    %v4569 = vmul.f32 %v4557, %v216
    %v4570 = vsub.f32 %v4510, %v4558
    %v4571 = vsub.f32 %v4511, %v4559
    %v4572 = vsub.f32 %v4512, %v4560
    %v4573 = vsub.f32 %v4513, %v4561
    %v4574 = vsub.f32 %v4514, %v4562
    %v4575 = vsub.f32 %v4515, %v4563
    %v4576 = vsub.f32 %v4516, %v4564
    %v4577 = vsub.f32 %v4517, %v4565
    %v4578 = vsub.f32 %v4518, %v4566
    %v4579 = vsub.f32 %v4519, %v4567
    %v4580 = vsub.f32 %v4520, %v4568
    %v4581 = vsub.f32 %v4521, %v4569
    %v4582 = vmul.f32 %v4570, %v4570
    %v4583 = vmul.f32 %v4571, %v4571
    %v4584 = vmul.f32 %v4572, %v4572
    %v4585 = vmul.f32 %v4573, %v4573
    %v4586 = vmul.f32 %v4574, %v4574
    %v4587 = vmul.f32 %v4575, %v4575
    %v4588 = vmul.f32 %v4576, %v4576
    %v4589 = vmul.f32 %v4577, %v4577
    %v4590 = vmul.f32 %v4578, %v4578
    %v4591 = vmul.f32 %v4579, %v4579
    %v4592 = vmul.f32 %v4580, %v4580
    %v4593 = vmul.f32 %v4581, %v4581
    %v4594 = vsel %vm179, %v4582, 0.0
    %4595 = vadd.xlane.f32.xlu0 %v4594
    %v4596 = vpop.xlane.xlu0 %4595
    %v4597 = vsel %vm179, %v4583, 0.0
    %4598 = vadd.xlane.f32.xlu0 %v4597
    %v4599 = vpop.xlane.xlu0 %4598
    %v4600 = vsel %vm179, %v4584, 0.0
    %4601 = vadd.xlane.f32.xlu0 %v4600
    %v4602 = vpop.xlane.xlu0 %4601
    %v4603 = vsel %vm179, %v4585, 0.0
    %4604 = vadd.xlane.f32.xlu0 %v4603
    %v4605 = vpop.xlane.xlu0 %4604
    %v4606 = vsel %vm179, %v4586, 0.0
    %4607 = vadd.xlane.f32.xlu0 %v4606
    %v4608 = vpop.xlane.xlu0 %4607
    %v4609 = vsel %vm179, %v4587, 0.0
    %4610 = vadd.xlane.f32.xlu0 %v4609
    %v4611 = vpop.xlane.xlu0 %4610
    %v4612 = vsel %vm179, %v4588, 0.0
    %4613 = vadd.xlane.f32.xlu0 %v4612
    %v4614 = vpop.xlane.xlu0 %4613
    %v4615 = vsel %vm179, %v4589, 0.0
    %4616 = vadd.xlane.f32.xlu0 %v4615
    %v4617 = vpop.xlane.xlu0 %4616
    %v4618 = vsel %vm179, %v4590, 0.0
    %4619 = vadd.xlane.f32.xlu0 %v4618
    %v4620 = vpop.xlane.xlu0 %4619
    %v4621 = vsel %vm179, %v4591, 0.0
    %4622 = vadd.xlane.f32.xlu0 %v4621
    %v4623 = vpop.xlane.xlu0 %4622
    %v4624 = vsel %vm179, %v4592, 0.0
    %4625 = vadd.xlane.f32.xlu0 %v4624
    %v4626 = vpop.xlane.xlu0 %4625
    %v4627 = vsel %vm179, %v4593, 0.0
    %4628 = vadd.xlane.f32.xlu0 %v4627
    %v4629 = vpop.xlane.xlu0 %4628
    %v4630 = vmul.f32 %v4596, %v216
    %v4631 = vmul.f32 %v4599, %v216
    %v4632 = vmul.f32 %v4602, %v216
    %v4633 = vmul.f32 %v4605, %v216
    %v4634 = vmul.f32 %v4608, %v216
    %v4635 = vmul.f32 %v4611, %v216
    %v4636 = vmul.f32 %v4614, %v216
    %v4637 = vmul.f32 %v4617, %v216
    %v4638 = vmul.f32 %v4620, %v216
    %v4639 = vmul.f32 %v4623, %v216
    %v4640 = vmul.f32 %v4626, %v216
    %v4641 = vmul.f32 %v4629, %v216
    %v4642 = vadd.f32 %v4630, 1e-05
    %v4643 = vadd.f32 %v4631, 1e-05
    %v4644 = vadd.f32 %v4632, 1e-05
    %v4645 = vadd.f32 %v4633, 1e-05
    %v4646 = vadd.f32 %v4634, 1e-05
    %v4647 = vadd.f32 %v4635, 1e-05
    %v4648 = vadd.f32 %v4636, 1e-05
    %v4649 = vadd.f32 %v4637, 1e-05
    %v4650 = vadd.f32 %v4638, 1e-05
    %v4651 = vadd.f32 %v4639, 1e-05
    %v4652 = vadd.f32 %v4640, 1e-05
    %v4653 = vadd.f32 %v4641, 1e-05
    %v4654 = vrsqrt.pop %v4642
    %v4655 = vrsqrt.pop %v4643
    %v4656 = vrsqrt.pop %v4644
    %v4657 = vrsqrt.pop %v4645
    %v4658 = vrsqrt.pop %v4646
    %v4659 = vrsqrt.pop %v4647
    %v4660 = vrsqrt.pop %v4648
    %v4661 = vrsqrt.pop %v4649
    %v4662 = vrsqrt.pop %v4650
    %v4663 = vrsqrt.pop %v4651
    %v4664 = vrsqrt.pop %v4652
    %v4665 = vrsqrt.pop %v4653
    %v4666 = vmul.f32 %v4570, %v4654
    %v4667 = vmul.f32 %v4571, %v4655
    %v4668 = vmul.f32 %v4572, %v4656
    %v4669 = vmul.f32 %v4573, %v4657
    %v4670 = vmul.f32 %v4574, %v4658
    %v4671 = vmul.f32 %v4575, %v4659
    %v4672 = vmul.f32 %v4576, %v4660
    %v4673 = vmul.f32 %v4577, %v4661
    %v4674 = vmul.f32 %v4578, %v4662
    %v4675 = vmul.f32 %v4579, %v4663
    %v4676 = vmul.f32 %v4580, %v4664
    %v4677 = vmul.f32 %v4581, %v4665
    %v4678 = vpack.c.bf16 %v4667, %v4666
    %v4679 = vpack.c.bf16 %v4669, %v4668
    %v4680 = vpack.c.bf16 %v4671, %v4670
    %v4681 = vpack.c.bf16 %v4673, %v4672
    %v4682 = vpack.c.bf16 %v4675, %v4674
    %v4683 = vpack.c.bf16 %v4677, %v4676
    %v4684 = vld [vmem:[%s1 + $0x78] sm:$0xf]
    %v4685 = vld [vmem:[%s1 + $0x7c] sm:$0xf]
    %v4686 = vld [vmem:[%s1 + $0x80] sm:$0xf]
    %v4687 = vld [vmem:[%s1 + $0x84] sm:$0xf]
    %v4688 = vld [vmem:[%s2 + $0x5] sm:$0x1]
    %v4689 = vlaneseq
    %v4690 = vshrl.u32 %v4689, 7
    %v4691 = vsub.s32 0, %v4690
    %v4692 = vrot.slane %v4688, %v4691
    %v4697 = vunpack.c.l.b16 %v4684
    %v4698 = vunpack.c.l.b16 %v4685
    %v4699 = vunpack.c.l.b16 %v4686
    %v4700 = vunpack.c.l.b16 %v4687
    %v4701 = vpack.c.b16 %v4698, %v4697
    %v4702 = vpack.c.b16 %v4700, %v4699
    %v4706 = vsel %vm179, %v4678, 0
    %v4709 = vsel %vm179, %v4679, 0
    %v4712 = vsel %vm179, %v4680, 0
    %v4715 = vsel %vm179, %v4681, 0
    %v4718 = vsel %vm179, %v4682, 0
    %v4721 = vsel %vm179, %v4683, 0
    %4723 = vmatprep.subr.bf16.mxu0 0
    %4724 = vmatpush1.bf16.msra.mxu0 %v4701
    %4725 = vmatprep.subr.bf16.mxu0 0
    %4726 = vmatpush1.bf16.msra.mxu0 %v4702
    %4727 = vmatprep.subr.bf16.mxu0 0
    %4728 = vmatpush1.bf16.msra.mxu0 0
    %4729 = vmatprep.subr.bf16.mxu0 0
    %4730 = vmatpush1.bf16.msra.mxu0 0
    %4731 = vmatprep.subr.bf16.mxu0 0
    %4732 = vmatpush1.bf16.msra.mxu0 0
    %4733 = vmatprep.subr.bf16.mxu0 0
    %4734 = vmatpush1.bf16.msra.mxu0 0
    %4735 = vmatprep.subr.bf16.mxu0 0
    %4736 = vmatpush1.bf16.msra.mxu0 0
    %4737 = vmatprep.subr.bf16.mxu0 0
    %4738 = vmatpush1.bf16.msra.mxu0 0
    %4739 = vmatprep.subr.bf16.mxu0 0
    %4740 = vmatpush1.bf16.msra.mxu0 0
    %4741 = vmatprep.subr.bf16.mxu0 0
    %4742 = vmatpush1.bf16.msra.mxu0 0
    %4743 = vmatprep.subr.bf16.mxu0 0
    %4744 = vmatpush1.bf16.msra.mxu0 0
    %4745 = vmatprep.subr.bf16.mxu0 0
    %4746 = vmatpush1.bf16.msra.mxu0 0
    %4747 = vmatprep.subr.bf16.mxu0 0
    %4748 = vmatpush1.bf16.msra.mxu0 0
    %4749 = vmatprep.subr.bf16.mxu0 0
    %4750 = vmatpush1.bf16.msra.mxu0 0
    %4751 = vmatprep.subr.bf16.mxu0 0
    %4752 = vmatpush1.bf16.msra.mxu0 0
    %4753 = vmatprep.subr.bf16.mxu0 0
    %4754 = vmatpush1.bf16.msra.mxu0 0
    %4755 = vmatprep.mubr.bf16.mxu0 0
    %4756 = vmatmul.mubr.bf16.gmra.mrb[0].mxu0 %v4706
    %v4757 = vpop.f32.mrb[0].mxu0
    %v4758 = vadd.f32 %v4692, %v4757
    %v4759 = vpop.f32.mrb[0].mxu0
    %v4760 = vpop.f32.mrb[0].mxu0
    %v4761 = vadd.f32 %v4692, %v4760
    %v4762 = vpop.f32.mrb[0].mxu0
    %4763 = vmatprep.mubr.bf16.mxu0 0
    %4764 = vmatmul.mubr.bf16.gmra.mrb[0].mxu0 %v4709
    %v4765 = vpop.f32.mrb[0].mxu0
    %v4766 = vadd.f32 %v4692, %v4765
    %v4767 = vpop.f32.mrb[0].mxu0
    %v4768 = vpop.f32.mrb[0].mxu0
    %v4769 = vadd.f32 %v4692, %v4768
    %v4770 = vpop.f32.mrb[0].mxu0
    %4771 = vmatprep.mubr.bf16.mxu0 0
    %4772 = vmatmul.mubr.bf16.gmra.mrb[0].mxu0 %v4712
    %v4773 = vpop.f32.mrb[0].mxu0
    %v4774 = vadd.f32 %v4692, %v4773
    %v4775 = vpop.f32.mrb[0].mxu0
    %v4776 = vpop.f32.mrb[0].mxu0
    %v4777 = vadd.f32 %v4692, %v4776
    %v4778 = vpop.f32.mrb[0].mxu0
    %4779 = vmatprep.mubr.bf16.mxu0 0
    %4780 = vmatmul.mubr.bf16.gmra.mrb[0].mxu0 %v4715
    %v4781 = vpop.f32.mrb[0].mxu0
    %v4782 = vadd.f32 %v4692, %v4781
    %v4783 = vpop.f32.mrb[0].mxu0
    %v4784 = vpop.f32.mrb[0].mxu0
    %v4785 = vadd.f32 %v4692, %v4784
    %v4786 = vpop.f32.mrb[0].mxu0
    %4787 = vmatprep.mubr.bf16.mxu0 0
    %4788 = vmatmul.mubr.bf16.gmra.mrb[0].mxu0 %v4718
    %v4789 = vpop.f32.mrb[0].mxu0
    %v4790 = vadd.f32 %v4692, %v4789
    %v4791 = vpop.f32.mrb[0].mxu0
    %v4792 = vpop.f32.mrb[0].mxu0
    %v4793 = vadd.f32 %v4692, %v4792
    %v4794 = vpop.f32.mrb[0].mxu0
    %4795 = vmatprep.mubr.bf16.mxu0 0
    %4796 = vmatmul.mubr.bf16.gmra.mrb[0].mxu0 %v4721
    %v4797 = vpop.f32.mrb[0].mxu0
    %v4798 = vadd.f32 %v4692, %v4797
    %v4799 = vpop.f32.mrb[0].mxu0
    %v4800 = vpop.f32.mrb[0].mxu0
    %v4801 = vadd.f32 %v4692, %v4800
    %v4802 = vpop.f32.mrb[0].mxu0
    %4803 = vdwg.mxu0
    %v4804 = vmul.f32 %v4758, %v4758
    %v4805 = vmul.f32 %v4761, %v4761
    %v4806 = vmul.f32 %v4766, %v4766
    %v4807 = vmul.f32 %v4769, %v4769
    %v4808 = vmul.f32 %v4774, %v4774
    %v4809 = vmul.f32 %v4777, %v4777
    %v4810 = vmul.f32 %v4782, %v4782
    %v4811 = vmul.f32 %v4785, %v4785
    %v4812 = vmul.f32 %v4790, %v4790
    %v4813 = vmul.f32 %v4793, %v4793
    %v4814 = vmul.f32 %v4798, %v4798
    %v4815 = vmul.f32 %v4801, %v4801
    %v4816 = vmul.f32 %v4758, %v4804
    %v4817 = vmul.f32 %v4761, %v4805
    %v4818 = vmul.f32 %v4766, %v4806
    %v4819 = vmul.f32 %v4769, %v4807
    %v4820 = vmul.f32 %v4774, %v4808
    %v4821 = vmul.f32 %v4777, %v4809
    %v4822 = vmul.f32 %v4782, %v4810
    %v4823 = vmul.f32 %v4785, %v4811
    %v4824 = vmul.f32 %v4790, %v4812
    %v4825 = vmul.f32 %v4793, %v4813
    %v4826 = vmul.f32 %v4798, %v4814
    %v4827 = vmul.f32 %v4801, %v4815
    %v4828 = vmul.f32 %v4816, 0.044715
    %v4829 = vmul.f32 %v4817, 0.044715
    %v4830 = vmul.f32 %v4818, 0.044715
    %v4831 = vmul.f32 %v4819, 0.044715
    %v4832 = vmul.f32 %v4820, 0.044715
    %v4833 = vmul.f32 %v4821, 0.044715
    %v4834 = vmul.f32 %v4822, 0.044715
    %v4835 = vmul.f32 %v4823, 0.044715
    %v4836 = vmul.f32 %v4824, 0.044715
    %v4837 = vmul.f32 %v4825, 0.044715
    %v4838 = vmul.f32 %v4826, 0.044715
    %v4839 = vmul.f32 %v4827, 0.044715
    %v4840 = vadd.f32 %v4758, %v4828
    %v4841 = vadd.f32 %v4761, %v4829
    %v4842 = vadd.f32 %v4766, %v4830
    %v4843 = vadd.f32 %v4769, %v4831
    %v4844 = vadd.f32 %v4774, %v4832
    %v4845 = vadd.f32 %v4777, %v4833
    %v4846 = vadd.f32 %v4782, %v4834
    %v4847 = vadd.f32 %v4785, %v4835
    %v4848 = vadd.f32 %v4790, %v4836
    %v4849 = vadd.f32 %v4793, %v4837
    %v4850 = vadd.f32 %v4798, %v4838
    %v4851 = vadd.f32 %v4801, %v4839
    %v4852 = vmul.f32 %v4840, 0.7978846
    %v4853 = vmul.f32 %v4841, 0.7978846
    %v4854 = vmul.f32 %v4842, 0.7978846
    %v4855 = vmul.f32 %v4843, 0.7978846
    %v4856 = vmul.f32 %v4844, 0.7978846
    %v4857 = vmul.f32 %v4845, 0.7978846
    %v4858 = vmul.f32 %v4846, 0.7978846
    %v4859 = vmul.f32 %v4847, 0.7978846
    %v4860 = vmul.f32 %v4848, 0.7978846
    %v4861 = vmul.f32 %v4849, 0.7978846
    %v4862 = vmul.f32 %v4850, 0.7978846
    %v4863 = vmul.f32 %v4851, 0.7978846
    %v4864 = vtanh.pop %v4852
    %v4865 = vtanh.pop %v4853
    %v4866 = vtanh.pop %v4854
    %v4867 = vtanh.pop %v4855
    %v4868 = vtanh.pop %v4856
    %v4869 = vtanh.pop %v4857
    %v4870 = vtanh.pop %v4858
    %v4871 = vtanh.pop %v4859
    %v4872 = vtanh.pop %v4860
    %v4873 = vtanh.pop %v4861
    %v4874 = vtanh.pop %v4862
    %v4875 = vtanh.pop %v4863
    %v4876 = vadd.f32 %v4864, 1.0
    %v4877 = vadd.f32 %v4865, 1.0
    %v4878 = vadd.f32 %v4866, 1.0
    %v4879 = vadd.f32 %v4867, 1.0
    %v4880 = vadd.f32 %v4868, 1.0
    %v4881 = vadd.f32 %v4869, 1.0
    %v4882 = vadd.f32 %v4870, 1.0
    %v4883 = vadd.f32 %v4871, 1.0
    %v4884 = vadd.f32 %v4872, 1.0
    %v4885 = vadd.f32 %v4873, 1.0
    %v4886 = vadd.f32 %v4874, 1.0
    %v4887 = vadd.f32 %v4875, 1.0
    %v4888 = vmul.f32 %v4876, 0.5
    %v4889 = vmul.f32 %v4877, 0.5
    %v4890 = vmul.f32 %v4878, 0.5
    %v4891 = vmul.f32 %v4879, 0.5
    %v4892 = vmul.f32 %v4880, 0.5
    %v4893 = vmul.f32 %v4881, 0.5
    %v4894 = vmul.f32 %v4882, 0.5
    %v4895 = vmul.f32 %v4883, 0.5
    %v4896 = vmul.f32 %v4884, 0.5
    %v4897 = vmul.f32 %v4885, 0.5
    %v4898 = vmul.f32 %v4886, 0.5
    %v4899 = vmul.f32 %v4887, 0.5
    %v4900 = vmul.f32 %v4758, %v4888
    %v4901 = vmul.f32 %v4761, %v4889
    %v4902 = vmul.f32 %v4766, %v4890
    %v4903 = vmul.f32 %v4769, %v4891
    %v4904 = vmul.f32 %v4774, %v4892
    %v4905 = vmul.f32 %v4777, %v4893
    %v4906 = vmul.f32 %v4782, %v4894
    %v4907 = vmul.f32 %v4785, %v4895
    %v4908 = vmul.f32 %v4790, %v4896
    %v4909 = vmul.f32 %v4793, %v4897
    %v4910 = vmul.f32 %v4798, %v4898
    %v4911 = vmul.f32 %v4801, %v4899
    %v4912 = vpack.c.bf16 %v4901, %v4900
    %v4913 = vpack.c.bf16 %v4903, %v4902
    %v4914 = vpack.c.bf16 %v4905, %v4904
    %v4915 = vpack.c.bf16 %v4907, %v4906
    %v4916 = vpack.c.bf16 %v4909, %v4908
    %v4917 = vpack.c.bf16 %v4911, %v4910
    %v4918 = vld [vmem:[%s1 + $0xa8] sm:$0xf]
    %v4919 = vld [vmem:[%s1 + $0xac] sm:$0xf]
    %v4920 = vld [vmem:[%s1 + $0xb0] sm:$0xf]
    %v4921 = vld [vmem:[%s1 + $0xb4] sm:$0xf]
    %v4922 = vld [vmem:[%s1 + $0xb8] sm:$0xf]
    %v4923 = vld [vmem:[%s1 + $0xbc] sm:$0xf]
    %v4924 = vld [vmem:[%s1 + $0xc0] sm:$0xf]
    %v4925 = vld [vmem:[%s1 + $0xc4] sm:$0xf]
    %v4926 = vld [vmem:[%s2 + $0x7] sm:$0x1]
    %v4927 = vlaneseq
    %v4928 = vshrl.u32 %v4927, 7
    %v4929 = vsub.s32 0, %v4928
    %v4930 = vrot.slane %v4926, %v4929
    %v4939 = vunpack.c.l.b16 %v4918
    %v4940 = vunpack.c.l.b16 %v4919
    %v4941 = vunpack.c.l.b16 %v4920
    %v4942 = vunpack.c.l.b16 %v4921
    %v4943 = vunpack.c.l.b16 %v4922
    %v4944 = vunpack.c.l.b16 %v4923
    %v4945 = vunpack.c.l.b16 %v4924
    %v4946 = vunpack.c.l.b16 %v4925
    %v4947 = vpack.c.b16 %v4940, %v4939
    %v4948 = vpack.c.b16 %v4942, %v4941
    %v4949 = vpack.c.b16 %v4944, %v4943
    %v4950 = vpack.c.b16 %v4946, %v4945
    %v4956 = vsel %vm2514, %v4912, 0
    %v4959 = vsel %vm2514, %v4913, 0
    %v4962 = vsel %vm2514, %v4914, 0
    %v4965 = vsel %vm2514, %v4915, 0
    %v4968 = vsel %vm2514, %v4916, 0
    %v4971 = vsel %vm2514, %v4917, 0
    %4973 = vmatprep.subr.bf16.mxu0 0
    %4974 = vmatpush1.bf16.msra.mxu0 %v4947
    %4975 = vmatprep.subr.bf16.mxu0 0
    %4976 = vmatpush1.bf16.msra.mxu0 %v4948
    %4977 = vmatprep.subr.bf16.mxu0 0
    %4978 = vmatpush1.bf16.msra.mxu0 %v4949
    %4979 = vmatprep.subr.bf16.mxu0 0
    %4980 = vmatpush1.bf16.msra.mxu0 %v4950
    %4981 = vmatprep.subr.bf16.mxu0 0
    %4982 = vmatpush1.bf16.msra.mxu0 0
    %4983 = vmatprep.subr.bf16.mxu0 0
    %4984 = vmatpush1.bf16.msra.mxu0 0
    %4985 = vmatprep.subr.bf16.mxu0 0
    %4986 = vmatpush1.bf16.msra.mxu0 0
    %4987 = vmatprep.subr.bf16.mxu0 0
    %4988 = vmatpush1.bf16.msra.mxu0 0
    %4989 = vmatprep.subr.bf16.mxu0 0
    %4990 = vmatpush1.bf16.msra.mxu0 0
    %4991 = vmatprep.subr.bf16.mxu0 0
    %4992 = vmatpush1.bf16.msra.mxu0 0
    %4993 = vmatprep.subr.bf16.mxu0 0
    %4994 = vmatpush1.bf16.msra.mxu0 0
    %4995 = vmatprep.subr.bf16.mxu0 0
    %4996 = vmatpush1.bf16.msra.mxu0 0
    %4997 = vmatprep.subr.bf16.mxu0 0
    %4998 = vmatpush1.bf16.msra.mxu0 0
    %4999 = vmatprep.subr.bf16.mxu0 0
    %5000 = vmatpush1.bf16.msra.mxu0 0
    %5001 = vmatprep.subr.bf16.mxu0 0
    %5002 = vmatpush1.bf16.msra.mxu0 0
    %5003 = vmatprep.subr.bf16.mxu0 0
    %5004 = vmatpush1.bf16.msra.mxu0 0
    %5005 = vmatprep.mubr.bf16.mxu0 0
    %5006 = vmatmul.mubr.bf16.gmra.mrb[0].mxu0 %v4956
    %v5007 = vpop.f32.mrb[0].mxu0
    %v5008 = vpop.f32.mrb[0].mxu0
    %v5009 = vpop.f32.mrb[0].mxu0
    %v5010 = vadd.f32 %v4930, %v5009
    %v5011 = vpop.f32.mrb[0].mxu0
    %5012 = vmatprep.mubr.bf16.mxu0 0
    %5013 = vmatmul.mubr.bf16.gmra.mrb[0].mxu0 %v4959
    %v5014 = vpop.f32.mrb[0].mxu0
    %v5015 = vadd.f32 %v4930, %v5014
    %v5016 = vpop.f32.mrb[0].mxu0
    %v5017 = vpop.f32.mrb[0].mxu0
    %v5018 = vpop.f32.mrb[0].mxu0
    %5019 = vmatprep.mubr.bf16.mxu0 0
    %5020 = vmatmul.mubr.bf16.gmra.mrb[0].mxu0 %v4962
    %v5021 = vpop.f32.mrb[0].mxu0
    %v5022 = vadd.f32 %v4930, %v5021
    %v5023 = vpop.f32.mrb[0].mxu0
    %v5024 = vpop.f32.mrb[0].mxu0
    %v5025 = vadd.f32 %v4930, %v5024
    %v5026 = vpop.f32.mrb[0].mxu0
    %5027 = vmatprep.mubr.bf16.mxu0 0
    %5028 = vmatmul.mubr.bf16.gmra.mrb[0].mxu0 %v4965
    %v5029 = vpop.f32.mrb[0].mxu0
    %v5030 = vpop.f32.mrb[0].mxu0
    %v5031 = vpop.f32.mrb[0].mxu0
    %v5032 = vadd.f32 %v4930, %v5031
    %v5033 = vpop.f32.mrb[0].mxu0
    %5034 = vmatprep.mubr.bf16.mxu0 0
    %5035 = vmatmul.mubr.bf16.gmra.mrb[0].mxu0 %v4968
    %v5036 = vpop.f32.mrb[0].mxu0
    %v5037 = vadd.f32 %v4930, %v5036
    %v5038 = vpop.f32.mrb[0].mxu0
    %v5039 = vpop.f32.mrb[0].mxu0
    %v5040 = vpop.f32.mrb[0].mxu0
    %5041 = vmatprep.mubr.bf16.mxu0 0
    %5042 = vmatmul.mubr.bf16.gmra.mrb[0].mxu0 %v4971
    %v5043 = vpop.f32.mrb[0].mxu0
    %v5044 = vadd.f32 %v4930, %v5043
    %v5045 = vpop.f32.mrb[0].mxu0
    %v5046 = vpop.f32.mrb[0].mxu0
    %v5047 = vadd.f32 %v4930, %v5046
    %v5048 = vpop.f32.mrb[0].mxu0
    %5049 = vdwg.mxu0
    %v5050 = vadd.f32 %v4511, %v5010
    %v5051 = vadd.f32 %v4512, %v5015
    %v5052 = vadd.f32 %v4514, %v5022
    %v5053 = vadd.f32 %v4515, %v5025
    %v5054 = vadd.f32 %v4517, %v5032
    %v5055 = vadd.f32 %v4518, %v5037
    %v5056 = vadd.f32 %v4520, %v5044
    %v5057 = vadd.f32 %v4521, %v5047
    %v5058 = vsel %vm179, %v5050, 0.0
    %5059 = vadd.xlane.f32.xlu0 %v5058
    %v5060 = vpop.xlane.xlu0 %5059
    %v5061 = vsel %vm179, %v5051, 0.0
    %5062 = vadd.xlane.f32.xlu0 %v5061
    %v5063 = vpop.xlane.xlu0 %5062
    %v5064 = vsel %vm179, %v5052, 0.0
    %5065 = vadd.xlane.f32.xlu0 %v5064
    %v5066 = vpop.xlane.xlu0 %5065
    %v5067 = vsel %vm179, %v5053, 0.0
    %5068 = vadd.xlane.f32.xlu0 %v5067
    %v5069 = vpop.xlane.xlu0 %5068
    %v5070 = vsel %vm179, %v5054, 0.0
    %5071 = vadd.xlane.f32.xlu0 %v5070
    %v5072 = vpop.xlane.xlu0 %5071
    %v5073 = vsel %vm179, %v5055, 0.0
    %5074 = vadd.xlane.f32.xlu0 %v5073
    %v5075 = vpop.xlane.xlu0 %5074
    %v5076 = vsel %vm179, %v5056, 0.0
    %5077 = vadd.xlane.f32.xlu0 %v5076
    %v5078 = vpop.xlane.xlu0 %5077
    %v5079 = vsel %vm179, %v5057, 0.0
    %5080 = vadd.xlane.f32.xlu0 %v5079
    %v5081 = vpop.xlane.xlu0 %5080
    %v5082 = vmul.f32 %v5060, %v216
    %v5083 = vmul.f32 %v5063, %v216
    %v5084 = vmul.f32 %v5066, %v216
    %v5085 = vmul.f32 %v5069, %v216
    %v5086 = vmul.f32 %v5072, %v216
    %v5087 = vmul.f32 %v5075, %v216
    %v5088 = vmul.f32 %v5078, %v216
    %v5089 = vmul.f32 %v5081, %v216
    %v5090 = vsub.f32 %v5050, %v5082
    %v5091 = vsub.f32 %v5051, %v5083
    %v5092 = vsub.f32 %v5052, %v5084
    %v5093 = vsub.f32 %v5053, %v5085
    %v5094 = vsub.f32 %v5054, %v5086
    %v5095 = vsub.f32 %v5055, %v5087
    %v5096 = vsub.f32 %v5056, %v5088
    %v5097 = vsub.f32 %v5057, %v5089
    %v5098 = vmul.f32 %v5090, %v5090
    %v5099 = vmul.f32 %v5091, %v5091
    %v5100 = vmul.f32 %v5092, %v5092
    %v5101 = vmul.f32 %v5093, %v5093
    %v5102 = vmul.f32 %v5094, %v5094
    %v5103 = vmul.f32 %v5095, %v5095
    %v5104 = vmul.f32 %v5096, %v5096
    %v5105 = vmul.f32 %v5097, %v5097
    %v5106 = vsel %vm179, %v5098, 0.0
    %5107 = vadd.xlane.f32.xlu0 %v5106
    %v5108 = vpop.xlane.xlu0 %5107
    %v5109 = vsel %vm179, %v5099, 0.0
    %5110 = vadd.xlane.f32.xlu0 %v5109
    %v5111 = vpop.xlane.xlu0 %5110
    %v5112 = vsel %vm179, %v5100, 0.0
    %5113 = vadd.xlane.f32.xlu0 %v5112
    %v5114 = vpop.xlane.xlu0 %5113
    %v5115 = vsel %vm179, %v5101, 0.0
    %5116 = vadd.xlane.f32.xlu0 %v5115
    %v5117 = vpop.xlane.xlu0 %5116
    %v5118 = vsel %vm179, %v5102, 0.0
    %5119 = vadd.xlane.f32.xlu0 %v5118
    %v5120 = vpop.xlane.xlu0 %5119
    %v5121 = vsel %vm179, %v5103, 0.0
    %5122 = vadd.xlane.f32.xlu0 %v5121
    %v5123 = vpop.xlane.xlu0 %5122
    %v5124 = vsel %vm179, %v5104, 0.0
    %5125 = vadd.xlane.f32.xlu0 %v5124
    %v5126 = vpop.xlane.xlu0 %5125
    %v5127 = vsel %vm179, %v5105, 0.0
    %5128 = vadd.xlane.f32.xlu0 %v5127
    %v5129 = vpop.xlane.xlu0 %5128
    %v5130 = vmul.f32 %v5108, %v216
    %v5131 = vmul.f32 %v5111, %v216
    %v5132 = vmul.f32 %v5114, %v216
    %v5133 = vmul.f32 %v5117, %v216
    %v5134 = vmul.f32 %v5120, %v216
    %v5135 = vmul.f32 %v5123, %v216
    %v5136 = vmul.f32 %v5126, %v216
    %v5137 = vmul.f32 %v5129, %v216
    %v5138 = vadd.f32 %v5130, 1e-05
    %v5139 = vadd.f32 %v5131, 1e-05
    %v5140 = vadd.f32 %v5132, 1e-05
    %v5141 = vadd.f32 %v5133, 1e-05
    %v5142 = vadd.f32 %v5134, 1e-05
    %v5143 = vadd.f32 %v5135, 1e-05
    %v5144 = vadd.f32 %v5136, 1e-05
    %v5145 = vadd.f32 %v5137, 1e-05
    %v5146 = vrsqrt.pop %v5138
    %v5147 = vrsqrt.pop %v5139
    %v5148 = vrsqrt.pop %v5140
    %v5149 = vrsqrt.pop %v5141
    %v5150 = vrsqrt.pop %v5142
    %v5151 = vrsqrt.pop %v5143
    %v5152 = vrsqrt.pop %v5144
    %v5153 = vrsqrt.pop %v5145
    %v5154 = vmul.f32 %v5090, %v5146
    %v5155 = vmul.f32 %v5091, %v5147
    %v5156 = vmul.f32 %v5092, %v5148
    %v5157 = vmul.f32 %v5093, %v5149
    %v5158 = vmul.f32 %v5094, %v5150
    %v5159 = vmul.f32 %v5095, %v5151
    %v5160 = vmul.f32 %v5096, %v5152
    %v5161 = vmul.f32 %v5097, %v5153
    %vm5162 = vcmask 257024
    %v5163 = vsel %vm5162, %v5154, 0.0
    %v5164 = vrot.slane %v5163, 4
    %v5165 = vadd.f32 %v5163, %v5164
    %v5166 = vrot.slane %v5165, 2
    %v5167 = vadd.f32 %v5165, %v5166
    %v5168 = vrot.slane %v5167, 1
    %v5169 = vadd.f32 %v5167, %v5168
    %v5170 = vsel %vm5162, %v5156, 0.0
    %v5171 = vrot.slane %v5170, 4
    %v5172 = vadd.f32 %v5170, %v5171
    %v5173 = vrot.slane %v5172, 2
    %v5174 = vadd.f32 %v5172, %v5173
    %v5175 = vrot.slane %v5174, 1
    %v5176 = vadd.f32 %v5174, %v5175
    %v5177 = vsel %vm5162, %v5158, 0.0
    %v5178 = vrot.slane %v5177, 4
    %v5179 = vadd.f32 %v5177, %v5178
    %v5180 = vrot.slane %v5179, 2
    %v5181 = vadd.f32 %v5179, %v5180
    %v5182 = vrot.slane %v5181, 1
    %v5183 = vadd.f32 %v5181, %v5182
    %v5184 = vsel %vm5162, %v5160, 0.0
    %v5185 = vrot.slane %v5184, 4
    %v5186 = vadd.f32 %v5184, %v5185
    %v5187 = vrot.slane %v5186, 2
    %v5188 = vadd.f32 %v5186, %v5187
    %v5189 = vrot.slane %v5188, 1
    %v5190 = vadd.f32 %v5188, %v5189
    %v5191 = vrcp.pop 4.0
    %v5192 = vmul.f32 %v5169, %v5191
    %v5193 = vmul.f32 %v5176, %v5191
    %v5194 = vmul.f32 %v5183, %v5191
    %v5195 = vmul.f32 %v5190, %v5191
    %v5200 = vrot.slane %v5154, 4
    %v5201 = vrot.slane %v5156, 4
    %v5202 = vrot.slane %v5158, 4
    %v5203 = vrot.slane %v5160, 4
    %v5208 = vsel %vm5162, %v5200, 0.0
    %v5209 = vrot.slane %v5208, 4
    %v5210 = vadd.f32 %v5208, %v5209
    %v5211 = vrot.slane %v5210, 2
    %v5212 = vadd.f32 %v5210, %v5211
    %v5213 = vrot.slane %v5212, 1
    %v5214 = vadd.f32 %v5212, %v5213
    %v5215 = vsel %vm5162, %v5201, 0.0
    %v5216 = vrot.slane %v5215, 4
    %v5217 = vadd.f32 %v5215, %v5216
    %v5218 = vrot.slane %v5217, 2
    %v5219 = vadd.f32 %v5217, %v5218
    %v5220 = vrot.slane %v5219, 1
    %v5221 = vadd.f32 %v5219, %v5220
    %v5222 = vsel %vm5162, %v5202, 0.0
    %v5223 = vrot.slane %v5222, 4
    %v5224 = vadd.f32 %v5222, %v5223
    %v5225 = vrot.slane %v5224, 2
    %v5226 = vadd.f32 %v5224, %v5225
    %v5227 = vrot.slane %v5226, 1
    %v5228 = vadd.f32 %v5226, %v5227
    %v5229 = vsel %vm5162, %v5203, 0.0
    %v5230 = vrot.slane %v5229, 4
    %v5231 = vadd.f32 %v5229, %v5230
    %v5232 = vrot.slane %v5231, 2
    %v5233 = vadd.f32 %v5231, %v5232
    %v5234 = vrot.slane %v5233, 1
    %v5235 = vadd.f32 %v5233, %v5234
    %v5236 = vmul.f32 %v5214, %v5191
    %v5237 = vmul.f32 %v5221, %v5191
    %v5238 = vmul.f32 %v5228, %v5191
    %v5239 = vmul.f32 %v5235, %v5191
    %v5240 = vsel %vm5162, %v5155, 0.0
    %v5241 = vrot.slane %v5240, 4
    %v5242 = vadd.f32 %v5240, %v5241
    %v5243 = vrot.slane %v5242, 2
    %v5244 = vadd.f32 %v5242, %v5243
    %v5245 = vrot.slane %v5244, 1
    %v5246 = vadd.f32 %v5244, %v5245
    %v5247 = vsel %vm5162, %v5157, 0.0
    %v5248 = vrot.slane %v5247, 4
    %v5249 = vadd.f32 %v5247, %v5248
    %v5250 = vrot.slane %v5249, 2
    %v5251 = vadd.f32 %v5249, %v5250
    %v5252 = vrot.slane %v5251, 1
    %v5253 = vadd.f32 %v5251, %v5252
    %v5254 = vsel %vm5162, %v5159, 0.0
    %v5255 = vrot.slane %v5254, 4
    %v5256 = vadd.f32 %v5254, %v5255
    %v5257 = vrot.slane %v5256, 2
    %v5258 = vadd.f32 %v5256, %v5257
    %v5259 = vrot.slane %v5258, 1
    %v5260 = vadd.f32 %v5258, %v5259
    %v5261 = vsel %vm5162, %v5161, 0.0
    %v5262 = vrot.slane %v5261, 4
    %v5263 = vadd.f32 %v5261, %v5262
    %v5264 = vrot.slane %v5263, 2
    %v5265 = vadd.f32 %v5263, %v5264
    %v5266 = vrot.slane %v5265, 1
    %v5267 = vadd.f32 %v5265, %v5266
    %v5268 = vmul.f32 %v5246, %v5191
    %v5269 = vmul.f32 %v5253, %v5191
    %v5270 = vmul.f32 %v5260, %v5191
    %v5271 = vmul.f32 %v5267, %v5191
    %v5276 = vrot.slane %v5155, 4
    %v5277 = vrot.slane %v5157, 4
    %v5278 = vrot.slane %v5159, 4
    %v5279 = vrot.slane %v5161, 4
    %v5284 = vsel %vm5162, %v5276, 0.0
    %v5285 = vrot.slane %v5284, 4
    %v5286 = vadd.f32 %v5284, %v5285
    %v5287 = vrot.slane %v5286, 2
    %v5288 = vadd.f32 %v5286, %v5287
    %v5289 = vrot.slane %v5288, 1
    %v5290 = vadd.f32 %v5288, %v5289
    %v5291 = vsel %vm5162, %v5277, 0.0
    %v5292 = vrot.slane %v5291, 4
    %v5293 = vadd.f32 %v5291, %v5292
    %v5294 = vrot.slane %v5293, 2
    %v5295 = vadd.f32 %v5293, %v5294
    %v5296 = vrot.slane %v5295, 1
    %v5297 = vadd.f32 %v5295, %v5296
    %v5298 = vsel %vm5162, %v5278, 0.0
    %v5299 = vrot.slane %v5298, 4
    %v5300 = vadd.f32 %v5298, %v5299
    %v5301 = vrot.slane %v5300, 2
    %v5302 = vadd.f32 %v5300, %v5301
    %v5303 = vrot.slane %v5302, 1
    %v5304 = vadd.f32 %v5302, %v5303
    %v5305 = vsel %vm5162, %v5279, 0.0
    %v5306 = vrot.slane %v5305, 4
    %v5307 = vadd.f32 %v5305, %v5306
    %v5308 = vrot.slane %v5307, 2
    %v5309 = vadd.f32 %v5307, %v5308
    %v5310 = vrot.slane %v5309, 1
    %v5311 = vadd.f32 %v5309, %v5310
    %v5312 = vmul.f32 %v5290, %v5191
    %v5313 = vmul.f32 %v5297, %v5191
    %v5314 = vmul.f32 %v5304, %v5191
    %v5315 = vmul.f32 %v5311, %v5191
    %vm5320 = vcmask 1041409
    %v5321 = vsel %vm5320, %v5193, %v5192
    %vm5322 = vcmask 1042434
    %v5323 = vsel %vm5322, %v5194, %v5321
    %vm5324 = vcmask 1043459
    %v5325 = vsel %vm5324, %v5195, %v5323
    %v5331 = vsel %vm5320, %v5237, %v5236
    %v5332 = vsel %vm5322, %v5238, %v5331
    %v5333 = vsel %vm5324, %v5239, %v5332
    %5334 = vrot.lane.b32.xlu0 %v5333, 32
    %v5335 = vpop.permute.xlu0 %5334
    %v5341 = vsel %vm5320, %v5269, %v5268
    %v5342 = vsel %vm5322, %v5270, %v5341
    %v5343 = vsel %vm5324, %v5271, %v5342
    %5344 = vrot.lane.b32.xlu0 %v5343, 64
    %v5345 = vpop.permute.xlu0 %5344
    %v5351 = vsel %vm5320, %v5313, %v5312
    %v5352 = vsel %vm5322, %v5314, %v5351
    %v5353 = vsel %vm5324, %v5315, %v5352
    %5354 = vrot.lane.b32.xlu0 %v5353, 96
    %v5355 = vpop.permute.xlu0 %5354
    %v5357 = vsel %vm179, %v5325, %v5335
    %v5358 = vsel %vm2514, %v5357, %v5345
    %vm5359 = vcmask 785408
    %v5360 = vsel %vm5359, %v5358, %v5355
    %v5361 = vpack.c.bf16 %v5360, %v5360
    %v5362 = vld [vmem:[%s1 + $0xc8] sm:$0xf]
    %v5363 = vld [vmem:[%s1 + $0xcc] sm:$0xf]
    %v5364 = vld [vmem:[%s1 + $0xd0] sm:$0xf]
    %v5365 = vld [vmem:[%s1 + $0xd4] sm:$0xf]
    %v5366 = vld [vmem:[%s1 + $0xd8] sm:$0xf]
    %v5367 = vld [vmem:[%s1 + $0xdc] sm:$0xf]
    %v5368 = vld [vmem:[%s1 + $0xe0] sm:$0xf]
    %v5369 = vld [vmem:[%s1 + $0xe4] sm:$0xf]
    %v5370 = vld [vmem:[%s1 + $0xe8] sm:$0xf]
    %v5371 = vld [vmem:[%s1 + $0xec] sm:$0xf]
    %v5372 = vld [vmem:[%s1 + $0xf0] sm:$0xf]
    %v5373 = vld [vmem:[%s1 + $0xf4] sm:$0xf]
    %v5374 = vld [vmem:[%s1 + $0xf8] sm:$0xf]
    %v5375 = vld [vmem:[%s1 + $0xfc] sm:$0xf]
    %v5376 = vld [vmem:[%s1 + $0x100] sm:$0xf]
    %v5377 = vld [vmem:[%s1 + $0x104] sm:$0xf]
    %v5378 = vld [vmem:[%s2 + $0x8] sm:$0x1]
    %v5379 = vlaneseq
    %v5380 = vshrl.u32 %v5379, 7
    %v5381 = vsub.s32 0, %v5380
    %v5382 = vrot.slane %v5378, %v5381
    %v5399 = vunpack.c.l.b16 %v5362
    %v5400 = vunpack.c.l.b16 %v5363
    %v5401 = vunpack.c.l.b16 %v5364
    %v5402 = vunpack.c.l.b16 %v5365
    %v5403 = vunpack.c.l.b16 %v5366
    %v5404 = vunpack.c.l.b16 %v5367
    %v5405 = vunpack.c.l.b16 %v5368
    %v5406 = vunpack.c.l.b16 %v5369
    %v5407 = vunpack.c.l.b16 %v5370
    %v5408 = vunpack.c.l.b16 %v5371
    %v5409 = vunpack.c.l.b16 %v5372
    %v5410 = vunpack.c.l.b16 %v5373
    %v5411 = vunpack.c.l.b16 %v5374
    %v5412 = vunpack.c.l.b16 %v5375
    %v5413 = vunpack.c.l.b16 %v5376
    %v5414 = vunpack.c.l.b16 %v5377
    %v5415 = vpack.c.b16 %v5400, %v5399
    %v5416 = vpack.c.b16 %v5402, %v5401
    %v5417 = vpack.c.b16 %v5404, %v5403
    %v5418 = vpack.c.b16 %v5406, %v5405
    %v5419 = vpack.c.b16 %v5408, %v5407
    %v5420 = vpack.c.b16 %v5410, %v5409
    %v5421 = vpack.c.b16 %v5412, %v5411
    %v5422 = vpack.c.b16 %v5414, %v5413
    %5431 = vmatprep.subr.bf16.mxu0 0
    %5432 = vmatpush1.bf16.msra.mxu0 %v5415
    %5433 = vmatprep.subr.bf16.mxu0 0
    %5434 = vmatpush1.bf16.msra.mxu0 %v5416
    %5435 = vmatprep.subr.bf16.mxu0 0
    %5436 = vmatpush1.bf16.msra.mxu0 %v5417
    %5437 = vmatprep.subr.bf16.mxu0 0
    %5438 = vmatpush1.bf16.msra.mxu0 %v5418
    %5439 = vmatprep.subr.bf16.mxu0 0
    %5440 = vmatpush1.bf16.msra.mxu0 %v5419
    %5441 = vmatprep.subr.bf16.mxu0 0
    %5442 = vmatpush1.bf16.msra.mxu0 %v5420
    %5443 = vmatprep.subr.bf16.mxu0 0
    %5444 = vmatpush1.bf16.msra.mxu0 %v5421
    %5445 = vmatprep.subr.bf16.mxu0 0
    %5446 = vmatpush1.bf16.msra.mxu0 %v5422
    %5447 = vmatprep.subr.bf16.mxu0 0
    %5448 = vmatpush1.bf16.msra.mxu0 0
    %5449 = vmatprep.subr.bf16.mxu0 0
    %5450 = vmatpush1.bf16.msra.mxu0 0
    %5451 = vmatprep.subr.bf16.mxu0 0
    %5452 = vmatpush1.bf16.msra.mxu0 0
    %5453 = vmatprep.subr.bf16.mxu0 0
    %5454 = vmatpush1.bf16.msra.mxu0 0
    %5455 = vmatprep.subr.bf16.mxu0 0
    %5456 = vmatpush1.bf16.msra.mxu0 0
    %5457 = vmatprep.subr.bf16.mxu0 0
    %5458 = vmatpush1.bf16.msra.mxu0 0
    %5459 = vmatprep.subr.bf16.mxu0 0
    %5460 = vmatpush1.bf16.msra.mxu0 0
    %5461 = vmatprep.subr.bf16.mxu0 0
    %5462 = vmatpush1.bf16.msra.mxu0 0
    %5463 = vmatprep.mubr.bf16.mxu0 0
    %5464 = vmatmul.mubr.bf16.gmra.mrb[0].mxu0 %v5361
    %v5465 = vpop.f32.mrb[0].mxu0
    %v5466 = vadd.f32 %v5382, %v5465
    %v5467 = vpop.f32.mrb[0].mxu0
    %v5468 = vpop.f32.mrb[0].mxu0
    %v5469 = vpop.f32.mrb[0].mxu0
    %5470 = vdwg.mxu0
    %vm5471 = vcmask 322560
    %5472 = vst.msk [vmem:[#allocation2] sm:$0xf] %vm5471, %v5466
    // Predicated region
    $region14: #{_fused_forward.1} parent=1 // pred_check
      _
    $region15: #{_fused_forward.1} parent=1 // pred_check_branch
      %5474 = sbr.rel (0) target = $region17
    $region16: #{_fused_forward.1} parent=1 // pred_region
      %s5476 = ssub.s32 64, 64
      %5477 = vsyncadd [#allocation3], %s5476
      %s5479 = sshll.u32 [#allocation2], 4
      %s5480 = int_to_ptr.vmem [resolvable:$true] %s5479
      %5482 = dma.vmem_to_hbm [thread:$0]  %s5480, 64, %s3, [#allocation3]
    $region17: #{_fused_forward.1} parent=1 // pred_fallthru
      _
    // Predicated region
    $region18: #{_fused_forward.1} parent=1 // pred_check
      _
    $region19: #{_fused_forward.1} parent=1 // pred_check_branch
      %5484 = sbr.rel (0) target = $region21
    $region20: #{_fused_forward.1} parent=1 // pred_region
      %5485 = dma.done [#allocation3], 64
    $region21: #{_fused_forward.1} parent=1 // pred_fallthru
      _
    %5486 = vsyncpa [#allocation3], 1

</llo_original>
